<compile_context>
chip_gen: v6e
topology: v6e:2x2x1
jax: 0.10.0
libtpu: 0.0.40
codegen_flags: <defaults>
</compile_context>

<pallas_src>
import functools

import jax
import jax.numpy as jnp
from jax import lax
from jax.experimental import pallas as pl
from jax.experimental.pallas import tpu as pltpu


def _hgnn_fused_kernel(tsf_ref, ev_ref, ent_ref, e2n_T_ref, n2e_T_ref, w_ref, b_ref,
                       ent_out_ref, ev_out_ref, *, num_layers, batch):
    """All HeterogeneousGNN layers, all batch elements (everything resident in VMEM)."""
    tsf = tsf_ref[...]            # (B, D)
    ev_all = ev_ref[...]          # (B, E, D)
    ent_all = ent_ref[...]        # (B, N, D)
    e2n_T = e2n_T_ref[...]        # (N, E)  == ev_to_ent.T
    n2e_T = n2e_T_ref[...]        # (E, N)  == ent_to_ev.T

    def out_contract(x, w):
        # result[i, j] = sum_c x[i, c] * w[j, c]   (contract both last/lane axes; no transposes)
        return lax.dot_general(x, w, (((1,), (1,)), ((), ())),
                               preferred_element_type=jnp.float32)

    def message(weights, feats, w, b):
        # (R, C) @ (C, D) @ (D, D) + b, applying the (D, D) map on whichever side has fewer
        # rows (R vs C).  Exact associativity; bias added last either way.
        R, C = weights.shape
        if R <= C:
            m = jnp.dot(weights, feats, preferred_element_type=jnp.float32)
            return jnp.dot(m, w, preferred_element_type=jnp.float32) + b
        fw = jnp.dot(feats, w, preferred_element_type=jnp.float32)
        return jnp.dot(weights, fw, preferred_element_type=jnp.float32) + b

    # Per-batch feature matrices, statically unrolled over the (small) batch.
    evs = [ev_all[bb] for bb in range(batch)]      # each (E, D)
    ents = [ent_all[bb] for bb in range(batch)]    # each (N, D)

    for l in range(num_layers):                    # static unroll (num_layers small, e.g. 2)
        w_ev_att = w_ref[4 * l + 0]
        w_ev_ent, b_ev_ent = w_ref[4 * l + 1], b_ref[4 * l + 1]
        w_ent_att = w_ref[4 * l + 2]
        w_ent_ev, b_ent_ev = w_ref[4 * l + 3], b_ref[4 * l + 3]

        # Attention queries: q[b, k] = sum_d W_att[k, d] * tsf[b, d].  The projection bias
        # only shifts every score by the constant (b . tsf), which cancels in the softmax.
        q_ev = out_contract(tsf, w_ev_att)         # (B, D)
        q_ent = out_contract(tsf, w_ent_att)       # (B, D)

        for bb in range(batch):                    # static unroll over batch
            ev = evs[bb]                           # (E, D)
            ent = ents[bb]                         # (N, D)

            # ---------------- evidence -> entity messages ----------------
            score = out_contract(q_ev[bb:bb + 1], ev)                            # (1, E)
            att = jnp.clip(jax.nn.softmax(score, axis=-1), 1e-30, 1e20)          # (1, E)
            # ew_T[n, e] = att[e] * ev_to_ent[e, n]  (row-broadcast; clip commutes w/ transpose)
            ew_T = jnp.clip(att * e2n_T, 1e-30, 1e20)                             # (N, E)
            denom = jnp.sum(ew_T, axis=-1, keepdims=True)                         # (N, 1)
            denom = jnp.where(denom == 0.0, 1.0, denom)
            ew_T = ew_T / denom
            ent = jnp.maximum(message(ew_T, ev, w_ev_ent, b_ev_ent) + ent, 0.0)   # relu

            # ---------------- entity -> evidence messages ----------------
            score2 = out_contract(q_ent[bb:bb + 1], ent)                          # (1, N)
            att2 = jnp.clip(jax.nn.softmax(score2, axis=-1), 1e-30, 1e20)         # (1, N)
            nw_T = jnp.clip(att2 * n2e_T, 1e-30, 1e20)                            # (E, N)
            denom2 = jnp.sum(nw_T, axis=-1, keepdims=True)                        # (E, 1)
            denom2 = jnp.where(denom2 == 0.0, 1.0, denom2)
            nw_T = nw_T / denom2
            ev = jnp.maximum(message(nw_T, ent, w_ent_ev, b_ent_ev) + ev, 0.0)    # relu
            # dropout: inference-mode no-op

            evs[bb] = ev
            ents[bb] = ent

    for bb in range(batch):
        ent_out_ref[bb] = ents[bb]
        ev_out_ref[bb] = evs[bb]


def hgnn_forward(tsf_vec, evidences_mat, entities_mat, ev_to_ent, ent_to_ev,
                 layer_weights, layer_biases):
    """Full HeterogeneousGNN forward (all layers, all batch elements) in one Pallas call."""
    B, D = tsf_vec.shape
    _, E, _ = evidences_mat.shape
    _, N, _ = entities_mat.shape
    L = len(layer_weights)

    W_all = jnp.concatenate(list(layer_weights), axis=0)     # (L*4, D, D)
    b_all = jnp.concatenate(list(layer_biases), axis=0)      # (L*4, 1, D)
    # Pre-transpose the (tiny, batch-shared) adjacency matrices once in the wrapper so the
    # kernel never does an XLU transpose and every reduction is along the lane axis.
    ev_to_ent_T = ev_to_ent.T                                # (N, E)
    ent_to_ev_T = ent_to_ev.T                                # (E, N)

    kernel = functools.partial(_hgnn_fused_kernel, num_layers=L, batch=B)

    ent_out, ev_out = pl.pallas_call(
        kernel,
        out_shape=(
            jax.ShapeDtypeStruct((B, N, D), jnp.float32),
            jax.ShapeDtypeStruct((B, E, D), jnp.float32),
        ),
        grid_spec=pltpu.PrefetchScalarGridSpec(
            num_scalar_prefetch=0,
            grid=(1,),    # single step: whole problem resident; no per-batch grid overhead
            in_specs=[
                pl.BlockSpec((B, D), lambda i: (0, 0)),            # tsf
                pl.BlockSpec((B, E, D), lambda i: (0, 0, 0)),      # evidences
                pl.BlockSpec((B, N, D), lambda i: (0, 0, 0)),      # entities
                pl.BlockSpec((N, E), lambda i: (0, 0)),            # ev_to_ent.T (batch-shared)
                pl.BlockSpec((E, N), lambda i: (0, 0)),            # ent_to_ev.T (batch-shared)
                pl.BlockSpec((L * 4, D, D), lambda i: (0, 0, 0)),  # stacked weights
                pl.BlockSpec((L * 4, 1, D), lambda i: (0, 0, 0)),  # stacked biases
            ],
            out_specs=[
                pl.BlockSpec((B, N, D), lambda i: (0, 0, 0)),
                pl.BlockSpec((B, E, D), lambda i: (0, 0, 0)),
            ],
        ),
    )(tsf_vec, evidences_mat, entities_mat, ev_to_ent_T, ent_to_ev_T, W_all, b_all)
    return ent_out, ev_out


# ---------------- pure-JAX reference (mirrors the torch code exactly, incl. biases) ----------
def _ref_layer(tsf, ev, ent, ev_to_ent, ent_to_ev, W, b):
    proj_ev = ev @ W[0] + b[0]
    s = jnp.einsum('bed,bd->be', proj_ev, tsf)[..., None]          # (B,E,1)
    s = jnp.clip(jax.nn.softmax(s, axis=1), 1e-30, 1e20)
    ew = jnp.clip(s * ev_to_ent[None], 1e-30, 1e20)                # (B,E,N)
    ew = jnp.swapaxes(ew, 1, 2)                                    # (B,N,E)
    d = jnp.sum(ew, axis=2, keepdims=True)
    d = jnp.where(d == 0.0, 1.0, d)
    ew = ew / d
    msg = jnp.einsum('bne,bed->bnd', ew, ev) @ W[1] + b[1]
    ent_new = jax.nn.relu(msg + ent)

    proj_ent = ent_new @ W[2] + b[2]
    s2 = jnp.einsum('bnd,bd->bn', proj_ent, tsf)[..., None]        # (B,N,1)
    s2 = jnp.clip(jax.nn.softmax(s2, axis=1), 1e-30, 1e20)
    nw = jnp.clip(s2 * ent_to_ev[None], 1e-30, 1e20)               # (B,N,E)
    nw = jnp.swapaxes(nw, 1, 2)                                    # (B,E,N)
    d2 = jnp.sum(nw, axis=2, keepdims=True)
    d2 = jnp.where(d2 == 0.0, 1.0, d2)
    nw = nw / d2
    msg2 = jnp.einsum('ben,bnd->bed', nw, ent_new) @ W[3] + b[3]
    ev_new = jax.nn.relu(msg2 + ev)
    return ent_new, ev_new


def _ref_forward(tsf, ev, ent, ev_to_ent, ent_to_ev, layer_weights, layer_biases):
    for W, b in zip(layer_weights, layer_biases):
        ent, ev = _ref_layer(tsf, ev, ent, ev_to_ent, ent_to_ev, W, b)
    return ent, ev


if __name__ == "__main__":
    # Small shapes consistent with the module: config['gnn_num_layers']=2, gnn_emb_dimension=32.
    B, E, N, D = 2, 16, 8, 32
    NUM_LAYERS = 2

    key = jax.random.PRNGKey(0)
    k_tsf, k_ev, k_ent, k_adj, k_w, k_b = jax.random.split(key, 6)

    tsf_vec = jax.random.normal(k_tsf, (B, D), jnp.float32)
    evidences_mat = jax.random.normal(k_ev, (B, E, D), jnp.float32)
    entities_mat = jax.random.normal(k_ent, (B, N, D), jnp.float32)

    # Binary evidence<->entity adjacency (shared across batch, like the torch code).
    ev_to_ent = (jax.random.uniform(k_adj, (E, N)) > 0.6).astype(jnp.float32)
    ent_to_ev = ev_to_ent.T

    # Deterministic per-layer weights. Each layer uses 4 Linear(D, D) maps
    # (w_ev_att, w_ev_ent, w_ent_att, w_ent_ev); stored pre-transposed so y = x @ W + b.
    bound = 1.0 / jnp.sqrt(D)
    layer_weights, layer_biases = [], []
    wkeys = jax.random.split(k_w, NUM_LAYERS)
    bkeys = jax.random.split(k_b, NUM_LAYERS)
    for i in range(NUM_LAYERS):
        W = jax.random.uniform(wkeys[i], (4, D, D), jnp.float32, -bound, bound)
        bvec = jax.random.uniform(bkeys[i], (4, 1, D), jnp.float32, -bound, bound)
        layer_weights.append(W)
        layer_biases.append(bvec)

    ent_out, ev_out = hgnn_forward(
        tsf_vec, evidences_mat, entities_mat, ev_to_ent, ent_to_ev,
        layer_weights, layer_biases)
    jax.block_until_ready(ent_out)
    jax.block_until_ready(ev_out)

    # Correctness check against pure-JAX reference of the torch semantics.  The kernel drops
    # the attention-projection bias (softmax shift-invariance) and reassociates one matmul;
    # both are exact mathematically, differing only at float rounding level.
    ent_ref, ev_ref = _ref_forward(
        tsf_vec, evidences_mat, entities_mat, ev_to_ent, ent_to_ev,
        layer_weights, layer_biases)
    assert jnp.allclose(ent_out, ent_ref, atol=1e-4, rtol=1e-4), "entities mismatch"
    assert jnp.allclose(ev_out, ev_ref, atol=1e-4, rtol=1e-4), "evidences mismatch"

    print("KERNEL_OK")
</pallas_src>

<mosaic_0001>
module attributes {stable_mosaic.version = 11 : i64} {
  func.func @_hgnn_fused_kernel(%arg0: i32, %arg1: memref<2x32xf32, #tpu.memory_space<vmem>>, %arg2: memref<2x16x32xf32, #tpu.memory_space<vmem>>, %arg3: memref<2x8x32xf32, #tpu.memory_space<vmem>>, %arg4: memref<8x16xf32, #tpu.memory_space<vmem>>, %arg5: memref<16x8xf32, #tpu.memory_space<vmem>>, %arg6: memref<8x32x32xf32, #tpu.memory_space<vmem>>, %arg7: memref<8x1x32xf32, #tpu.memory_space<vmem>>, %arg8: memref<2x8x32xf32, #tpu.memory_space<vmem>>, %arg9: memref<2x16x32xf32, #tpu.memory_space<vmem>>) attributes {dimension_semantics = [#tpu.dimension_semantics<arbitrary>], iteration_bounds = array<i64: 1>, scalar_prefetch = 0 : i64, scratch_operands = 0 : i64, tpu.core_type = #tpu.core_type<tc>, window_params = [{pipeline_mode = #tpu.pipeline_mode<synchronous>, transform_indices = @transform_0, window_bounds = array<i64: 2, 32>}, {pipeline_mode = #tpu.pipeline_mode<synchronous>, transform_indices = @transform_1, window_bounds = array<i64: 2, 16, 32>}, {pipeline_mode = #tpu.pipeline_mode<synchronous>, transform_indices = @transform_2, window_bounds = array<i64: 2, 8, 32>}, {pipeline_mode = #tpu.pipeline_mode<synchronous>, transform_indices = @transform_3, window_bounds = array<i64: 8, 16>}, {pipeline_mode = #tpu.pipeline_mode<synchronous>, transform_indices = @transform_4, window_bounds = array<i64: 16, 8>}, {pipeline_mode = #tpu.pipeline_mode<synchronous>, transform_indices = @transform_5, window_bounds = array<i64: 8, 32, 32>}, {pipeline_mode = #tpu.pipeline_mode<synchronous>, transform_indices = @transform_6, window_bounds = array<i64: 8, 1, 32>}, {pipeline_mode = #tpu.pipeline_mode<synchronous>, transform_indices = @transform_7, window_bounds = array<i64: 2, 8, 32>}, {pipeline_mode = #tpu.pipeline_mode<synchronous>, transform_indices = @transform_8, window_bounds = array<i64: 2, 16, 32>}]} {
    %c0 = arith.constant 0 : index
    %c0_0 = arith.constant 0 : index
    %0 = vector.load %arg1[%c0, %c0_0] : memref<2x32xf32, #tpu.memory_space<vmem>>, vector<2x32xf32>
    %c0_1 = arith.constant 0 : index
    %c0_2 = arith.constant 0 : index
    %c0_3 = arith.constant 0 : index
    %1 = vector.load %arg2[%c0_1, %c0_2, %c0_3] : memref<2x16x32xf32, #tpu.memory_space<vmem>>, vector<2x16x32xf32>
    %c0_4 = arith.constant 0 : index
    %c0_5 = arith.constant 0 : index
    %c0_6 = arith.constant 0 : index
    %2 = vector.load %arg3[%c0_4, %c0_5, %c0_6] : memref<2x8x32xf32, #tpu.memory_space<vmem>>, vector<2x8x32xf32>
    %c0_7 = arith.constant 0 : index
    %c0_8 = arith.constant 0 : index
    %3 = vector.load %arg4[%c0_7, %c0_8] : memref<8x16xf32, #tpu.memory_space<vmem>>, vector<8x16xf32>
    %c0_9 = arith.constant 0 : index
    %c0_10 = arith.constant 0 : index
    %4 = vector.load %arg5[%c0_9, %c0_10] : memref<16x8xf32, #tpu.memory_space<vmem>>, vector<16x8xf32>
    %5 = vector.extract_strided_slice %1 {offsets = [0, 0, 0], sizes = [1, 16, 32], strides = [1, 1, 1]} : vector<2x16x32xf32> to vector<1x16x32xf32>
    %6 = vector.shape_cast %5 : vector<1x16x32xf32> to vector<16x32xf32>
    %7 = vector.extract_strided_slice %1 {offsets = [1, 0, 0], sizes = [1, 16, 32], strides = [1, 1, 1]} : vector<2x16x32xf32> to vector<1x16x32xf32>
    %8 = vector.shape_cast %7 : vector<1x16x32xf32> to vector<16x32xf32>
    %9 = vector.extract_strided_slice %2 {offsets = [0, 0, 0], sizes = [1, 8, 32], strides = [1, 1, 1]} : vector<2x8x32xf32> to vector<1x8x32xf32>
    %10 = vector.shape_cast %9 : vector<1x8x32xf32> to vector<8x32xf32>
    %11 = vector.extract_strided_slice %2 {offsets = [1, 0, 0], sizes = [1, 8, 32], strides = [1, 1, 1]} : vector<2x8x32xf32> to vector<1x8x32xf32>
    %12 = vector.shape_cast %11 : vector<1x8x32xf32> to vector<8x32xf32>
    %c0_11 = arith.constant 0 : index
    %c0_12 = arith.constant 0 : index
    %c0_13 = arith.constant 0 : index
    %13 = vector.load %arg6[%c0_11, %c0_12, %c0_13] : memref<8x32x32xf32, #tpu.memory_space<vmem>>, vector<1x32x32xf32>
    %14 = vector.shape_cast %13 : vector<1x32x32xf32> to vector<32x32xf32>
    %c1 = arith.constant 1 : index
    %c0_14 = arith.constant 0 : index
    %c0_15 = arith.constant 0 : index
    %15 = vector.load %arg6[%c1, %c0_14, %c0_15] : memref<8x32x32xf32, #tpu.memory_space<vmem>>, vector<1x32x32xf32>
    %16 = vector.shape_cast %15 : vector<1x32x32xf32> to vector<32x32xf32>
    %c1_16 = arith.constant 1 : index
    %c0_17 = arith.constant 0 : index
    %c0_18 = arith.constant 0 : index
    %17 = vector.load %arg7[%c1_16, %c0_17, %c0_18] : memref<8x1x32xf32, #tpu.memory_space<vmem>>, vector<1x1x32xf32>
    %18 = vector.shape_cast %17 : vector<1x1x32xf32> to vector<1x32xf32>
    %c2 = arith.constant 2 : index
    %c0_19 = arith.constant 0 : index
    %c0_20 = arith.constant 0 : index
    %19 = vector.load %arg6[%c2, %c0_19, %c0_20] : memref<8x32x32xf32, #tpu.memory_space<vmem>>, vector<1x32x32xf32>
    %20 = vector.shape_cast %19 : vector<1x32x32xf32> to vector<32x32xf32>
    %c3 = arith.constant 3 : index
    %c0_21 = arith.constant 0 : index
    %c0_22 = arith.constant 0 : index
    %21 = vector.load %arg6[%c3, %c0_21, %c0_22] : memref<8x32x32xf32, #tpu.memory_space<vmem>>, vector<1x32x32xf32>
    %22 = vector.shape_cast %21 : vector<1x32x32xf32> to vector<32x32xf32>
    %c3_23 = arith.constant 3 : index
    %c0_24 = arith.constant 0 : index
    %c0_25 = arith.constant 0 : index
    %23 = vector.load %arg7[%c3_23, %c0_24, %c0_25] : memref<8x1x32xf32, #tpu.memory_space<vmem>>, vector<1x1x32xf32>
    %24 = vector.shape_cast %23 : vector<1x1x32xf32> to vector<1x32xf32>
    %cst = arith.constant dense<0.000000e+00> : vector<2x32xf32>
    %25 = tpu.matmul %0, %14, %cst {dimension_numbers = #tpu.dot_dimension_numbers<[1], [1], [0], [0], [0, 0, 1, 0], [], []>} : vector<2x32xf32>, vector<32x32xf32>, vector<2x32xf32> -> vector<2x32xf32>
    %cst_26 = arith.constant dense<0.000000e+00> : vector<2x32xf32>
    %26 = tpu.matmul %0, %20, %cst_26 {dimension_numbers = #tpu.dot_dimension_numbers<[1], [1], [0], [0], [0, 0, 1, 0], [], []>} : vector<2x32xf32>, vector<32x32xf32>, vector<2x32xf32> -> vector<2x32xf32>
    %27 = vector.extract_strided_slice %25 {offsets = [0, 0], sizes = [1, 32], strides = [1, 1]} : vector<2x32xf32> to vector<1x32xf32>
    %cst_27 = arith.constant dense<0.000000e+00> : vector<1x16xf32>
    %28 = tpu.matmul %27, %6, %cst_27 {dimension_numbers = #tpu.dot_dimension_numbers<[1], [1], [0], [0], [0, 0, 1, 0], [], []>} : vector<1x32xf32>, vector<16x32xf32>, vector<1x16xf32> -> vector<1x16xf32>
    %cst_28 = arith.constant dense<0xFF800000> : vector<1xf32>
    %29 = vector.multi_reduction <maximumf>, %28, %cst_28 [1] : vector<1x16xf32> to vector<1xf32>
    %cst_29 = arith.constant 0xFF800000 : f32
    %30 = vector.broadcast %cst_29 : f32 to vector<1xf32>
    %31 = arith.maximumf %30, %29 : vector<1xf32>
    %32 = vector.shape_cast %31 : vector<1xf32> to vector<1x1xf32>
    %33 = vector.broadcast %32 : vector<1x1xf32> to vector<1x16xf32>
    %34 = arith.subf %28, %33 : vector<1x16xf32>
    %35 = math.exp %34 : vector<1x16xf32>
    %cst_30 = arith.constant dense<0.000000e+00> : vector<1xf32>
    %36 = vector.multi_reduction <add>, %35, %cst_30 [1] : vector<1x16xf32> to vector<1xf32>
    %37 = vector.shape_cast %36 : vector<1xf32> to vector<1x1xf32>
    %38 = vector.broadcast %37 : vector<1x1xf32> to vector<1x16xf32>
    %39 = arith.divf %35, %38 : vector<1x16xf32>
    %cst_31 = arith.constant 1.000000e-30 : f32
    %cst_32 = arith.constant 1.000000e+20 : f32
    %40 = vector.broadcast %cst_31 : f32 to vector<1x16xf32>
    %41 = arith.maximumf %40, %39 : vector<1x16xf32>
    %42 = vector.broadcast %cst_32 : f32 to vector<1x16xf32>
    %43 = arith.minimumf %42, %41 : vector<1x16xf32>
    %44 = vector.broadcast %43 : vector<1x16xf32> to vector<8x16xf32>
    %45 = arith.mulf %44, %3 : vector<8x16xf32>
    %cst_33 = arith.constant 1.000000e-30 : f32
    %cst_34 = arith.constant 1.000000e+20 : f32
    %46 = vector.broadcast %cst_33 : f32 to vector<8x16xf32>
    %47 = arith.maximumf %46, %45 : vector<8x16xf32>
    %48 = vector.broadcast %cst_34 : f32 to vector<8x16xf32>
    %49 = arith.minimumf %48, %47 : vector<8x16xf32>
    %cst_35 = arith.constant dense<0.000000e+00> : vector<8xf32>
    %50 = vector.multi_reduction <add>, %49, %cst_35 [1] : vector<8x16xf32> to vector<8xf32>
    %51 = vector.shape_cast %50 : vector<8xf32> to vector<8x1xf32>
    %cst_36 = arith.constant 0.000000e+00 : f32
    %52 = vector.broadcast %cst_36 : f32 to vector<8x1xf32>
    %53 = arith.cmpf oeq, %51, %52 : vector<8x1xf32>
    %cst_37 = arith.constant 1.000000e+00 : f32
    %54 = vector.broadcast %cst_37 : f32 to vector<8x1xf32>
    %55 = arith.select %53, %54, %51 : vector<8x1xi1>, vector<8x1xf32>
    %56 = vector.broadcast %55 : vector<8x1xf32> to vector<8x16xf32>
    %57 = arith.divf %49, %56 : vector<8x16xf32>
    %cst_38 = arith.constant dense<0.000000e+00> : vector<8x32xf32>
    %58 = tpu.matmul %57, %6, %cst_38 {dimension_numbers = #tpu.dot_dimension_numbers<[1], [0], [0], [1], [0, 0, 1, 1], [], []>} : vector<8x16xf32>, vector<16x32xf32>, vector<8x32xf32> -> vector<8x32xf32>
    %cst_39 = arith.constant dense<0.000000e+00> : vector<8x32xf32>
    %59 = tpu.matmul %58, %16, %cst_39 {dimension_numbers = #tpu.dot_dimension_numbers<[1], [0], [0], [1], [0, 0, 1, 1], [], []>} : vector<8x32xf32>, vector<32x32xf32>, vector<8x32xf32> -> vector<8x32xf32>
    %60 = vector.broadcast %18 : vector<1x32xf32> to vector<8x32xf32>
    %61 = arith.addf %59, %60 : vector<8x32xf32>
    %62 = arith.addf %61, %10 : vector<8x32xf32>
    %cst_40 = arith.constant 0.000000e+00 : f32
    %63 = vector.broadcast %cst_40 : f32 to vector<8x32xf32>
    %64 = arith.maximumf %62, %63 : vector<8x32xf32>
    %65 = vector.extract_strided_slice %26 {offsets = [0, 0], sizes = [1, 32], strides = [1, 1]} : vector<2x32xf32> to vector<1x32xf32>
    %cst_41 = arith.constant dense<0.000000e+00> : vector<1x8xf32>
    %66 = tpu.matmul %65, %64, %cst_41 {dimension_numbers = #tpu.dot_dimension_numbers<[1], [1], [0], [0], [0, 0, 1, 0], [], []>} : vector<1x32xf32>, vector<8x32xf32>, vector<1x8xf32> -> vector<1x8xf32>
    %cst_42 = arith.constant dense<0xFF800000> : vector<1xf32>
    %67 = vector.multi_reduction <maximumf>, %66, %cst_42 [1] : vector<1x8xf32> to vector<1xf32>
    %cst_43 = arith.constant 0xFF800000 : f32
    %68 = vector.broadcast %cst_43 : f32 to vector<1xf32>
    %69 = arith.maximumf %68, %67 : vector<1xf32>
    %70 = vector.shape_cast %69 : vector<1xf32> to vector<1x1xf32>
    %71 = vector.broadcast %70 : vector<1x1xf32> to vector<1x8xf32>
    %72 = arith.subf %66, %71 : vector<1x8xf32>
    %73 = math.exp %72 : vector<1x8xf32>
    %cst_44 = arith.constant dense<0.000000e+00> : vector<1xf32>
    %74 = vector.multi_reduction <add>, %73, %cst_44 [1] : vector<1x8xf32> to vector<1xf32>
    %75 = vector.shape_cast %74 : vector<1xf32> to vector<1x1xf32>
    %76 = vector.broadcast %75 : vector<1x1xf32> to vector<1x8xf32>
    %77 = arith.divf %73, %76 : vector<1x8xf32>
    %cst_45 = arith.constant 1.000000e-30 : f32
    %cst_46 = arith.constant 1.000000e+20 : f32
    %78 = vector.broadcast %cst_45 : f32 to vector<1x8xf32>
    %79 = arith.maximumf %78, %77 : vector<1x8xf32>
    %80 = vector.broadcast %cst_46 : f32 to vector<1x8xf32>
    %81 = arith.minimumf %80, %79 : vector<1x8xf32>
    %82 = vector.broadcast %81 : vector<1x8xf32> to vector<16x8xf32>
    %83 = arith.mulf %82, %4 : vector<16x8xf32>
    %cst_47 = arith.constant 1.000000e-30 : f32
    %cst_48 = arith.constant 1.000000e+20 : f32
    %84 = vector.broadcast %cst_47 : f32 to vector<16x8xf32>
    %85 = arith.maximumf %84, %83 : vector<16x8xf32>
    %86 = vector.broadcast %cst_48 : f32 to vector<16x8xf32>
    %87 = arith.minimumf %86, %85 : vector<16x8xf32>
    %cst_49 = arith.constant dense<0.000000e+00> : vector<16xf32>
    %88 = vector.multi_reduction <add>, %87, %cst_49 [1] : vector<16x8xf32> to vector<16xf32>
    %89 = vector.shape_cast %88 : vector<16xf32> to vector<16x1xf32>
    %cst_50 = arith.constant 0.000000e+00 : f32
    %90 = vector.broadcast %cst_50 : f32 to vector<16x1xf32>
    %91 = arith.cmpf oeq, %89, %90 : vector<16x1xf32>
    %cst_51 = arith.constant 1.000000e+00 : f32
    %92 = vector.broadcast %cst_51 : f32 to vector<16x1xf32>
    %93 = arith.select %91, %92, %89 : vector<16x1xi1>, vector<16x1xf32>
    %94 = vector.broadcast %93 : vector<16x1xf32> to vector<16x8xf32>
    %95 = arith.divf %87, %94 : vector<16x8xf32>
    %cst_52 = arith.constant dense<0.000000e+00> : vector<8x32xf32>
    %96 = tpu.matmul %64, %22, %cst_52 {dimension_numbers = #tpu.dot_dimension_numbers<[1], [0], [0], [1], [0, 0, 1, 1], [], []>} : vector<8x32xf32>, vector<32x32xf32>, vector<8x32xf32> -> vector<8x32xf32>
    %cst_53 = arith.constant dense<0.000000e+00> : vector<16x32xf32>
    %97 = tpu.matmul %95, %96, %cst_53 {dimension_numbers = #tpu.dot_dimension_numbers<[1], [0], [0], [1], [0, 0, 1, 1], [], []>} : vector<16x8xf32>, vector<8x32xf32>, vector<16x32xf32> -> vector<16x32xf32>
    %98 = vector.broadcast %24 : vector<1x32xf32> to vector<16x32xf32>
    %99 = arith.addf %97, %98 : vector<16x32xf32>
    %100 = arith.addf %99, %6 : vector<16x32xf32>
    %cst_54 = arith.constant 0.000000e+00 : f32
    %101 = vector.broadcast %cst_54 : f32 to vector<16x32xf32>
    %102 = arith.maximumf %100, %101 : vector<16x32xf32>
    %103 = vector.extract_strided_slice %25 {offsets = [1, 0], sizes = [1, 32], strides = [1, 1]} : vector<2x32xf32> to vector<1x32xf32>
    %cst_55 = arith.constant dense<0.000000e+00> : vector<1x16xf32>
    %104 = tpu.matmul %103, %8, %cst_55 {dimension_numbers = #tpu.dot_dimension_numbers<[1], [1], [0], [0], [0, 0, 1, 0], [], []>} : vector<1x32xf32>, vector<16x32xf32>, vector<1x16xf32> -> vector<1x16xf32>
    %cst_56 = arith.constant dense<0xFF800000> : vector<1xf32>
    %105 = vector.multi_reduction <maximumf>, %104, %cst_56 [1] : vector<1x16xf32> to vector<1xf32>
    %cst_57 = arith.constant 0xFF800000 : f32
    %106 = vector.broadcast %cst_57 : f32 to vector<1xf32>
    %107 = arith.maximumf %106, %105 : vector<1xf32>
    %108 = vector.shape_cast %107 : vector<1xf32> to vector<1x1xf32>
    %109 = vector.broadcast %108 : vector<1x1xf32> to vector<1x16xf32>
    %110 = arith.subf %104, %109 : vector<1x16xf32>
    %111 = math.exp %110 : vector<1x16xf32>
    %cst_58 = arith.constant dense<0.000000e+00> : vector<1xf32>
    %112 = vector.multi_reduction <add>, %111, %cst_58 [1] : vector<1x16xf32> to vector<1xf32>
    %113 = vector.shape_cast %112 : vector<1xf32> to vector<1x1xf32>
    %114 = vector.broadcast %113 : vector<1x1xf32> to vector<1x16xf32>
    %115 = arith.divf %111, %114 : vector<1x16xf32>
    %cst_59 = arith.constant 1.000000e-30 : f32
    %cst_60 = arith.constant 1.000000e+20 : f32
    %116 = vector.broadcast %cst_59 : f32 to vector<1x16xf32>
    %117 = arith.maximumf %116, %115 : vector<1x16xf32>
    %118 = vector.broadcast %cst_60 : f32 to vector<1x16xf32>
    %119 = arith.minimumf %118, %117 : vector<1x16xf32>
    %120 = vector.broadcast %119 : vector<1x16xf32> to vector<8x16xf32>
    %121 = arith.mulf %120, %3 : vector<8x16xf32>
    %cst_61 = arith.constant 1.000000e-30 : f32
    %cst_62 = arith.constant 1.000000e+20 : f32
    %122 = vector.broadcast %cst_61 : f32 to vector<8x16xf32>
    %123 = arith.maximumf %122, %121 : vector<8x16xf32>
    %124 = vector.broadcast %cst_62 : f32 to vector<8x16xf32>
    %125 = arith.minimumf %124, %123 : vector<8x16xf32>
    %cst_63 = arith.constant dense<0.000000e+00> : vector<8xf32>
    %126 = vector.multi_reduction <add>, %125, %cst_63 [1] : vector<8x16xf32> to vector<8xf32>
    %127 = vector.shape_cast %126 : vector<8xf32> to vector<8x1xf32>
    %cst_64 = arith.constant 0.000000e+00 : f32
    %128 = vector.broadcast %cst_64 : f32 to vector<8x1xf32>
    %129 = arith.cmpf oeq, %127, %128 : vector<8x1xf32>
    %cst_65 = arith.constant 1.000000e+00 : f32
    %130 = vector.broadcast %cst_65 : f32 to vector<8x1xf32>
    %131 = arith.select %129, %130, %127 : vector<8x1xi1>, vector<8x1xf32>
    %132 = vector.broadcast %131 : vector<8x1xf32> to vector<8x16xf32>
    %133 = arith.divf %125, %132 : vector<8x16xf32>
    %cst_66 = arith.constant dense<0.000000e+00> : vector<8x32xf32>
    %134 = tpu.matmul %133, %8, %cst_66 {dimension_numbers = #tpu.dot_dimension_numbers<[1], [0], [0], [1], [0, 0, 1, 1], [], []>} : vector<8x16xf32>, vector<16x32xf32>, vector<8x32xf32> -> vector<8x32xf32>
    %cst_67 = arith.constant dense<0.000000e+00> : vector<8x32xf32>
    %135 = tpu.matmul %134, %16, %cst_67 {dimension_numbers = #tpu.dot_dimension_numbers<[1], [0], [0], [1], [0, 0, 1, 1], [], []>} : vector<8x32xf32>, vector<32x32xf32>, vector<8x32xf32> -> vector<8x32xf32>
    %136 = vector.broadcast %18 : vector<1x32xf32> to vector<8x32xf32>
    %137 = arith.addf %135, %136 : vector<8x32xf32>
    %138 = arith.addf %137, %12 : vector<8x32xf32>
    %cst_68 = arith.constant 0.000000e+00 : f32
    %139 = vector.broadcast %cst_68 : f32 to vector<8x32xf32>
    %140 = arith.maximumf %138, %139 : vector<8x32xf32>
    %141 = vector.extract_strided_slice %26 {offsets = [1, 0], sizes = [1, 32], strides = [1, 1]} : vector<2x32xf32> to vector<1x32xf32>
    %cst_69 = arith.constant dense<0.000000e+00> : vector<1x8xf32>
    %142 = tpu.matmul %141, %140, %cst_69 {dimension_numbers = #tpu.dot_dimension_numbers<[1], [1], [0], [0], [0, 0, 1, 0], [], []>} : vector<1x32xf32>, vector<8x32xf32>, vector<1x8xf32> -> vector<1x8xf32>
    %cst_70 = arith.constant dense<0xFF800000> : vector<1xf32>
    %143 = vector.multi_reduction <maximumf>, %142, %cst_70 [1] : vector<1x8xf32> to vector<1xf32>
    %cst_71 = arith.constant 0xFF800000 : f32
    %144 = vector.broadcast %cst_71 : f32 to vector<1xf32>
    %145 = arith.maximumf %144, %143 : vector<1xf32>
    %146 = vector.shape_cast %145 : vector<1xf32> to vector<1x1xf32>
    %147 = vector.broadcast %146 : vector<1x1xf32> to vector<1x8xf32>
    %148 = arith.subf %142, %147 : vector<1x8xf32>
    %149 = math.exp %148 : vector<1x8xf32>
    %cst_72 = arith.constant dense<0.000000e+00> : vector<1xf32>
    %150 = vector.multi_reduction <add>, %149, %cst_72 [1] : vector<1x8xf32> to vector<1xf32>
    %151 = vector.shape_cast %150 : vector<1xf32> to vector<1x1xf32>
    %152 = vector.broadcast %151 : vector<1x1xf32> to vector<1x8xf32>
    %153 = arith.divf %149, %152 : vector<1x8xf32>
    %cst_73 = arith.constant 1.000000e-30 : f32
    %cst_74 = arith.constant 1.000000e+20 : f32
    %154 = vector.broadcast %cst_73 : f32 to vector<1x8xf32>
    %155 = arith.maximumf %154, %153 : vector<1x8xf32>
    %156 = vector.broadcast %cst_74 : f32 to vector<1x8xf32>
    %157 = arith.minimumf %156, %155 : vector<1x8xf32>
    %158 = vector.broadcast %157 : vector<1x8xf32> to vector<16x8xf32>
    %159 = arith.mulf %158, %4 : vector<16x8xf32>
    %cst_75 = arith.constant 1.000000e-30 : f32
    %cst_76 = arith.constant 1.000000e+20 : f32
    %160 = vector.broadcast %cst_75 : f32 to vector<16x8xf32>
    %161 = arith.maximumf %160, %159 : vector<16x8xf32>
    %162 = vector.broadcast %cst_76 : f32 to vector<16x8xf32>
    %163 = arith.minimumf %162, %161 : vector<16x8xf32>
    %cst_77 = arith.constant dense<0.000000e+00> : vector<16xf32>
    %164 = vector.multi_reduction <add>, %163, %cst_77 [1] : vector<16x8xf32> to vector<16xf32>
    %165 = vector.shape_cast %164 : vector<16xf32> to vector<16x1xf32>
    %cst_78 = arith.constant 0.000000e+00 : f32
    %166 = vector.broadcast %cst_78 : f32 to vector<16x1xf32>
    %167 = arith.cmpf oeq, %165, %166 : vector<16x1xf32>
    %cst_79 = arith.constant 1.000000e+00 : f32
    %168 = vector.broadcast %cst_79 : f32 to vector<16x1xf32>
    %169 = arith.select %167, %168, %165 : vector<16x1xi1>, vector<16x1xf32>
    %170 = vector.broadcast %169 : vector<16x1xf32> to vector<16x8xf32>
    %171 = arith.divf %163, %170 : vector<16x8xf32>
    %cst_80 = arith.constant dense<0.000000e+00> : vector<8x32xf32>
    %172 = tpu.matmul %140, %22, %cst_80 {dimension_numbers = #tpu.dot_dimension_numbers<[1], [0], [0], [1], [0, 0, 1, 1], [], []>} : vector<8x32xf32>, vector<32x32xf32>, vector<8x32xf32> -> vector<8x32xf32>
    %cst_81 = arith.constant dense<0.000000e+00> : vector<16x32xf32>
    %173 = tpu.matmul %171, %172, %cst_81 {dimension_numbers = #tpu.dot_dimension_numbers<[1], [0], [0], [1], [0, 0, 1, 1], [], []>} : vector<16x8xf32>, vector<8x32xf32>, vector<16x32xf32> -> vector<16x32xf32>
    %174 = vector.broadcast %24 : vector<1x32xf32> to vector<16x32xf32>
    %175 = arith.addf %173, %174 : vector<16x32xf32>
    %176 = arith.addf %175, %8 : vector<16x32xf32>
    %cst_82 = arith.constant 0.000000e+00 : f32
    %177 = vector.broadcast %cst_82 : f32 to vector<16x32xf32>
    %178 = arith.maximumf %176, %177 : vector<16x32xf32>
    %c4 = arith.constant 4 : index
    %c0_83 = arith.constant 0 : index
    %c0_84 = arith.constant 0 : index
    %179 = vector.load %arg6[%c4, %c0_83, %c0_84] : memref<8x32x32xf32, #tpu.memory_space<vmem>>, vector<1x32x32xf32>
    %180 = vector.shape_cast %179 : vector<1x32x32xf32> to vector<32x32xf32>
    %c5 = arith.constant 5 : index
    %c0_85 = arith.constant 0 : index
    %c0_86 = arith.constant 0 : index
    %181 = vector.load %arg6[%c5, %c0_85, %c0_86] : memref<8x32x32xf32, #tpu.memory_space<vmem>>, vector<1x32x32xf32>
    %182 = vector.shape_cast %181 : vector<1x32x32xf32> to vector<32x32xf32>
    %c5_87 = arith.constant 5 : index
    %c0_88 = arith.constant 0 : index
    %c0_89 = arith.constant 0 : index
    %183 = vector.load %arg7[%c5_87, %c0_88, %c0_89] : memref<8x1x32xf32, #tpu.memory_space<vmem>>, vector<1x1x32xf32>
    %184 = vector.shape_cast %183 : vector<1x1x32xf32> to vector<1x32xf32>
    %c6 = arith.constant 6 : index
    %c0_90 = arith.constant 0 : index
    %c0_91 = arith.constant 0 : index
    %185 = vector.load %arg6[%c6, %c0_90, %c0_91] : memref<8x32x32xf32, #tpu.memory_space<vmem>>, vector<1x32x32xf32>
    %186 = vector.shape_cast %185 : vector<1x32x32xf32> to vector<32x32xf32>
    %c7 = arith.constant 7 : index
    %c0_92 = arith.constant 0 : index
    %c0_93 = arith.constant 0 : index
    %187 = vector.load %arg6[%c7, %c0_92, %c0_93] : memref<8x32x32xf32, #tpu.memory_space<vmem>>, vector<1x32x32xf32>
    %188 = vector.shape_cast %187 : vector<1x32x32xf32> to vector<32x32xf32>
    %c7_94 = arith.constant 7 : index
    %c0_95 = arith.constant 0 : index
    %c0_96 = arith.constant 0 : index
    %189 = vector.load %arg7[%c7_94, %c0_95, %c0_96] : memref<8x1x32xf32, #tpu.memory_space<vmem>>, vector<1x1x32xf32>
    %190 = vector.shape_cast %189 : vector<1x1x32xf32> to vector<1x32xf32>
    %cst_97 = arith.constant dense<0.000000e+00> : vector<2x32xf32>
    %191 = tpu.matmul %0, %180, %cst_97 {dimension_numbers = #tpu.dot_dimension_numbers<[1], [1], [0], [0], [0, 0, 1, 0], [], []>} : vector<2x32xf32>, vector<32x32xf32>, vector<2x32xf32> -> vector<2x32xf32>
    %cst_98 = arith.constant dense<0.000000e+00> : vector<2x32xf32>
    %192 = tpu.matmul %0, %186, %cst_98 {dimension_numbers = #tpu.dot_dimension_numbers<[1], [1], [0], [0], [0, 0, 1, 0], [], []>} : vector<2x32xf32>, vector<32x32xf32>, vector<2x32xf32> -> vector<2x32xf32>
    %193 = vector.extract_strided_slice %191 {offsets = [0, 0], sizes = [1, 32], strides = [1, 1]} : vector<2x32xf32> to vector<1x32xf32>
    %cst_99 = arith.constant dense<0.000000e+00> : vector<1x16xf32>
    %194 = tpu.matmul %193, %102, %cst_99 {dimension_numbers = #tpu.dot_dimension_numbers<[1], [1], [0], [0], [0, 0, 1, 0], [], []>} : vector<1x32xf32>, vector<16x32xf32>, vector<1x16xf32> -> vector<1x16xf32>
    %cst_100 = arith.constant dense<0xFF800000> : vector<1xf32>
    %195 = vector.multi_reduction <maximumf>, %194, %cst_100 [1] : vector<1x16xf32> to vector<1xf32>
    %cst_101 = arith.constant 0xFF800000 : f32
    %196 = vector.broadcast %cst_101 : f32 to vector<1xf32>
    %197 = arith.maximumf %196, %195 : vector<1xf32>
    %198 = vector.shape_cast %197 : vector<1xf32> to vector<1x1xf32>
    %199 = vector.broadcast %198 : vector<1x1xf32> to vector<1x16xf32>
    %200 = arith.subf %194, %199 : vector<1x16xf32>
    %201 = math.exp %200 : vector<1x16xf32>
    %cst_102 = arith.constant dense<0.000000e+00> : vector<1xf32>
    %202 = vector.multi_reduction <add>, %201, %cst_102 [1] : vector<1x16xf32> to vector<1xf32>
    %203 = vector.shape_cast %202 : vector<1xf32> to vector<1x1xf32>
    %204 = vector.broadcast %203 : vector<1x1xf32> to vector<1x16xf32>
    %205 = arith.divf %201, %204 : vector<1x16xf32>
    %cst_103 = arith.constant 1.000000e-30 : f32
    %cst_104 = arith.constant 1.000000e+20 : f32
    %206 = vector.broadcast %cst_103 : f32 to vector<1x16xf32>
    %207 = arith.maximumf %206, %205 : vector<1x16xf32>
    %208 = vector.broadcast %cst_104 : f32 to vector<1x16xf32>
    %209 = arith.minimumf %208, %207 : vector<1x16xf32>
    %210 = vector.broadcast %209 : vector<1x16xf32> to vector<8x16xf32>
    %211 = arith.mulf %210, %3 : vector<8x16xf32>
    %cst_105 = arith.constant 1.000000e-30 : f32
    %cst_106 = arith.constant 1.000000e+20 : f32
    %212 = vector.broadcast %cst_105 : f32 to vector<8x16xf32>
    %213 = arith.maximumf %212, %211 : vector<8x16xf32>
    %214 = vector.broadcast %cst_106 : f32 to vector<8x16xf32>
    %215 = arith.minimumf %214, %213 : vector<8x16xf32>
    %cst_107 = arith.constant dense<0.000000e+00> : vector<8xf32>
    %216 = vector.multi_reduction <add>, %215, %cst_107 [1] : vector<8x16xf32> to vector<8xf32>
    %217 = vector.shape_cast %216 : vector<8xf32> to vector<8x1xf32>
    %cst_108 = arith.constant 0.000000e+00 : f32
    %218 = vector.broadcast %cst_108 : f32 to vector<8x1xf32>
    %219 = arith.cmpf oeq, %217, %218 : vector<8x1xf32>
    %cst_109 = arith.constant 1.000000e+00 : f32
    %220 = vector.broadcast %cst_109 : f32 to vector<8x1xf32>
    %221 = arith.select %219, %220, %217 : vector<8x1xi1>, vector<8x1xf32>
    %222 = vector.broadcast %221 : vector<8x1xf32> to vector<8x16xf32>
    %223 = arith.divf %215, %222 : vector<8x16xf32>
    %cst_110 = arith.constant dense<0.000000e+00> : vector<8x32xf32>
    %224 = tpu.matmul %223, %102, %cst_110 {dimension_numbers = #tpu.dot_dimension_numbers<[1], [0], [0], [1], [0, 0, 1, 1], [], []>} : vector<8x16xf32>, vector<16x32xf32>, vector<8x32xf32> -> vector<8x32xf32>
    %cst_111 = arith.constant dense<0.000000e+00> : vector<8x32xf32>
    %225 = tpu.matmul %224, %182, %cst_111 {dimension_numbers = #tpu.dot_dimension_numbers<[1], [0], [0], [1], [0, 0, 1, 1], [], []>} : vector<8x32xf32>, vector<32x32xf32>, vector<8x32xf32> -> vector<8x32xf32>
    %226 = vector.broadcast %184 : vector<1x32xf32> to vector<8x32xf32>
    %227 = arith.addf %225, %226 : vector<8x32xf32>
    %228 = arith.addf %227, %64 : vector<8x32xf32>
    %cst_112 = arith.constant 0.000000e+00 : f32
    %229 = vector.broadcast %cst_112 : f32 to vector<8x32xf32>
    %230 = arith.maximumf %228, %229 : vector<8x32xf32>
    %231 = vector.extract_strided_slice %192 {offsets = [0, 0], sizes = [1, 32], strides = [1, 1]} : vector<2x32xf32> to vector<1x32xf32>
    %cst_113 = arith.constant dense<0.000000e+00> : vector<1x8xf32>
    %232 = tpu.matmul %231, %230, %cst_113 {dimension_numbers = #tpu.dot_dimension_numbers<[1], [1], [0], [0], [0, 0, 1, 0], [], []>} : vector<1x32xf32>, vector<8x32xf32>, vector<1x8xf32> -> vector<1x8xf32>
    %cst_114 = arith.constant dense<0xFF800000> : vector<1xf32>
    %233 = vector.multi_reduction <maximumf>, %232, %cst_114 [1] : vector<1x8xf32> to vector<1xf32>
    %cst_115 = arith.constant 0xFF800000 : f32
    %234 = vector.broadcast %cst_115 : f32 to vector<1xf32>
    %235 = arith.maximumf %234, %233 : vector<1xf32>
    %236 = vector.shape_cast %235 : vector<1xf32> to vector<1x1xf32>
    %237 = vector.broadcast %236 : vector<1x1xf32> to vector<1x8xf32>
    %238 = arith.subf %232, %237 : vector<1x8xf32>
    %239 = math.exp %238 : vector<1x8xf32>
    %cst_116 = arith.constant dense<0.000000e+00> : vector<1xf32>
    %240 = vector.multi_reduction <add>, %239, %cst_116 [1] : vector<1x8xf32> to vector<1xf32>
    %241 = vector.shape_cast %240 : vector<1xf32> to vector<1x1xf32>
    %242 = vector.broadcast %241 : vector<1x1xf32> to vector<1x8xf32>
    %243 = arith.divf %239, %242 : vector<1x8xf32>
    %cst_117 = arith.constant 1.000000e-30 : f32
    %cst_118 = arith.constant 1.000000e+20 : f32
    %244 = vector.broadcast %cst_117 : f32 to vector<1x8xf32>
    %245 = arith.maximumf %244, %243 : vector<1x8xf32>
    %246 = vector.broadcast %cst_118 : f32 to vector<1x8xf32>
    %247 = arith.minimumf %246, %245 : vector<1x8xf32>
    %248 = vector.broadcast %247 : vector<1x8xf32> to vector<16x8xf32>
    %249 = arith.mulf %248, %4 : vector<16x8xf32>
    %cst_119 = arith.constant 1.000000e-30 : f32
    %cst_120 = arith.constant 1.000000e+20 : f32
    %250 = vector.broadcast %cst_119 : f32 to vector<16x8xf32>
    %251 = arith.maximumf %250, %249 : vector<16x8xf32>
    %252 = vector.broadcast %cst_120 : f32 to vector<16x8xf32>
    %253 = arith.minimumf %252, %251 : vector<16x8xf32>
    %cst_121 = arith.constant dense<0.000000e+00> : vector<16xf32>
    %254 = vector.multi_reduction <add>, %253, %cst_121 [1] : vector<16x8xf32> to vector<16xf32>
    %255 = vector.shape_cast %254 : vector<16xf32> to vector<16x1xf32>
    %cst_122 = arith.constant 0.000000e+00 : f32
    %256 = vector.broadcast %cst_122 : f32 to vector<16x1xf32>
    %257 = arith.cmpf oeq, %255, %256 : vector<16x1xf32>
    %cst_123 = arith.constant 1.000000e+00 : f32
    %258 = vector.broadcast %cst_123 : f32 to vector<16x1xf32>
    %259 = arith.select %257, %258, %255 : vector<16x1xi1>, vector<16x1xf32>
    %260 = vector.broadcast %259 : vector<16x1xf32> to vector<16x8xf32>
    %261 = arith.divf %253, %260 : vector<16x8xf32>
    %cst_124 = arith.constant dense<0.000000e+00> : vector<8x32xf32>
    %262 = tpu.matmul %230, %188, %cst_124 {dimension_numbers = #tpu.dot_dimension_numbers<[1], [0], [0], [1], [0, 0, 1, 1], [], []>} : vector<8x32xf32>, vector<32x32xf32>, vector<8x32xf32> -> vector<8x32xf32>
    %cst_125 = arith.constant dense<0.000000e+00> : vector<16x32xf32>
    %263 = tpu.matmul %261, %262, %cst_125 {dimension_numbers = #tpu.dot_dimension_numbers<[1], [0], [0], [1], [0, 0, 1, 1], [], []>} : vector<16x8xf32>, vector<8x32xf32>, vector<16x32xf32> -> vector<16x32xf32>
    %264 = vector.broadcast %190 : vector<1x32xf32> to vector<16x32xf32>
    %265 = arith.addf %263, %264 : vector<16x32xf32>
    %266 = arith.addf %265, %102 : vector<16x32xf32>
    %cst_126 = arith.constant 0.000000e+00 : f32
    %267 = vector.broadcast %cst_126 : f32 to vector<16x32xf32>
    %268 = arith.maximumf %266, %267 : vector<16x32xf32>
    %269 = vector.extract_strided_slice %191 {offsets = [1, 0], sizes = [1, 32], strides = [1, 1]} : vector<2x32xf32> to vector<1x32xf32>
    %cst_127 = arith.constant dense<0.000000e+00> : vector<1x16xf32>
    %270 = tpu.matmul %269, %178, %cst_127 {dimension_numbers = #tpu.dot_dimension_numbers<[1], [1], [0], [0], [0, 0, 1, 0], [], []>} : vector<1x32xf32>, vector<16x32xf32>, vector<1x16xf32> -> vector<1x16xf32>
    %cst_128 = arith.constant dense<0xFF800000> : vector<1xf32>
    %271 = vector.multi_reduction <maximumf>, %270, %cst_128 [1] : vector<1x16xf32> to vector<1xf32>
    %cst_129 = arith.constant 0xFF800000 : f32
    %272 = vector.broadcast %cst_129 : f32 to vector<1xf32>
    %273 = arith.maximumf %272, %271 : vector<1xf32>
    %274 = vector.shape_cast %273 : vector<1xf32> to vector<1x1xf32>
    %275 = vector.broadcast %274 : vector<1x1xf32> to vector<1x16xf32>
    %276 = arith.subf %270, %275 : vector<1x16xf32>
    %277 = math.exp %276 : vector<1x16xf32>
    %cst_130 = arith.constant dense<0.000000e+00> : vector<1xf32>
    %278 = vector.multi_reduction <add>, %277, %cst_130 [1] : vector<1x16xf32> to vector<1xf32>
    %279 = vector.shape_cast %278 : vector<1xf32> to vector<1x1xf32>
    %280 = vector.broadcast %279 : vector<1x1xf32> to vector<1x16xf32>
    %281 = arith.divf %277, %280 : vector<1x16xf32>
    %cst_131 = arith.constant 1.000000e-30 : f32
    %cst_132 = arith.constant 1.000000e+20 : f32
    %282 = vector.broadcast %cst_131 : f32 to vector<1x16xf32>
    %283 = arith.maximumf %282, %281 : vector<1x16xf32>
    %284 = vector.broadcast %cst_132 : f32 to vector<1x16xf32>
    %285 = arith.minimumf %284, %283 : vector<1x16xf32>
    %286 = vector.broadcast %285 : vector<1x16xf32> to vector<8x16xf32>
    %287 = arith.mulf %286, %3 : vector<8x16xf32>
    %cst_133 = arith.constant 1.000000e-30 : f32
    %cst_134 = arith.constant 1.000000e+20 : f32
    %288 = vector.broadcast %cst_133 : f32 to vector<8x16xf32>
    %289 = arith.maximumf %288, %287 : vector<8x16xf32>
    %290 = vector.broadcast %cst_134 : f32 to vector<8x16xf32>
    %291 = arith.minimumf %290, %289 : vector<8x16xf32>
    %cst_135 = arith.constant dense<0.000000e+00> : vector<8xf32>
    %292 = vector.multi_reduction <add>, %291, %cst_135 [1] : vector<8x16xf32> to vector<8xf32>
    %293 = vector.shape_cast %292 : vector<8xf32> to vector<8x1xf32>
    %cst_136 = arith.constant 0.000000e+00 : f32
    %294 = vector.broadcast %cst_136 : f32 to vector<8x1xf32>
    %295 = arith.cmpf oeq, %293, %294 : vector<8x1xf32>
    %cst_137 = arith.constant 1.000000e+00 : f32
    %296 = vector.broadcast %cst_137 : f32 to vector<8x1xf32>
    %297 = arith.select %295, %296, %293 : vector<8x1xi1>, vector<8x1xf32>
    %298 = vector.broadcast %297 : vector<8x1xf32> to vector<8x16xf32>
    %299 = arith.divf %291, %298 : vector<8x16xf32>
    %cst_138 = arith.constant dense<0.000000e+00> : vector<8x32xf32>
    %300 = tpu.matmul %299, %178, %cst_138 {dimension_numbers = #tpu.dot_dimension_numbers<[1], [0], [0], [1], [0, 0, 1, 1], [], []>} : vector<8x16xf32>, vector<16x32xf32>, vector<8x32xf32> -> vector<8x32xf32>
    %cst_139 = arith.constant dense<0.000000e+00> : vector<8x32xf32>
    %301 = tpu.matmul %300, %182, %cst_139 {dimension_numbers = #tpu.dot_dimension_numbers<[1], [0], [0], [1], [0, 0, 1, 1], [], []>} : vector<8x32xf32>, vector<32x32xf32>, vector<8x32xf32> -> vector<8x32xf32>
    %302 = vector.broadcast %184 : vector<1x32xf32> to vector<8x32xf32>
    %303 = arith.addf %301, %302 : vector<8x32xf32>
    %304 = arith.addf %303, %140 : vector<8x32xf32>
    %cst_140 = arith.constant 0.000000e+00 : f32
    %305 = vector.broadcast %cst_140 : f32 to vector<8x32xf32>
    %306 = arith.maximumf %304, %305 : vector<8x32xf32>
    %307 = vector.extract_strided_slice %192 {offsets = [1, 0], sizes = [1, 32], strides = [1, 1]} : vector<2x32xf32> to vector<1x32xf32>
    %cst_141 = arith.constant dense<0.000000e+00> : vector<1x8xf32>
    %308 = tpu.matmul %307, %306, %cst_141 {dimension_numbers = #tpu.dot_dimension_numbers<[1], [1], [0], [0], [0, 0, 1, 0], [], []>} : vector<1x32xf32>, vector<8x32xf32>, vector<1x8xf32> -> vector<1x8xf32>
    %cst_142 = arith.constant dense<0xFF800000> : vector<1xf32>
    %309 = vector.multi_reduction <maximumf>, %308, %cst_142 [1] : vector<1x8xf32> to vector<1xf32>
    %cst_143 = arith.constant 0xFF800000 : f32
    %310 = vector.broadcast %cst_143 : f32 to vector<1xf32>
    %311 = arith.maximumf %310, %309 : vector<1xf32>
    %312 = vector.shape_cast %311 : vector<1xf32> to vector<1x1xf32>
    %313 = vector.broadcast %312 : vector<1x1xf32> to vector<1x8xf32>
    %314 = arith.subf %308, %313 : vector<1x8xf32>
    %315 = math.exp %314 : vector<1x8xf32>
    %cst_144 = arith.constant dense<0.000000e+00> : vector<1xf32>
    %316 = vector.multi_reduction <add>, %315, %cst_144 [1] : vector<1x8xf32> to vector<1xf32>
    %317 = vector.shape_cast %316 : vector<1xf32> to vector<1x1xf32>
    %318 = vector.broadcast %317 : vector<1x1xf32> to vector<1x8xf32>
    %319 = arith.divf %315, %318 : vector<1x8xf32>
    %cst_145 = arith.constant 1.000000e-30 : f32
    %cst_146 = arith.constant 1.000000e+20 : f32
    %320 = vector.broadcast %cst_145 : f32 to vector<1x8xf32>
    %321 = arith.maximumf %320, %319 : vector<1x8xf32>
    %322 = vector.broadcast %cst_146 : f32 to vector<1x8xf32>
    %323 = arith.minimumf %322, %321 : vector<1x8xf32>
    %324 = vector.broadcast %323 : vector<1x8xf32> to vector<16x8xf32>
    %325 = arith.mulf %324, %4 : vector<16x8xf32>
    %cst_147 = arith.constant 1.000000e-30 : f32
    %cst_148 = arith.constant 1.000000e+20 : f32
    %326 = vector.broadcast %cst_147 : f32 to vector<16x8xf32>
    %327 = arith.maximumf %326, %325 : vector<16x8xf32>
    %328 = vector.broadcast %cst_148 : f32 to vector<16x8xf32>
    %329 = arith.minimumf %328, %327 : vector<16x8xf32>
    %cst_149 = arith.constant dense<0.000000e+00> : vector<16xf32>
    %330 = vector.multi_reduction <add>, %329, %cst_149 [1] : vector<16x8xf32> to vector<16xf32>
    %331 = vector.shape_cast %330 : vector<16xf32> to vector<16x1xf32>
    %cst_150 = arith.constant 0.000000e+00 : f32
    %332 = vector.broadcast %cst_150 : f32 to vector<16x1xf32>
    %333 = arith.cmpf oeq, %331, %332 : vector<16x1xf32>
    %cst_151 = arith.constant 1.000000e+00 : f32
    %334 = vector.broadcast %cst_151 : f32 to vector<16x1xf32>
    %335 = arith.select %333, %334, %331 : vector<16x1xi1>, vector<16x1xf32>
    %336 = vector.broadcast %335 : vector<16x1xf32> to vector<16x8xf32>
    %337 = arith.divf %329, %336 : vector<16x8xf32>
    %cst_152 = arith.constant dense<0.000000e+00> : vector<8x32xf32>
    %338 = tpu.matmul %306, %188, %cst_152 {dimension_numbers = #tpu.dot_dimension_numbers<[1], [0], [0], [1], [0, 0, 1, 1], [], []>} : vector<8x32xf32>, vector<32x32xf32>, vector<8x32xf32> -> vector<8x32xf32>
    %cst_153 = arith.constant dense<0.000000e+00> : vector<16x32xf32>
    %339 = tpu.matmul %337, %338, %cst_153 {dimension_numbers = #tpu.dot_dimension_numbers<[1], [0], [0], [1], [0, 0, 1, 1], [], []>} : vector<16x8xf32>, vector<8x32xf32>, vector<16x32xf32> -> vector<16x32xf32>
    %340 = vector.broadcast %190 : vector<1x32xf32> to vector<16x32xf32>
    %341 = arith.addf %339, %340 : vector<16x32xf32>
    %342 = arith.addf %341, %178 : vector<16x32xf32>
    %cst_154 = arith.constant 0.000000e+00 : f32
    %343 = vector.broadcast %cst_154 : f32 to vector<16x32xf32>
    %344 = arith.maximumf %342, %343 : vector<16x32xf32>
    %c0_155 = arith.constant 0 : index
    %c0_156 = arith.constant 0 : index
    %c0_157 = arith.constant 0 : index
    %345 = vector.load %arg8[%c0_155, %c0_156, %c0_157] : memref<2x8x32xf32, #tpu.memory_space<vmem>>, vector<1x8x32xf32>
    %346 = vector.shape_cast %345 : vector<1x8x32xf32> to vector<8x32xf32>
    %347 = vector.shape_cast %230 : vector<8x32xf32> to vector<1x8x32xf32>
    tpu.vector_store %arg8[%c0_155, %c0_156, %c0_157], %347 {strides = array<i32>} : memref<2x8x32xf32, #tpu.memory_space<vmem>>, vector<1x8x32xf32>,
    %c0_158 = arith.constant 0 : index
    %c0_159 = arith.constant 0 : index
    %c0_160 = arith.constant 0 : index
    %348 = vector.load %arg9[%c0_158, %c0_159, %c0_160] : memref<2x16x32xf32, #tpu.memory_space<vmem>>, vector<1x16x32xf32>
    %349 = vector.shape_cast %348 : vector<1x16x32xf32> to vector<16x32xf32>
    %350 = vector.shape_cast %268 : vector<16x32xf32> to vector<1x16x32xf32>
    tpu.vector_store %arg9[%c0_158, %c0_159, %c0_160], %350 {strides = array<i32>} : memref<2x16x32xf32, #tpu.memory_space<vmem>>, vector<1x16x32xf32>,
    %c1_161 = arith.constant 1 : index
    %c0_162 = arith.constant 0 : index
    %c0_163 = arith.constant 0 : index
    %351 = vector.load %arg8[%c1_161, %c0_162, %c0_163] : memref<2x8x32xf32, #tpu.memory_space<vmem>>, vector<1x8x32xf32>
    %352 = vector.shape_cast %351 : vector<1x8x32xf32> to vector<8x32xf32>
    %353 = vector.shape_cast %306 : vector<8x32xf32> to vector<1x8x32xf32>
    tpu.vector_store %arg8[%c1_161, %c0_162, %c0_163], %353 {strides = array<i32>} : memref<2x8x32xf32, #tpu.memory_space<vmem>>, vector<1x8x32xf32>,
    %c1_164 = arith.constant 1 : index
    %c0_165 = arith.constant 0 : index
    %c0_166 = arith.constant 0 : index
    %354 = vector.load %arg9[%c1_164, %c0_165, %c0_166] : memref<2x16x32xf32, #tpu.memory_space<vmem>>, vector<1x16x32xf32>
    %355 = vector.shape_cast %354 : vector<1x16x32xf32> to vector<16x32xf32>
    %356 = vector.shape_cast %344 : vector<16x32xf32> to vector<1x16x32xf32>
    tpu.vector_store %arg9[%c1_164, %c0_165, %c0_166], %356 {strides = array<i32>} : memref<2x16x32xf32, #tpu.memory_space<vmem>>, vector<1x16x32xf32>,
    return
  }
  func.func @transform_0(%arg0: i32) -> (i32, i32) {
    %c0_i32 = arith.constant 0 : i32
    %c0_i32_0 = arith.constant 0 : i32
    %c0_i32_1 = arith.constant 0 : i32
    return %c0_i32, %c0_i32_0 : i32, i32
  }
  func.func @transform_1(%arg0: i32) -> (i32, i32, i32) {
    %c0_i32 = arith.constant 0 : i32
    %c0_i32_0 = arith.constant 0 : i32
    %c0_i32_1 = arith.constant 0 : i32
    %c0_i32_2 = arith.constant 0 : i32
    return %c0_i32, %c0_i32_0, %c0_i32_1 : i32, i32, i32
  }
  func.func @transform_2(%arg0: i32) -> (i32, i32, i32) {
    %c0_i32 = arith.constant 0 : i32
    %c0_i32_0 = arith.constant 0 : i32
    %c0_i32_1 = arith.constant 0 : i32
    %c0_i32_2 = arith.constant 0 : i32
    return %c0_i32, %c0_i32_0, %c0_i32_1 : i32, i32, i32
  }
  func.func @transform_3(%arg0: i32) -> (i32, i32) {
    %c0_i32 = arith.constant 0 : i32
    %c0_i32_0 = arith.constant 0 : i32
    %c0_i32_1 = arith.constant 0 : i32
    return %c0_i32, %c0_i32_0 : i32, i32
  }
  func.func @transform_4(%arg0: i32) -> (i32, i32) {
    %c0_i32 = arith.constant 0 : i32
    %c0_i32_0 = arith.constant 0 : i32
    %c0_i32_1 = arith.constant 0 : i32
    return %c0_i32, %c0_i32_0 : i32, i32
  }
  func.func @transform_5(%arg0: i32) -> (i32, i32, i32) {
    %c0_i32 = arith.constant 0 : i32
    %c0_i32_0 = arith.constant 0 : i32
    %c0_i32_1 = arith.constant 0 : i32
    %c0_i32_2 = arith.constant 0 : i32
    return %c0_i32, %c0_i32_0, %c0_i32_1 : i32, i32, i32
  }
  func.func @transform_6(%arg0: i32) -> (i32, i32, i32) {
    %c0_i32 = arith.constant 0 : i32
    %c0_i32_0 = arith.constant 0 : i32
    %c0_i32_1 = arith.constant 0 : i32
    %c0_i32_2 = arith.constant 0 : i32
    return %c0_i32, %c0_i32_0, %c0_i32_1 : i32, i32, i32
  }
  func.func @transform_7(%arg0: i32) -> (i32, i32, i32) {
    %c0_i32 = arith.constant 0 : i32
    %c0_i32_0 = arith.constant 0 : i32
    %c0_i32_1 = arith.constant 0 : i32
    %c0_i32_2 = arith.constant 0 : i32
    return %c0_i32, %c0_i32_0, %c0_i32_1 : i32, i32, i32
  }
  func.func @transform_8(%arg0: i32) -> (i32, i32, i32) {
    %c0_i32 = arith.constant 0 : i32
    %c0_i32_0 = arith.constant 0 : i32
    %c0_i32_1 = arith.constant 0 : i32
    %c0_i32_2 = arith.constant 0 : i32
    return %c0_i32, %c0_i32_0, %c0_i32_1 : i32, i32, i32
  }
}

</mosaic_0001>

<llo_original>
// kernel: tpu_custom_call.1
$region0: #{tpu_custom_call.1}
  #allocation0 [shape = 'u32[]', space=smem, size = 0x4, offset = 0x4, fixed_abs, tag = 'smem constant byte address 0x4 - core index']
  #allocation1 [shape = 'u32[144,128]{1,0:T(1,128)}', space=vmem, size = 0x12000, scoped, tag = 'internal scratch']
  %s0 = inlined_call_operand.hbm [shape: f32[2,32], index: 0, kind: input, shape index: {}]
  %s1 = inlined_call_operand.hbm [shape: f32[2,16,32], index: 1, kind: input, shape index: {}]
  %s2 = inlined_call_operand.vmem [shape: f32[2,8,32], index: 2, kind: input, shape index: {}]
  %s3 = inlined_call_operand.vmem [shape: f32[8,16], index: 3, kind: input, shape index: {}]
  %s4 = inlined_call_operand.vmem [shape: f32[16,8], index: 4, kind: input, shape index: {}]
  %s5 = inlined_call_operand.hbm [shape: f32[8,32,32], index: 5, kind: input, shape index: {}]
  %s6 = inlined_call_operand.vmem [shape: f32[8,1,32], index: 6, kind: input, shape index: {}]
  %s7 = inlined_call_operand.hbm [shape: f32[2,8,32], index: 7, kind: output, shape index: {0}]
  %s8 = inlined_call_operand.hbm [shape: f32[2,16,32], index: 8, kind: output, shape index: {1}]
  %9 = xla_tuple %s7, %s8
  %s10 = sld [smem:[#allocation0]]
  $region58: #{tpu_custom_call.1} parent=0
    _
  %s12 = ssub.s32 1, %s10
  %s13 = scalar_select 0, %s12, %s10
  $region1: #{tpu_custom_call.1} parent=0
    #allocation2 [shape = 'u8[1024]{0}', space=vmem, size = 0x400, scoped, tag = 'input window, operand 0, single buffered']
    #allocation3 [shape = 's32[1]{0}', space=sflag, size = 0x4, scoped, tag = 'scoped memory for tpu_custom_call.1']
    #allocation4 [shape = 's32[1]{0}', space=sflag, size = 0x4, scoped, tag = 'scoped memory for tpu_custom_call.1']
    #allocation5 [shape = 'u8[16384]{0}', space=vmem, size = 0x4000, scoped, tag = 'input window, operand 1, single buffered']
    #allocation6 [shape = 's32[1]{0}', space=sflag, size = 0x4, scoped, tag = 'scoped memory for tpu_custom_call.1']
    #allocation7 [shape = 'u8[131072]{0}', space=vmem, size = 0x20000, scoped, tag = 'input window, operand 5, single buffered']
    #allocation8 [shape = 'u8[8192]{0}', space=vmem, size = 0x2000, scoped, tag = 'output window, operand 0, single buffered']
    #allocation9 [shape = 'u8[16384]{0}', space=vmem, size = 0x4000, scoped, tag = 'output window, operand 1, single buffered']
    #allocation10 [shape = 's32[1]{0}', space=sflag, size = 0x4, scoped, tag = 'scoped memory for tpu_custom_call.1']
    %14 = vsyncpa [#allocation3], 0
    %15 = vsyncpa [#allocation6], 0
    %16 = vsyncpa [#allocation4], 0
    %17 = vsyncpa [#allocation10], 0
    // Predicated region
    $region2: #{tpu_custom_call.1} parent=1 // pred_check
      _
    $region3: #{tpu_custom_call.1} parent=1 // pred_check_branch
      %19 = sbr.rel (0) target = $region5
    $region4: #{tpu_custom_call.1} parent=1 // pred_region
      %s21 = ssub.s32 32, 32
      %22 = vsyncadd [#allocation3], %s21
      %s24 = sshll.u32 [#allocation2], 4
      %s25 = int_to_ptr.vmem [resolvable:$true] %s24
      %27 = dma.hbm_to_vmem [thread:$0]  %s0, 32, %s25, [#allocation3]
    $region5: #{tpu_custom_call.1} parent=1 // pred_fallthru
      _
    // Predicated region
    $region6: #{tpu_custom_call.1} parent=1 // pred_check
      _
    $region7: #{tpu_custom_call.1} parent=1 // pred_check_branch
      %29 = sbr.rel (0) target = $region9
    $region8: #{tpu_custom_call.1} parent=1 // pred_region
      %s31 = ssub.s32 512, 512
      %32 = vsyncadd [#allocation6], %s31
      %s33 = sshll.u32 [#allocation5], 4
      %s34 = int_to_ptr.vmem [resolvable:$true] %s33
      %39 = dma.hbm_to_vmem [thread:$0]  %s1, 512, %s34, [#allocation6], 128, 128, 8
    $region9: #{tpu_custom_call.1} parent=1 // pred_fallthru
      _
    // Predicated region
    $region10: #{tpu_custom_call.1} parent=1 // pred_check
      _
    $region11: #{tpu_custom_call.1} parent=1 // pred_check_branch
      %41 = sbr.rel (0) target = $region13
    $region12: #{tpu_custom_call.1} parent=1 // pred_region
      _
    $region13: #{tpu_custom_call.1} parent=1 // pred_fallthru
      _
    // Predicated region
    $region14: #{tpu_custom_call.1} parent=1 // pred_check
      _
    $region15: #{tpu_custom_call.1} parent=1 // pred_check_branch
      %43 = sbr.rel (0) target = $region17
    $region16: #{tpu_custom_call.1} parent=1 // pred_region
      _
    $region17: #{tpu_custom_call.1} parent=1 // pred_fallthru
      _
    // Predicated region
    $region18: #{tpu_custom_call.1} parent=1 // pred_check
      _
    $region19: #{tpu_custom_call.1} parent=1 // pred_check_branch
      %45 = sbr.rel (0) target = $region21
    $region20: #{tpu_custom_call.1} parent=1 // pred_region
      _
    $region21: #{tpu_custom_call.1} parent=1 // pred_fallthru
      _
    // Predicated region
    $region22: #{tpu_custom_call.1} parent=1 // pred_check
      _
    $region23: #{tpu_custom_call.1} parent=1 // pred_check_branch
      %47 = sbr.rel (0) target = $region25
    $region24: #{tpu_custom_call.1} parent=1 // pred_region
      %s49 = ssub.s32 4096, 4096
      %50 = vsyncadd [#allocation6], %s49
      %s51 = sshll.u32 [#allocation7], 4
      %s52 = int_to_ptr.vmem [resolvable:$true] %s51
      %57 = dma.hbm_to_vmem [thread:$0]  %s5, 4096, %s52, [#allocation6], 128, 128, 8
    $region25: #{tpu_custom_call.1} parent=1 // pred_fallthru
      _
    // Predicated region
    $region26: #{tpu_custom_call.1} parent=1 // pred_check
      _
    $region27: #{tpu_custom_call.1} parent=1 // pred_check_branch
      %59 = sbr.rel (0) target = $region29
    $region28: #{tpu_custom_call.1} parent=1 // pred_region
      _
    $region29: #{tpu_custom_call.1} parent=1 // pred_fallthru
      _
    // Predicated region
    $region30: #{tpu_custom_call.1} parent=1 // pred_check
      _
    $region31: #{tpu_custom_call.1} parent=1 // pred_check_branch
      %61 = sbr.rel (0) target = $region33
    $region32: #{tpu_custom_call.1} parent=1 // pred_region
      %62 = dma.done [#allocation3], 32
    $region33: #{tpu_custom_call.1} parent=1 // pred_fallthru
      _
    // Predicated region
    $region34: #{tpu_custom_call.1} parent=1 // pred_check
      _
    $region35: #{tpu_custom_call.1} parent=1 // pred_check_branch
      %64 = sbr.rel (0) target = $region37
    $region36: #{tpu_custom_call.1} parent=1 // pred_region
      %65 = dma.done [#allocation6], 512
    $region37: #{tpu_custom_call.1} parent=1 // pred_fallthru
      _
    // Predicated region
    $region38: #{tpu_custom_call.1} parent=1 // pred_check
      _
    $region39: #{tpu_custom_call.1} parent=1 // pred_check_branch
      %67 = sbr.rel (0) target = $region41
    $region40: #{tpu_custom_call.1} parent=1 // pred_region
      %68 = dma.done [#allocation6], 4096
    $region41: #{tpu_custom_call.1} parent=1 // pred_fallthru
      _
    %v69 = vld [vmem:[#allocation2] sm:$0x3]
    %v70 = vld [vmem:[#allocation5] sm:$0xff]
    %v71 = vld [vmem:[#allocation5 + $0x8] sm:$0xff]
    %v72 = vld [vmem:[#allocation5 + $0x10] sm:$0xff]
    %v73 = vld [vmem:[#allocation5 + $0x18] sm:$0xff]
    %v74 = vld [vmem:[%s2] sm:$0xff]
    %v75 = vld [vmem:[%s2 + $0x8] sm:$0xff]
    %v76 = vld [vmem:[%s3] sm:$0xff]
    %v77 = vld [vmem:[%s4] sm:$0xff]
    %v78 = vld [vmem:[%s4 + $0x8] sm:$0xff]
    %v79 = vld [vmem:[#allocation7] sm:$0xff]
    %v80 = vld [vmem:[#allocation7 + $0x8] sm:$0xff]
    %v81 = vld [vmem:[#allocation7 + $0x10] sm:$0xff]
    %v82 = vld [vmem:[#allocation7 + $0x18] sm:$0xff]
    %s83 = scalar_lea.vmem [#allocation7], 32
    %v84 = vld [vmem:[%s83] sm:$0xff]
    %v85 = vld [vmem:[%s83 + $0x8] sm:$0xff]
    %v86 = vld [vmem:[%s83 + $0x10] sm:$0xff]
    %v87 = vld [vmem:[%s83 + $0x18] sm:$0xff]
    %s88 = scalar_lea.vmem %s6, 1
    %v89 = vld [vmem:[%s88] sm:$0x1]
    %s90 = scalar_lea.vmem [#allocation7], 64
    %v91 = vld [vmem:[%s90] sm:$0xff]
    %v92 = vld [vmem:[%s90 + $0x8] sm:$0xff]
    %v93 = vld [vmem:[%s90 + $0x10] sm:$0xff]
    %v94 = vld [vmem:[%s90 + $0x18] sm:$0xff]
    %s95 = scalar_lea.vmem [#allocation7], 96
    %v96 = vld [vmem:[%s95] sm:$0xff]
    %v97 = vld [vmem:[%s95 + $0x8] sm:$0xff]
    %v98 = vld [vmem:[%s95 + $0x10] sm:$0xff]
    %v99 = vld [vmem:[%s95 + $0x18] sm:$0xff]
    %s100 = scalar_lea.vmem %s6, 3
    %v101 = vld [vmem:[%s100] sm:$0x1]
    %vm102 = vcmask 261120
    %v104 = vsel %vm102, %v69, 0
    %v107 = vsel %vm102, %v79, 0
    %v110 = vsel %vm102, %v80, 0
    %v113 = vsel %vm102, %v81, 0
    %v116 = vsel %vm102, %v82, 0
    %118 = vmatprep.subr.mxu0 0.0
    %119 = vmatpush1.xpose.msra.mxu0 0.0
    %120 = vmatprep.subr.mxu0 0.0
    %121 = vmatpush1.xpose.msra.mxu0 0.0
    %122 = vmatprep.subr.mxu0 0.0
    %123 = vmatpush1.xpose.msra.mxu0 0.0
    %124 = vmatprep.subr.mxu0 0.0
    %125 = vmatpush1.xpose.msra.mxu0 0.0
    %126 = vmatprep.subr.mxu0 0.0
    %127 = vmatpush1.xpose.msra.mxu0 0.0
    %128 = vmatprep.subr.mxu0 0.0
    %129 = vmatpush1.xpose.msra.mxu0 0.0
    %130 = vmatprep.subr.mxu0 0.0
    %131 = vmatpush1.xpose.msra.mxu0 0.0
    %132 = vmatprep.subr.mxu0 0.0
    %133 = vmatpush1.xpose.msra.mxu0 0.0
    %134 = vmatprep.subr.mxu0 0.0
    %135 = vmatpush1.xpose.msra.mxu0 0.0
    %136 = vmatprep.subr.mxu0 0.0
    %137 = vmatpush1.xpose.msra.mxu0 0.0
    %138 = vmatprep.subr.mxu0 0.0
    %139 = vmatpush1.xpose.msra.mxu0 0.0
    %140 = vmatprep.subr.mxu0 0.0
    %141 = vmatpush1.xpose.msra.mxu0 0.0
    %142 = vmatprep.subr.mxu0 0.0
    %143 = vmatpush1.xpose.msra.mxu0 %v116
    %144 = vmatprep.subr.mxu0 0.0
    %145 = vmatpush1.xpose.msra.mxu0 %v113
    %146 = vmatprep.subr.mxu0 0.0
    %147 = vmatpush1.xpose.msra.mxu0 %v110
    %148 = vmatprep.subr.mxu0 0.0
    %149 = vmatpush1.xpose.msra.mxu0 %v107
    %150 = vmatprep.subr.mxu0 0.0
    %151 = vmatpush2.xpose.msra.mxu0 0.0
    %152 = vmatprep.subr.mxu0 0.0
    %153 = vmatpush2.xpose.msra.mxu0 0.0
    %154 = vmatprep.subr.mxu0 0.0
    %155 = vmatpush2.xpose.msra.mxu0 0.0
    %156 = vmatprep.subr.mxu0 0.0
    %157 = vmatpush2.xpose.msra.mxu0 0.0
    %158 = vmatprep.subr.mxu0 0.0
    %159 = vmatpush2.xpose.msra.mxu0 0.0
    %160 = vmatprep.subr.mxu0 0.0
    %161 = vmatpush2.xpose.msra.mxu0 0.0
    %162 = vmatprep.subr.mxu0 0.0
    %163 = vmatpush2.xpose.msra.mxu0 0.0
    %164 = vmatprep.subr.mxu0 0.0
    %165 = vmatpush2.xpose.msra.mxu0 0.0
    %166 = vmatprep.subr.mxu0 0.0
    %167 = vmatpush2.xpose.msra.mxu0 0.0
    %168 = vmatprep.subr.mxu0 0.0
    %169 = vmatpush2.xpose.msra.mxu0 0.0
    %170 = vmatprep.subr.mxu0 0.0
    %171 = vmatpush2.xpose.msra.mxu0 0.0
    %172 = vmatprep.subr.mxu0 0.0
    %173 = vmatpush2.xpose.msra.mxu0 0.0
    %174 = vmatprep.subr.mxu0 0.0
    %175 = vmatpush2.xpose.msra.mxu0 0.0
    %176 = vmatprep.subr.mxu0 0.0
    %177 = vmatpush2.xpose.msra.mxu0 0.0
    %178 = vmatprep.subr.mxu0 0.0
    %179 = vmatpush2.xpose.msra.mxu0 0.0
    %180 = vmatprep.subr.mxu0 0.0
    %181 = vmatpush2.xpose.msra.mxu0 0.0
    %182 = vmatprep.mubr.f32.mxu0 0.0
    %183 = vmatmul.mubr.f32.gmra.mxu0 %v104
    %v184 = vpop.f32.mrf.mxu0
    %v185 = vadd.f32 0.0, %v184
    %v186 = vpop.f32.mrf.mxu0
    %187 = vdwg.mxu0
    %v189 = vsel %vm102, %v91, 0
    %v192 = vsel %vm102, %v92, 0
    %v195 = vsel %vm102, %v93, 0
    %v198 = vsel %vm102, %v94, 0
    %200 = vmatprep.subr.mxu0 0.0
    %201 = vmatpush1.xpose.msra.mxu0 0.0
    %202 = vmatprep.subr.mxu0 0.0
    %203 = vmatpush1.xpose.msra.mxu0 0.0
    %204 = vmatprep.subr.mxu0 0.0
    %205 = vmatpush1.xpose.msra.mxu0 0.0
    %206 = vmatprep.subr.mxu0 0.0
    %207 = vmatpush1.xpose.msra.mxu0 0.0
    %208 = vmatprep.subr.mxu0 0.0
    %209 = vmatpush1.xpose.msra.mxu0 0.0
    %210 = vmatprep.subr.mxu0 0.0
    %211 = vmatpush1.xpose.msra.mxu0 0.0
    %212 = vmatprep.subr.mxu0 0.0
    %213 = vmatpush1.xpose.msra.mxu0 0.0
    %214 = vmatprep.subr.mxu0 0.0
    %215 = vmatpush1.xpose.msra.mxu0 0.0
    %216 = vmatprep.subr.mxu0 0.0
    %217 = vmatpush1.xpose.msra.mxu0 0.0
    %218 = vmatprep.subr.mxu0 0.0
    %219 = vmatpush1.xpose.msra.mxu0 0.0
    %220 = vmatprep.subr.mxu0 0.0
    %221 = vmatpush1.xpose.msra.mxu0 0.0
    %222 = vmatprep.subr.mxu0 0.0
    %223 = vmatpush1.xpose.msra.mxu0 0.0
    %224 = vmatprep.subr.mxu0 0.0
    %225 = vmatpush1.xpose.msra.mxu0 %v198
    %226 = vmatprep.subr.mxu0 0.0
    %227 = vmatpush1.xpose.msra.mxu0 %v195
    %228 = vmatprep.subr.mxu0 0.0
    %229 = vmatpush1.xpose.msra.mxu0 %v192
    %230 = vmatprep.subr.mxu0 0.0
    %231 = vmatpush1.xpose.msra.mxu0 %v189
    %232 = vmatprep.subr.mxu0 0.0
    %233 = vmatpush2.xpose.msra.mxu0 0.0
    %234 = vmatprep.subr.mxu0 0.0
    %235 = vmatpush2.xpose.msra.mxu0 0.0
    %236 = vmatprep.subr.mxu0 0.0
    %237 = vmatpush2.xpose.msra.mxu0 0.0
    %238 = vmatprep.subr.mxu0 0.0
    %239 = vmatpush2.xpose.msra.mxu0 0.0
    %240 = vmatprep.subr.mxu0 0.0
    %241 = vmatpush2.xpose.msra.mxu0 0.0
    %242 = vmatprep.subr.mxu0 0.0
    %243 = vmatpush2.xpose.msra.mxu0 0.0
    %244 = vmatprep.subr.mxu0 0.0
    %245 = vmatpush2.xpose.msra.mxu0 0.0
    %246 = vmatprep.subr.mxu0 0.0
    %247 = vmatpush2.xpose.msra.mxu0 0.0
    %248 = vmatprep.subr.mxu0 0.0
    %249 = vmatpush2.xpose.msra.mxu0 0.0
    %250 = vmatprep.subr.mxu0 0.0
    %251 = vmatpush2.xpose.msra.mxu0 0.0
    %252 = vmatprep.subr.mxu0 0.0
    %253 = vmatpush2.xpose.msra.mxu0 0.0
    %254 = vmatprep.subr.mxu0 0.0
    %255 = vmatpush2.xpose.msra.mxu0 0.0
    %256 = vmatprep.subr.mxu0 0.0
    %257 = vmatpush2.xpose.msra.mxu0 0.0
    %258 = vmatprep.subr.mxu0 0.0
    %259 = vmatpush2.xpose.msra.mxu0 0.0
    %260 = vmatprep.subr.mxu0 0.0
    %261 = vmatpush2.xpose.msra.mxu0 0.0
    %262 = vmatprep.subr.mxu0 0.0
    %263 = vmatpush2.xpose.msra.mxu0 0.0
    %264 = vmatprep.mubr.f32.mxu0 0.0
    %265 = vmatmul.mubr.f32.gmra.mxu0 %v104
    %v266 = vpop.f32.mrf.mxu0
    %v267 = vadd.f32 0.0, %v266
    %v268 = vpop.f32.mrf.mxu0
    %269 = vdwg.mxu0
    %v271 = vsel %vm102, %v185, 0
    %v274 = vsel %vm102, %v70, 0
    %v277 = vsel %vm102, %v71, 0
    %279 = vmatprep.subr.mxu0 0.0
    %280 = vmatpush1.xpose.msra.mxu0 0.0
    %281 = vmatprep.subr.mxu0 0.0
    %282 = vmatpush1.xpose.msra.mxu0 0.0
    %283 = vmatprep.subr.mxu0 0.0
    %284 = vmatpush1.xpose.msra.mxu0 0.0
    %285 = vmatprep.subr.mxu0 0.0
    %286 = vmatpush1.xpose.msra.mxu0 0.0
    %287 = vmatprep.subr.mxu0 0.0
    %288 = vmatpush1.xpose.msra.mxu0 0.0
    %289 = vmatprep.subr.mxu0 0.0
    %290 = vmatpush1.xpose.msra.mxu0 0.0
    %291 = vmatprep.subr.mxu0 0.0
    %292 = vmatpush1.xpose.msra.mxu0 0.0
    %293 = vmatprep.subr.mxu0 0.0
    %294 = vmatpush1.xpose.msra.mxu0 0.0
    %295 = vmatprep.subr.mxu0 0.0
    %296 = vmatpush1.xpose.msra.mxu0 0.0
    %297 = vmatprep.subr.mxu0 0.0
    %298 = vmatpush1.xpose.msra.mxu0 0.0
    %299 = vmatprep.subr.mxu0 0.0
    %300 = vmatpush1.xpose.msra.mxu0 0.0
    %301 = vmatprep.subr.mxu0 0.0
    %302 = vmatpush1.xpose.msra.mxu0 0.0
    %303 = vmatprep.subr.mxu0 0.0
    %304 = vmatpush1.xpose.msra.mxu0 0.0
    %305 = vmatprep.subr.mxu0 0.0
    %306 = vmatpush1.xpose.msra.mxu0 0.0
    %307 = vmatprep.subr.mxu0 0.0
    %308 = vmatpush1.xpose.msra.mxu0 %v277
    %309 = vmatprep.subr.mxu0 0.0
    %310 = vmatpush1.xpose.msra.mxu0 %v274
    %311 = vmatprep.subr.mxu0 0.0
    %312 = vmatpush2.xpose.msra.mxu0 0.0
    %313 = vmatprep.subr.mxu0 0.0
    %314 = vmatpush2.xpose.msra.mxu0 0.0
    %315 = vmatprep.subr.mxu0 0.0
    %316 = vmatpush2.xpose.msra.mxu0 0.0
    %317 = vmatprep.subr.mxu0 0.0
    %318 = vmatpush2.xpose.msra.mxu0 0.0
    %319 = vmatprep.subr.mxu0 0.0
    %320 = vmatpush2.xpose.msra.mxu0 0.0
    %321 = vmatprep.subr.mxu0 0.0
    %322 = vmatpush2.xpose.msra.mxu0 0.0
    %323 = vmatprep.subr.mxu0 0.0
    %324 = vmatpush2.xpose.msra.mxu0 0.0
    %325 = vmatprep.subr.mxu0 0.0
    %326 = vmatpush2.xpose.msra.mxu0 0.0
    %327 = vmatprep.subr.mxu0 0.0
    %328 = vmatpush2.xpose.msra.mxu0 0.0
    %329 = vmatprep.subr.mxu0 0.0
    %330 = vmatpush2.xpose.msra.mxu0 0.0
    %331 = vmatprep.subr.mxu0 0.0
    %332 = vmatpush2.xpose.msra.mxu0 0.0
    %333 = vmatprep.subr.mxu0 0.0
    %334 = vmatpush2.xpose.msra.mxu0 0.0
    %335 = vmatprep.subr.mxu0 0.0
    %336 = vmatpush2.xpose.msra.mxu0 0.0
    %337 = vmatprep.subr.mxu0 0.0
    %338 = vmatpush2.xpose.msra.mxu0 0.0
    %339 = vmatprep.subr.mxu0 0.0
    %340 = vmatpush2.xpose.msra.mxu0 0.0
    %341 = vmatprep.subr.mxu0 0.0
    %342 = vmatpush2.xpose.msra.mxu0 0.0
    %343 = vmatprep.mubr.f32.mxu0 0.0
    %344 = vmatmul.mubr.f32.gmra.mxu0 %v271
    %v345 = vpop.f32.mrf.mxu0
    %v346 = vadd.f32 0.0, %v345
    %v347 = vpop.f32.mrf.mxu0
    %348 = vdwg.mxu0
    %vm349 = vcmask 122880
    %v350 = vsel %vm349, %v346, -inf
    %351 = vmax.xlane.f32.xlu0 %v350
    %v352 = vpop.xlane.xlu0 %351
    %v353 = vsub.f32 %v346, %v352
    %v354 = vmul.f32 %v353, 1.442695
    %v355 = vpow.pop %v354
    %v356 = vsel %vm349, %v355, 0.0
    %357 = vadd.xlane.f32.xlu0 %v356
    %v358 = vpop.xlane.xlu0 %357
    %v359 = vrcp.pop %v358
    %v360 = vmul.f32 %v355, %v359
    %v361 = vmax.f32 %v360, 1e-30
    %v362 = vmin.f32 %v361, 1e+20
    %v363 = vlaneseq
    %v364 = vshrl.u32 %v363, 7
    %v365 = vsub.s32 0, %v364
    %v366 = vrot.slane %v362, %v365
    %v367 = vmul.f32 %v366, %v76
    %v368 = vmax.f32 %v367, 1e-30
    %v369 = vmin.f32 %v368, 1e+20
    %vm370 = vcmask 130048
    %v371 = vsel %vm370, %v369, 0.0
    %372 = vadd.xlane.f32.xlu0 %v371
    %v373 = vpop.xlane.xlu0 %372
    %vm374 = vcmp.eq.f32.partialorder %v373, 0.0
    %v375 = vsel %vm374, 1.0, %v373
    %v376 = vrcp.pop %v375
    %v377 = vmul.f32 %v369, %v376
    %v379 = vsel %vm370, %v377, 0
    %381 = vmatprep.subr.mxu0 0.0
    %382 = vmatpush1.msra.mxu0 0.0
    %383 = vmatprep.subr.mxu0 0.0
    %384 = vmatpush1.msra.mxu0 0.0
    %385 = vmatprep.subr.mxu0 0.0
    %386 = vmatpush1.msra.mxu0 0.0
    %387 = vmatprep.subr.mxu0 0.0
    %388 = vmatpush1.msra.mxu0 0.0
    %389 = vmatprep.subr.mxu0 0.0
    %390 = vmatpush1.msra.mxu0 0.0
    %391 = vmatprep.subr.mxu0 0.0
    %392 = vmatpush1.msra.mxu0 0.0
    %393 = vmatprep.subr.mxu0 0.0
    %394 = vmatpush1.msra.mxu0 0.0
    %395 = vmatprep.subr.mxu0 0.0
    %396 = vmatpush1.msra.mxu0 0.0
    %397 = vmatprep.subr.mxu0 0.0
    %398 = vmatpush1.msra.mxu0 0.0
    %399 = vmatprep.subr.mxu0 0.0
    %400 = vmatpush1.msra.mxu0 0.0
    %401 = vmatprep.subr.mxu0 0.0
    %402 = vmatpush1.msra.mxu0 0.0
    %403 = vmatprep.subr.mxu0 0.0
    %404 = vmatpush1.msra.mxu0 0.0
    %405 = vmatprep.subr.mxu0 0.0
    %406 = vmatpush1.msra.mxu0 0.0
    %407 = vmatprep.subr.mxu0 0.0
    %408 = vmatpush1.msra.mxu0 0.0
    %409 = vmatprep.subr.mxu0 0.0
    %410 = vmatpush1.msra.mxu0 %v71
    %411 = vmatprep.subr.mxu0 0.0
    %412 = vmatpush1.msra.mxu0 %v70
    %413 = vmatprep.subr.mxu0 0.0
    %414 = vmatpush2.msra.mxu0 0.0
    %415 = vmatprep.subr.mxu0 0.0
    %416 = vmatpush2.msra.mxu0 0.0
    %417 = vmatprep.subr.mxu0 0.0
    %418 = vmatpush2.msra.mxu0 0.0
    %419 = vmatprep.subr.mxu0 0.0
    %420 = vmatpush2.msra.mxu0 0.0
    %421 = vmatprep.subr.mxu0 0.0
    %422 = vmatpush2.msra.mxu0 0.0
    %423 = vmatprep.subr.mxu0 0.0
    %424 = vmatpush2.msra.mxu0 0.0
    %425 = vmatprep.subr.mxu0 0.0
    %426 = vmatpush2.msra.mxu0 0.0
    %427 = vmatprep.subr.mxu0 0.0
    %428 = vmatpush2.msra.mxu0 0.0
    %429 = vmatprep.subr.mxu0 0.0
    %430 = vmatpush2.msra.mxu0 0.0
    %431 = vmatprep.subr.mxu0 0.0
    %432 = vmatpush2.msra.mxu0 0.0
    %433 = vmatprep.subr.mxu0 0.0
    %434 = vmatpush2.msra.mxu0 0.0
    %435 = vmatprep.subr.mxu0 0.0
    %436 = vmatpush2.msra.mxu0 0.0
    %437 = vmatprep.subr.mxu0 0.0
    %438 = vmatpush2.msra.mxu0 0.0
    %439 = vmatprep.subr.mxu0 0.0
    %440 = vmatpush2.msra.mxu0 0.0
    %441 = vmatprep.subr.mxu0 0.0
    %442 = vmatpush2.msra.mxu0 0.0
    %443 = vmatprep.subr.mxu0 0.0
    %444 = vmatpush2.msra.mxu0 0.0
    %445 = vmatprep.mubr.f32.mxu0 0.0
    %446 = vmatmul.mubr.f32.gmra.mxu0 %v379
    %v447 = vpop.f32.mrf.mxu0
    %v448 = vadd.f32 0.0, %v447
    %v449 = vpop.f32.mrf.mxu0
    %450 = vdwg.mxu0
    %v452 = vlaneseq
    %v453 = vshrl.u32 %v452, 7
    %v454 = vsub.s32 0, %v453
    %v455 = vrot.slane %v89, %v454
    %v458 = vsel %vm102, %v448, 0
    %460 = vmatprep.subr.mxu0 0.0
    %461 = vmatpush1.msra.mxu0 0.0
    %462 = vmatprep.subr.mxu0 0.0
    %463 = vmatpush1.msra.mxu0 0.0
    %464 = vmatprep.subr.mxu0 0.0
    %465 = vmatpush1.msra.mxu0 0.0
    %466 = vmatprep.subr.mxu0 0.0
    %467 = vmatpush1.msra.mxu0 0.0
    %468 = vmatprep.subr.mxu0 0.0
    %469 = vmatpush1.msra.mxu0 0.0
    %470 = vmatprep.subr.mxu0 0.0
    %471 = vmatpush1.msra.mxu0 0.0
    %472 = vmatprep.subr.mxu0 0.0
    %473 = vmatpush1.msra.mxu0 0.0
    %474 = vmatprep.subr.mxu0 0.0
    %475 = vmatpush1.msra.mxu0 0.0
    %476 = vmatprep.subr.mxu0 0.0
    %477 = vmatpush1.msra.mxu0 0.0
    %478 = vmatprep.subr.mxu0 0.0
    %479 = vmatpush1.msra.mxu0 0.0
    %480 = vmatprep.subr.mxu0 0.0
    %481 = vmatpush1.msra.mxu0 0.0
    %482 = vmatprep.subr.mxu0 0.0
    %483 = vmatpush1.msra.mxu0 0.0
    %484 = vmatprep.subr.mxu0 0.0
    %485 = vmatpush1.msra.mxu0 %v87
    %486 = vmatprep.subr.mxu0 0.0
    %487 = vmatpush1.msra.mxu0 %v86
    %488 = vmatprep.subr.mxu0 0.0
    %489 = vmatpush1.msra.mxu0 %v85
    %490 = vmatprep.subr.mxu0 0.0
    %491 = vmatpush1.msra.mxu0 %v84
    %492 = vmatprep.subr.mxu0 0.0
    %493 = vmatpush2.msra.mxu0 0.0
    %494 = vmatprep.subr.mxu0 0.0
    %495 = vmatpush2.msra.mxu0 0.0
    %496 = vmatprep.subr.mxu0 0.0
    %497 = vmatpush2.msra.mxu0 0.0
    %498 = vmatprep.subr.mxu0 0.0
    %499 = vmatpush2.msra.mxu0 0.0
    %500 = vmatprep.subr.mxu0 0.0
    %501 = vmatpush2.msra.mxu0 0.0
    %502 = vmatprep.subr.mxu0 0.0
    %503 = vmatpush2.msra.mxu0 0.0
    %504 = vmatprep.subr.mxu0 0.0
    %505 = vmatpush2.msra.mxu0 0.0
    %506 = vmatprep.subr.mxu0 0.0
    %507 = vmatpush2.msra.mxu0 0.0
    %508 = vmatprep.subr.mxu0 0.0
    %509 = vmatpush2.msra.mxu0 0.0
    %510 = vmatprep.subr.mxu0 0.0
    %511 = vmatpush2.msra.mxu0 0.0
    %512 = vmatprep.subr.mxu0 0.0
    %513 = vmatpush2.msra.mxu0 0.0
    %514 = vmatprep.subr.mxu0 0.0
    %515 = vmatpush2.msra.mxu0 0.0
    %516 = vmatprep.subr.mxu0 0.0
    %517 = vmatpush2.msra.mxu0 0.0
    %518 = vmatprep.subr.mxu0 0.0
    %519 = vmatpush2.msra.mxu0 0.0
    %520 = vmatprep.subr.mxu0 0.0
    %521 = vmatpush2.msra.mxu0 0.0
    %522 = vmatprep.subr.mxu0 0.0
    %523 = vmatpush2.msra.mxu0 0.0
    %524 = vmatprep.mubr.f32.mxu0 0.0
    %525 = vmatmul.mubr.f32.gmra.mxu0 %v458
    %v526 = vpop.f32.mrf.mxu0
    %v527 = vadd.f32 %v455, %v526
    %v528 = vpop.f32.mrf.mxu0
    %529 = vdwg.mxu0
    %v530 = vadd.f32 %v527, %v74
    %v531 = vmax.f32 %v530, 0.0
    %v533 = vsel %vm102, %v267, 0
    %v536 = vsel %vm102, %v531, 0
    %538 = vmatprep.subr.mxu0 0.0
    %539 = vmatpush1.xpose.msra.mxu0 0.0
    %540 = vmatprep.subr.mxu0 0.0
    %541 = vmatpush1.xpose.msra.mxu0 0.0
    %542 = vmatprep.subr.mxu0 0.0
    %543 = vmatpush1.xpose.msra.mxu0 0.0
    %544 = vmatprep.subr.mxu0 0.0
    %545 = vmatpush1.xpose.msra.mxu0 0.0
    %546 = vmatprep.subr.mxu0 0.0
    %547 = vmatpush1.xpose.msra.mxu0 0.0
    %548 = vmatprep.subr.mxu0 0.0
    %549 = vmatpush1.xpose.msra.mxu0 0.0
    %550 = vmatprep.subr.mxu0 0.0
    %551 = vmatpush1.xpose.msra.mxu0 0.0
    %552 = vmatprep.subr.mxu0 0.0
    %553 = vmatpush1.xpose.msra.mxu0 0.0
    %554 = vmatprep.subr.mxu0 0.0
    %555 = vmatpush1.xpose.msra.mxu0 0.0
    %556 = vmatprep.subr.mxu0 0.0
    %557 = vmatpush1.xpose.msra.mxu0 0.0
    %558 = vmatprep.subr.mxu0 0.0
    %559 = vmatpush1.xpose.msra.mxu0 0.0
    %560 = vmatprep.subr.mxu0 0.0
    %561 = vmatpush1.xpose.msra.mxu0 0.0
    %562 = vmatprep.subr.mxu0 0.0
    %563 = vmatpush1.xpose.msra.mxu0 0.0
    %564 = vmatprep.subr.mxu0 0.0
    %565 = vmatpush1.xpose.msra.mxu0 0.0
    %566 = vmatprep.subr.mxu0 0.0
    %567 = vmatpush1.xpose.msra.mxu0 0.0
    %568 = vmatprep.subr.mxu0 0.0
    %569 = vmatpush1.xpose.msra.mxu0 %v536
    %570 = vmatprep.subr.mxu0 0.0
    %571 = vmatpush2.xpose.msra.mxu0 0.0
    %572 = vmatprep.subr.mxu0 0.0
    %573 = vmatpush2.xpose.msra.mxu0 0.0
    %574 = vmatprep.subr.mxu0 0.0
    %575 = vmatpush2.xpose.msra.mxu0 0.0
    %576 = vmatprep.subr.mxu0 0.0
    %577 = vmatpush2.xpose.msra.mxu0 0.0
    %578 = vmatprep.subr.mxu0 0.0
    %579 = vmatpush2.xpose.msra.mxu0 0.0
    %580 = vmatprep.subr.mxu0 0.0
    %581 = vmatpush2.xpose.msra.mxu0 0.0
    %582 = vmatprep.subr.mxu0 0.0
    %583 = vmatpush2.xpose.msra.mxu0 0.0
    %584 = vmatprep.subr.mxu0 0.0
    %585 = vmatpush2.xpose.msra.mxu0 0.0
    %586 = vmatprep.subr.mxu0 0.0
    %587 = vmatpush2.xpose.msra.mxu0 0.0
    %588 = vmatprep.subr.mxu0 0.0
    %589 = vmatpush2.xpose.msra.mxu0 0.0
    %590 = vmatprep.subr.mxu0 0.0
    %591 = vmatpush2.xpose.msra.mxu0 0.0
    %592 = vmatprep.subr.mxu0 0.0
    %593 = vmatpush2.xpose.msra.mxu0 0.0
    %594 = vmatprep.subr.mxu0 0.0
    %595 = vmatpush2.xpose.msra.mxu0 0.0
    %596 = vmatprep.subr.mxu0 0.0
    %597 = vmatpush2.xpose.msra.mxu0 0.0
    %598 = vmatprep.subr.mxu0 0.0
    %599 = vmatpush2.xpose.msra.mxu0 0.0
    %600 = vmatprep.subr.mxu0 0.0
    %601 = vmatpush2.xpose.msra.mxu0 0.0
    %602 = vmatprep.mubr.f32.mxu0 0.0
    %603 = vmatmul.mubr.f32.gmra.mxu0 %v533
    %v604 = vpop.f32.mrf.mxu0
    %v605 = vadd.f32 0.0, %v604
    %v606 = vpop.f32.mrf.mxu0
    %607 = vdwg.mxu0
    %vm608 = vcmask 57344
    %v609 = vsel %vm608, %v605, -inf
    %610 = vmax.xlane.f32.xlu0 %v609
    %v611 = vpop.xlane.xlu0 %610
    %v612 = vsub.f32 %v605, %v611
    %v613 = vmul.f32 %v612, 1.442695
    %v614 = vpow.pop %v613
    %v615 = vsel %vm608, %v614, 0.0
    %616 = vadd.xlane.f32.xlu0 %v615
    %v617 = vpop.xlane.xlu0 %616
    %v618 = vrcp.pop %v617
    %v619 = vmul.f32 %v614, %v618
    %v620 = vmax.f32 %v619, 1e-30
    %v621 = vmin.f32 %v620, 1e+20
    %v622 = vlaneseq
    %v623 = vshrl.u32 %v622, 7
    %v624 = vsub.s32 0, %v623
    %v625 = vrot.slane %v621, %v624
    %v626 = vmul.f32 %v625, %v77
    %v627 = vmul.f32 %v625, %v78
    %v628 = vmax.f32 %v626, 1e-30
    %v629 = vmax.f32 %v627, 1e-30
    %v630 = vmin.f32 %v628, 1e+20
    %v631 = vmin.f32 %v629, 1e+20
    %vm632 = vcmask 64512
    %v633 = vsel %vm632, %v630, 0.0
    %634 = vadd.xlane.f32.xlu0 %v633
    %v635 = vpop.xlane.xlu0 %634
    %v636 = vsel %vm632, %v631, 0.0
    %637 = vadd.xlane.f32.xlu0 %v636
    %v638 = vpop.xlane.xlu0 %637
    %vm639 = vcmp.eq.f32.partialorder %v635, 0.0
    %vm640 = vcmp.eq.f32.partialorder %v638, 0.0
    %v641 = vsel %vm639, 1.0, %v635
    %v642 = vsel %vm640, 1.0, %v638
    %v643 = vrcp.pop %v641
    %v644 = vmul.f32 %v630, %v643
    %v645 = vrcp.pop %v642
    %v646 = vmul.f32 %v631, %v645
    %647 = vmatprep.subr.mxu0 0.0
    %648 = vmatpush1.msra.mxu0 0.0
    %649 = vmatprep.subr.mxu0 0.0
    %650 = vmatpush1.msra.mxu0 0.0
    %651 = vmatprep.subr.mxu0 0.0
    %652 = vmatpush1.msra.mxu0 0.0
    %653 = vmatprep.subr.mxu0 0.0
    %654 = vmatpush1.msra.mxu0 0.0
    %655 = vmatprep.subr.mxu0 0.0
    %656 = vmatpush1.msra.mxu0 0.0
    %657 = vmatprep.subr.mxu0 0.0
    %658 = vmatpush1.msra.mxu0 0.0
    %659 = vmatprep.subr.mxu0 0.0
    %660 = vmatpush1.msra.mxu0 0.0
    %661 = vmatprep.subr.mxu0 0.0
    %662 = vmatpush1.msra.mxu0 0.0
    %663 = vmatprep.subr.mxu0 0.0
    %664 = vmatpush1.msra.mxu0 0.0
    %665 = vmatprep.subr.mxu0 0.0
    %666 = vmatpush1.msra.mxu0 0.0
    %667 = vmatprep.subr.mxu0 0.0
    %668 = vmatpush1.msra.mxu0 0.0
    %669 = vmatprep.subr.mxu0 0.0
    %670 = vmatpush1.msra.mxu0 0.0
    %671 = vmatprep.subr.mxu0 0.0
    %672 = vmatpush1.msra.mxu0 %v99
    %673 = vmatprep.subr.mxu0 0.0
    %674 = vmatpush1.msra.mxu0 %v98
    %675 = vmatprep.subr.mxu0 0.0
    %676 = vmatpush1.msra.mxu0 %v97
    %677 = vmatprep.subr.mxu0 0.0
    %678 = vmatpush1.msra.mxu0 %v96
    %679 = vmatprep.subr.mxu0 0.0
    %680 = vmatpush2.msra.mxu0 0.0
    %681 = vmatprep.subr.mxu0 0.0
    %682 = vmatpush2.msra.mxu0 0.0
    %683 = vmatprep.subr.mxu0 0.0
    %684 = vmatpush2.msra.mxu0 0.0
    %685 = vmatprep.subr.mxu0 0.0
    %686 = vmatpush2.msra.mxu0 0.0
    %687 = vmatprep.subr.mxu0 0.0
    %688 = vmatpush2.msra.mxu0 0.0
    %689 = vmatprep.subr.mxu0 0.0
    %690 = vmatpush2.msra.mxu0 0.0
    %691 = vmatprep.subr.mxu0 0.0
    %692 = vmatpush2.msra.mxu0 0.0
    %693 = vmatprep.subr.mxu0 0.0
    %694 = vmatpush2.msra.mxu0 0.0
    %695 = vmatprep.subr.mxu0 0.0
    %696 = vmatpush2.msra.mxu0 0.0
    %697 = vmatprep.subr.mxu0 0.0
    %698 = vmatpush2.msra.mxu0 0.0
    %699 = vmatprep.subr.mxu0 0.0
    %700 = vmatpush2.msra.mxu0 0.0
    %701 = vmatprep.subr.mxu0 0.0
    %702 = vmatpush2.msra.mxu0 0.0
    %703 = vmatprep.subr.mxu0 0.0
    %704 = vmatpush2.msra.mxu0 0.0
    %705 = vmatprep.subr.mxu0 0.0
    %706 = vmatpush2.msra.mxu0 0.0
    %707 = vmatprep.subr.mxu0 0.0
    %708 = vmatpush2.msra.mxu0 0.0
    %709 = vmatprep.subr.mxu0 0.0
    %710 = vmatpush2.msra.mxu0 0.0
    %711 = vmatprep.mubr.f32.mxu0 0.0
    %712 = vmatmul.mubr.f32.gmra.mxu0 %v536
    %v713 = vpop.f32.mrf.mxu0
    %v714 = vadd.f32 0.0, %v713
    %v715 = vpop.f32.mrf.mxu0
    %716 = vdwg.mxu0
    %v718 = vlaneseq
    %v719 = vshrl.u32 %v718, 7
    %v720 = vsub.s32 0, %v719
    %v721 = vrot.slane %v101, %v720
    %v724 = vsel %vm632, %v644, 0
    %v727 = vsel %vm632, %v646, 0
    %729 = vmatprep.subr.mxu0 0.0
    %730 = vmatpush1.msra.mxu0 0.0
    %731 = vmatprep.subr.mxu0 0.0
    %732 = vmatpush1.msra.mxu0 0.0
    %733 = vmatprep.subr.mxu0 0.0
    %734 = vmatpush1.msra.mxu0 0.0
    %735 = vmatprep.subr.mxu0 0.0
    %736 = vmatpush1.msra.mxu0 0.0
    %737 = vmatprep.subr.mxu0 0.0
    %738 = vmatpush1.msra.mxu0 0.0
    %739 = vmatprep.subr.mxu0 0.0
    %740 = vmatpush1.msra.mxu0 0.0
    %741 = vmatprep.subr.mxu0 0.0
    %742 = vmatpush1.msra.mxu0 0.0
    %743 = vmatprep.subr.mxu0 0.0
    %744 = vmatpush1.msra.mxu0 0.0
    %745 = vmatprep.subr.mxu0 0.0
    %746 = vmatpush1.msra.mxu0 0.0
    %747 = vmatprep.subr.mxu0 0.0
    %748 = vmatpush1.msra.mxu0 0.0
    %749 = vmatprep.subr.mxu0 0.0
    %750 = vmatpush1.msra.mxu0 0.0
    %751 = vmatprep.subr.mxu0 0.0
    %752 = vmatpush1.msra.mxu0 0.0
    %753 = vmatprep.subr.mxu0 0.0
    %754 = vmatpush1.msra.mxu0 0.0
    %755 = vmatprep.subr.mxu0 0.0
    %756 = vmatpush1.msra.mxu0 0.0
    %757 = vmatprep.subr.mxu0 0.0
    %758 = vmatpush1.msra.mxu0 0.0
    %759 = vmatprep.subr.mxu0 0.0
    %760 = vmatpush1.msra.mxu0 %v714
    %761 = vmatprep.subr.mxu0 0.0
    %762 = vmatpush2.msra.mxu0 0.0
    %763 = vmatprep.subr.mxu0 0.0
    %764 = vmatpush2.msra.mxu0 0.0
    %765 = vmatprep.subr.mxu0 0.0
    %766 = vmatpush2.msra.mxu0 0.0
    %767 = vmatprep.subr.mxu0 0.0
    %768 = vmatpush2.msra.mxu0 0.0
    %769 = vmatprep.subr.mxu0 0.0
    %770 = vmatpush2.msra.mxu0 0.0
    %771 = vmatprep.subr.mxu0 0.0
    %772 = vmatpush2.msra.mxu0 0.0
    %773 = vmatprep.subr.mxu0 0.0
    %774 = vmatpush2.msra.mxu0 0.0
    %775 = vmatprep.subr.mxu0 0.0
    %776 = vmatpush2.msra.mxu0 0.0
    %777 = vmatprep.subr.mxu0 0.0
    %778 = vmatpush2.msra.mxu0 0.0
    %779 = vmatprep.subr.mxu0 0.0
    %780 = vmatpush2.msra.mxu0 0.0
    %781 = vmatprep.subr.mxu0 0.0
    %782 = vmatpush2.msra.mxu0 0.0
    %783 = vmatprep.subr.mxu0 0.0
    %784 = vmatpush2.msra.mxu0 0.0
    %785 = vmatprep.subr.mxu0 0.0
    %786 = vmatpush2.msra.mxu0 0.0
    %787 = vmatprep.subr.mxu0 0.0
    %788 = vmatpush2.msra.mxu0 0.0
    %789 = vmatprep.subr.mxu0 0.0
    %790 = vmatpush2.msra.mxu0 0.0
    %791 = vmatprep.subr.mxu0 0.0
    %792 = vmatpush2.msra.mxu0 0.0
    %793 = vmatprep.mubr.f32.mxu0 0.0
    %794 = vmatmul.mubr.f32.gmra.mxu0 %v724
    %v795 = vpop.f32.mrf.mxu0
    %v796 = vadd.f32 %v721, %v795
    %v797 = vpop.f32.mrf.mxu0
    %798 = vmatprep.mubr.f32.mxu0 0.0
    %799 = vmatmul.mubr.f32.gmra.mxu0 %v727
    %v800 = vpop.f32.mrf.mxu0
    %v801 = vadd.f32 %v721, %v800
    %v802 = vpop.f32.mrf.mxu0
    %803 = vdwg.mxu0
    %v804 = vadd.f32 %v796, %v70
    %v805 = vadd.f32 %v801, %v71
    %v806 = vmax.f32 %v804, 0.0
    %v807 = vmax.f32 %v805, 0.0
    %v808 = vrot.slane %v185, 1
    %v809 = vsel %vm102, %v808, 0
    %v812 = vsel %vm102, %v72, 0
    %v815 = vsel %vm102, %v73, 0
    %817 = vmatprep.subr.mxu0 0.0
    %818 = vmatpush1.xpose.msra.mxu0 0.0
    %819 = vmatprep.subr.mxu0 0.0
    %820 = vmatpush1.xpose.msra.mxu0 0.0
    %821 = vmatprep.subr.mxu0 0.0
    %822 = vmatpush1.xpose.msra.mxu0 0.0
    %823 = vmatprep.subr.mxu0 0.0
    %824 = vmatpush1.xpose.msra.mxu0 0.0
    %825 = vmatprep.subr.mxu0 0.0
    %826 = vmatpush1.xpose.msra.mxu0 0.0
    %827 = vmatprep.subr.mxu0 0.0
    %828 = vmatpush1.xpose.msra.mxu0 0.0
    %829 = vmatprep.subr.mxu0 0.0
    %830 = vmatpush1.xpose.msra.mxu0 0.0
    %831 = vmatprep.subr.mxu0 0.0
    %832 = vmatpush1.xpose.msra.mxu0 0.0
    %833 = vmatprep.subr.mxu0 0.0
    %834 = vmatpush1.xpose.msra.mxu0 0.0
    %835 = vmatprep.subr.mxu0 0.0
    %836 = vmatpush1.xpose.msra.mxu0 0.0
    %837 = vmatprep.subr.mxu0 0.0
    %838 = vmatpush1.xpose.msra.mxu0 0.0
    %839 = vmatprep.subr.mxu0 0.0
    %840 = vmatpush1.xpose.msra.mxu0 0.0
    %841 = vmatprep.subr.mxu0 0.0
    %842 = vmatpush1.xpose.msra.mxu0 0.0
    %843 = vmatprep.subr.mxu0 0.0
    %844 = vmatpush1.xpose.msra.mxu0 0.0
    %845 = vmatprep.subr.mxu0 0.0
    %846 = vmatpush1.xpose.msra.mxu0 %v815
    %847 = vmatprep.subr.mxu0 0.0
    %848 = vmatpush1.xpose.msra.mxu0 %v812
    %849 = vmatprep.subr.mxu0 0.0
    %850 = vmatpush2.xpose.msra.mxu0 0.0
    %851 = vmatprep.subr.mxu0 0.0
    %852 = vmatpush2.xpose.msra.mxu0 0.0
    %853 = vmatprep.subr.mxu0 0.0
    %854 = vmatpush2.xpose.msra.mxu0 0.0
    %855 = vmatprep.subr.mxu0 0.0
    %856 = vmatpush2.xpose.msra.mxu0 0.0
    %857 = vmatprep.subr.mxu0 0.0
    %858 = vmatpush2.xpose.msra.mxu0 0.0
    %859 = vmatprep.subr.mxu0 0.0
    %860 = vmatpush2.xpose.msra.mxu0 0.0
    %861 = vmatprep.subr.mxu0 0.0
    %862 = vmatpush2.xpose.msra.mxu0 0.0
    %863 = vmatprep.subr.mxu0 0.0
    %864 = vmatpush2.xpose.msra.mxu0 0.0
    %865 = vmatprep.subr.mxu0 0.0
    %866 = vmatpush2.xpose.msra.mxu0 0.0
    %867 = vmatprep.subr.mxu0 0.0
    %868 = vmatpush2.xpose.msra.mxu0 0.0
    %869 = vmatprep.subr.mxu0 0.0
    %870 = vmatpush2.xpose.msra.mxu0 0.0
    %871 = vmatprep.subr.mxu0 0.0
    %872 = vmatpush2.xpose.msra.mxu0 0.0
    %873 = vmatprep.subr.mxu0 0.0
    %874 = vmatpush2.xpose.msra.mxu0 0.0
    %875 = vmatprep.subr.mxu0 0.0
    %876 = vmatpush2.xpose.msra.mxu0 0.0
    %877 = vmatprep.subr.mxu0 0.0
    %878 = vmatpush2.xpose.msra.mxu0 0.0
    %879 = vmatprep.subr.mxu0 0.0
    %880 = vmatpush2.xpose.msra.mxu0 0.0
    %881 = vmatprep.mubr.f32.mxu0 0.0
    %882 = vmatmul.mubr.f32.gmra.mxu0 %v809
    %v883 = vpop.f32.mrf.mxu0
    %v884 = vadd.f32 0.0, %v883
    %v885 = vpop.f32.mrf.mxu0
    %886 = vdwg.mxu0
    %v887 = vsel %vm349, %v884, -inf
    %888 = vmax.xlane.f32.xlu0 %v887
    %v889 = vpop.xlane.xlu0 %888
    %v890 = vsub.f32 %v884, %v889
    %v891 = vmul.f32 %v890, 1.442695
    %v892 = vpow.pop %v891
    %v893 = vsel %vm349, %v892, 0.0
    %894 = vadd.xlane.f32.xlu0 %v893
    %v895 = vpop.xlane.xlu0 %894
    %v896 = vrcp.pop %v895
    %v897 = vmul.f32 %v892, %v896
    %v898 = vmax.f32 %v897, 1e-30
    %v899 = vmin.f32 %v898, 1e+20
    %v900 = vlaneseq
    %v901 = vshrl.u32 %v900, 7
    %v902 = vsub.s32 0, %v901
    %v903 = vrot.slane %v899, %v902
    %v904 = vmul.f32 %v903, %v76
    %v905 = vmax.f32 %v904, 1e-30
    %v906 = vmin.f32 %v905, 1e+20
    %v907 = vsel %vm370, %v906, 0.0
    %908 = vadd.xlane.f32.xlu0 %v907
    %v909 = vpop.xlane.xlu0 %908
    %vm910 = vcmp.eq.f32.partialorder %v909, 0.0
    %v911 = vsel %vm910, 1.0, %v909
    %v912 = vrcp.pop %v911
    %v913 = vmul.f32 %v906, %v912
    %v915 = vsel %vm370, %v913, 0
    %917 = vmatprep.subr.mxu0 0.0
    %918 = vmatpush1.msra.mxu0 0.0
    %919 = vmatprep.subr.mxu0 0.0
    %920 = vmatpush1.msra.mxu0 0.0
    %921 = vmatprep.subr.mxu0 0.0
    %922 = vmatpush1.msra.mxu0 0.0
    %923 = vmatprep.subr.mxu0 0.0
    %924 = vmatpush1.msra.mxu0 0.0
    %925 = vmatprep.subr.mxu0 0.0
    %926 = vmatpush1.msra.mxu0 0.0
    %927 = vmatprep.subr.mxu0 0.0
    %928 = vmatpush1.msra.mxu0 0.0
    %929 = vmatprep.subr.mxu0 0.0
    %930 = vmatpush1.msra.mxu0 0.0
    %931 = vmatprep.subr.mxu0 0.0
    %932 = vmatpush1.msra.mxu0 0.0
    %933 = vmatprep.subr.mxu0 0.0
    %934 = vmatpush1.msra.mxu0 0.0
    %935 = vmatprep.subr.mxu0 0.0
    %936 = vmatpush1.msra.mxu0 0.0
    %937 = vmatprep.subr.mxu0 0.0
    %938 = vmatpush1.msra.mxu0 0.0
    %939 = vmatprep.subr.mxu0 0.0
    %940 = vmatpush1.msra.mxu0 0.0
    %941 = vmatprep.subr.mxu0 0.0
    %942 = vmatpush1.msra.mxu0 0.0
    %943 = vmatprep.subr.mxu0 0.0
    %944 = vmatpush1.msra.mxu0 0.0
    %945 = vmatprep.subr.mxu0 0.0
    %946 = vmatpush1.msra.mxu0 %v73
    %947 = vmatprep.subr.mxu0 0.0
    %948 = vmatpush1.msra.mxu0 %v72
    %949 = vmatprep.subr.mxu0 0.0
    %950 = vmatpush2.msra.mxu0 0.0
    %951 = vmatprep.subr.mxu0 0.0
    %952 = vmatpush2.msra.mxu0 0.0
    %953 = vmatprep.subr.mxu0 0.0
    %954 = vmatpush2.msra.mxu0 0.0
    %955 = vmatprep.subr.mxu0 0.0
    %956 = vmatpush2.msra.mxu0 0.0
    %957 = vmatprep.subr.mxu0 0.0
    %958 = vmatpush2.msra.mxu0 0.0
    %959 = vmatprep.subr.mxu0 0.0
    %960 = vmatpush2.msra.mxu0 0.0
    %961 = vmatprep.subr.mxu0 0.0
    %962 = vmatpush2.msra.mxu0 0.0
    %963 = vmatprep.subr.mxu0 0.0
    %964 = vmatpush2.msra.mxu0 0.0
    %965 = vmatprep.subr.mxu0 0.0
    %966 = vmatpush2.msra.mxu0 0.0
    %967 = vmatprep.subr.mxu0 0.0
    %968 = vmatpush2.msra.mxu0 0.0
    %969 = vmatprep.subr.mxu0 0.0
    %970 = vmatpush2.msra.mxu0 0.0
    %971 = vmatprep.subr.mxu0 0.0
    %972 = vmatpush2.msra.mxu0 0.0
    %973 = vmatprep.subr.mxu0 0.0
    %974 = vmatpush2.msra.mxu0 0.0
    %975 = vmatprep.subr.mxu0 0.0
    %976 = vmatpush2.msra.mxu0 0.0
    %977 = vmatprep.subr.mxu0 0.0
    %978 = vmatpush2.msra.mxu0 0.0
    %979 = vmatprep.subr.mxu0 0.0
    %980 = vmatpush2.msra.mxu0 0.0
    %981 = vmatprep.mubr.f32.mxu0 0.0
    %982 = vmatmul.mubr.f32.gmra.mxu0 %v915
    %v983 = vpop.f32.mrf.mxu0
    %v984 = vadd.f32 0.0, %v983
    %v985 = vpop.f32.mrf.mxu0
    %986 = vdwg.mxu0
    %v988 = vsel %vm102, %v984, 0
    %990 = vmatprep.subr.mxu0 0.0
    %991 = vmatpush1.msra.mxu0 0.0
    %992 = vmatprep.subr.mxu0 0.0
    %993 = vmatpush1.msra.mxu0 0.0
    %994 = vmatprep.subr.mxu0 0.0
    %995 = vmatpush1.msra.mxu0 0.0
    %996 = vmatprep.subr.mxu0 0.0
    %997 = vmatpush1.msra.mxu0 0.0
    %998 = vmatprep.subr.mxu0 0.0
    %999 = vmatpush1.msra.mxu0 0.0
    %1000 = vmatprep.subr.mxu0 0.0
    %1001 = vmatpush1.msra.mxu0 0.0
    %1002 = vmatprep.subr.mxu0 0.0
    %1003 = vmatpush1.msra.mxu0 0.0
    %1004 = vmatprep.subr.mxu0 0.0
    %1005 = vmatpush1.msra.mxu0 0.0
    %1006 = vmatprep.subr.mxu0 0.0
    %1007 = vmatpush1.msra.mxu0 0.0
    %1008 = vmatprep.subr.mxu0 0.0
    %1009 = vmatpush1.msra.mxu0 0.0
    %1010 = vmatprep.subr.mxu0 0.0
    %1011 = vmatpush1.msra.mxu0 0.0
    %1012 = vmatprep.subr.mxu0 0.0
    %1013 = vmatpush1.msra.mxu0 0.0
    %1014 = vmatprep.subr.mxu0 0.0
    %1015 = vmatpush1.msra.mxu0 %v87
    %1016 = vmatprep.subr.mxu0 0.0
    %1017 = vmatpush1.msra.mxu0 %v86
    %1018 = vmatprep.subr.mxu0 0.0
    %1019 = vmatpush1.msra.mxu0 %v85
    %1020 = vmatprep.subr.mxu0 0.0
    %1021 = vmatpush1.msra.mxu0 %v84
    %1022 = vmatprep.subr.mxu0 0.0
    %1023 = vmatpush2.msra.mxu0 0.0
    %1024 = vmatprep.subr.mxu0 0.0
    %1025 = vmatpush2.msra.mxu0 0.0
    %1026 = vmatprep.subr.mxu0 0.0
    %1027 = vmatpush2.msra.mxu0 0.0
    %1028 = vmatprep.subr.mxu0 0.0
    %1029 = vmatpush2.msra.mxu0 0.0
    %1030 = vmatprep.subr.mxu0 0.0
    %1031 = vmatpush2.msra.mxu0 0.0
    %1032 = vmatprep.subr.mxu0 0.0
    %1033 = vmatpush2.msra.mxu0 0.0
    %1034 = vmatprep.subr.mxu0 0.0
    %1035 = vmatpush2.msra.mxu0 0.0
    %1036 = vmatprep.subr.mxu0 0.0
    %1037 = vmatpush2.msra.mxu0 0.0
    %1038 = vmatprep.subr.mxu0 0.0
    %1039 = vmatpush2.msra.mxu0 0.0
    %1040 = vmatprep.subr.mxu0 0.0
    %1041 = vmatpush2.msra.mxu0 0.0
    %1042 = vmatprep.subr.mxu0 0.0
    %1043 = vmatpush2.msra.mxu0 0.0
    %1044 = vmatprep.subr.mxu0 0.0
    %1045 = vmatpush2.msra.mxu0 0.0
    %1046 = vmatprep.subr.mxu0 0.0
    %1047 = vmatpush2.msra.mxu0 0.0
    %1048 = vmatprep.subr.mxu0 0.0
    %1049 = vmatpush2.msra.mxu0 0.0
    %1050 = vmatprep.subr.mxu0 0.0
    %1051 = vmatpush2.msra.mxu0 0.0
    %1052 = vmatprep.subr.mxu0 0.0
    %1053 = vmatpush2.msra.mxu0 0.0
    %1054 = vmatprep.mubr.f32.mxu0 0.0
    %1055 = vmatmul.mubr.f32.gmra.mxu0 %v988
    %v1056 = vpop.f32.mrf.mxu0
    %v1057 = vadd.f32 %v455, %v1056
    %v1058 = vpop.f32.mrf.mxu0
    %1059 = vdwg.mxu0
    %v1060 = vadd.f32 %v1057, %v75
    %v1061 = vmax.f32 %v1060, 0.0
    %v1062 = vrot.slane %v267, 1
    %v1063 = vsel %vm102, %v1062, 0
    %v1066 = vsel %vm102, %v1061, 0
    %1068 = vmatprep.subr.mxu0 0.0
    %1069 = vmatpush1.xpose.msra.mxu0 0.0
    %1070 = vmatprep.subr.mxu0 0.0
    %1071 = vmatpush1.xpose.msra.mxu0 0.0
    %1072 = vmatprep.subr.mxu0 0.0
    %1073 = vmatpush1.xpose.msra.mxu0 0.0
    %1074 = vmatprep.subr.mxu0 0.0
    %1075 = vmatpush1.xpose.msra.mxu0 0.0
    %1076 = vmatprep.subr.mxu0 0.0
    %1077 = vmatpush1.xpose.msra.mxu0 0.0
    %1078 = vmatprep.subr.mxu0 0.0
    %1079 = vmatpush1.xpose.msra.mxu0 0.0
    %1080 = vmatprep.subr.mxu0 0.0
    %1081 = vmatpush1.xpose.msra.mxu0 0.0
    %1082 = vmatprep.subr.mxu0 0.0
    %1083 = vmatpush1.xpose.msra.mxu0 0.0
    %1084 = vmatprep.subr.mxu0 0.0
    %1085 = vmatpush1.xpose.msra.mxu0 0.0
    %1086 = vmatprep.subr.mxu0 0.0
    %1087 = vmatpush1.xpose.msra.mxu0 0.0
    %1088 = vmatprep.subr.mxu0 0.0
    %1089 = vmatpush1.xpose.msra.mxu0 0.0
    %1090 = vmatprep.subr.mxu0 0.0
    %1091 = vmatpush1.xpose.msra.mxu0 0.0
    %1092 = vmatprep.subr.mxu0 0.0
    %1093 = vmatpush1.xpose.msra.mxu0 0.0
    %1094 = vmatprep.subr.mxu0 0.0
    %1095 = vmatpush1.xpose.msra.mxu0 0.0
    %1096 = vmatprep.subr.mxu0 0.0
    %1097 = vmatpush1.xpose.msra.mxu0 0.0
    %1098 = vmatprep.subr.mxu0 0.0
    %1099 = vmatpush1.xpose.msra.mxu0 %v1066
    %1100 = vmatprep.subr.mxu0 0.0
    %1101 = vmatpush2.xpose.msra.mxu0 0.0
    %1102 = vmatprep.subr.mxu0 0.0
    %1103 = vmatpush2.xpose.msra.mxu0 0.0
    %1104 = vmatprep.subr.mxu0 0.0
    %1105 = vmatpush2.xpose.msra.mxu0 0.0
    %1106 = vmatprep.subr.mxu0 0.0
    %1107 = vmatpush2.xpose.msra.mxu0 0.0
    %1108 = vmatprep.subr.mxu0 0.0
    %1109 = vmatpush2.xpose.msra.mxu0 0.0
    %1110 = vmatprep.subr.mxu0 0.0
    %1111 = vmatpush2.xpose.msra.mxu0 0.0
    %1112 = vmatprep.subr.mxu0 0.0
    %1113 = vmatpush2.xpose.msra.mxu0 0.0
    %1114 = vmatprep.subr.mxu0 0.0
    %1115 = vmatpush2.xpose.msra.mxu0 0.0
    %1116 = vmatprep.subr.mxu0 0.0
    %1117 = vmatpush2.xpose.msra.mxu0 0.0
    %1118 = vmatprep.subr.mxu0 0.0
    %1119 = vmatpush2.xpose.msra.mxu0 0.0
    %1120 = vmatprep.subr.mxu0 0.0
    %1121 = vmatpush2.xpose.msra.mxu0 0.0
    %1122 = vmatprep.subr.mxu0 0.0
    %1123 = vmatpush2.xpose.msra.mxu0 0.0
    %1124 = vmatprep.subr.mxu0 0.0
    %1125 = vmatpush2.xpose.msra.mxu0 0.0
    %1126 = vmatprep.subr.mxu0 0.0
    %1127 = vmatpush2.xpose.msra.mxu0 0.0
    %1128 = vmatprep.subr.mxu0 0.0
    %1129 = vmatpush2.xpose.msra.mxu0 0.0
    %1130 = vmatprep.subr.mxu0 0.0
    %1131 = vmatpush2.xpose.msra.mxu0 0.0
    %1132 = vmatprep.mubr.f32.mxu0 0.0
    %1133 = vmatmul.mubr.f32.gmra.mxu0 %v1063
    %v1134 = vpop.f32.mrf.mxu0
    %v1135 = vadd.f32 0.0, %v1134
    %v1136 = vpop.f32.mrf.mxu0
    %1137 = vdwg.mxu0
    %v1138 = vsel %vm608, %v1135, -inf
    %1139 = vmax.xlane.f32.xlu0 %v1138
    %v1140 = vpop.xlane.xlu0 %1139
    %v1141 = vsub.f32 %v1135, %v1140
    %v1142 = vmul.f32 %v1141, 1.442695
    %v1143 = vpow.pop %v1142
    %v1144 = vsel %vm608, %v1143, 0.0
    %1145 = vadd.xlane.f32.xlu0 %v1144
    %v1146 = vpop.xlane.xlu0 %1145
    %v1147 = vrcp.pop %v1146
    %v1148 = vmul.f32 %v1143, %v1147
    %v1149 = vmax.f32 %v1148, 1e-30
    %v1150 = vmin.f32 %v1149, 1e+20
    %v1151 = vlaneseq
    %v1152 = vshrl.u32 %v1151, 7
    %v1153 = vsub.s32 0, %v1152
    %v1154 = vrot.slane %v1150, %v1153
    %v1155 = vmul.f32 %v1154, %v77
    %v1156 = vmul.f32 %v1154, %v78
    %v1157 = vmax.f32 %v1155, 1e-30
    %v1158 = vmax.f32 %v1156, 1e-30
    %v1159 = vmin.f32 %v1157, 1e+20
    %v1160 = vmin.f32 %v1158, 1e+20
    %v1161 = vsel %vm632, %v1159, 0.0
    %1162 = vadd.xlane.f32.xlu0 %v1161
    %v1163 = vpop.xlane.xlu0 %1162
    %v1164 = vsel %vm632, %v1160, 0.0
    %1165 = vadd.xlane.f32.xlu0 %v1164
    %v1166 = vpop.xlane.xlu0 %1165
    %vm1167 = vcmp.eq.f32.partialorder %v1163, 0.0
    %vm1168 = vcmp.eq.f32.partialorder %v1166, 0.0
    %v1169 = vsel %vm1167, 1.0, %v1163
    %v1170 = vsel %vm1168, 1.0, %v1166
    %v1171 = vrcp.pop %v1169
    %v1172 = vmul.f32 %v1159, %v1171
    %v1173 = vrcp.pop %v1170
    %v1174 = vmul.f32 %v1160, %v1173
    %1175 = vmatprep.subr.mxu0 0.0
    %1176 = vmatpush1.msra.mxu0 0.0
    %1177 = vmatprep.subr.mxu0 0.0
    %1178 = vmatpush1.msra.mxu0 0.0
    %1179 = vmatprep.subr.mxu0 0.0
    %1180 = vmatpush1.msra.mxu0 0.0
    %1181 = vmatprep.subr.mxu0 0.0
    %1182 = vmatpush1.msra.mxu0 0.0
    %1183 = vmatprep.subr.mxu0 0.0
    %1184 = vmatpush1.msra.mxu0 0.0
    %1185 = vmatprep.subr.mxu0 0.0
    %1186 = vmatpush1.msra.mxu0 0.0
    %1187 = vmatprep.subr.mxu0 0.0
    %1188 = vmatpush1.msra.mxu0 0.0
    %1189 = vmatprep.subr.mxu0 0.0
    %1190 = vmatpush1.msra.mxu0 0.0
    %1191 = vmatprep.subr.mxu0 0.0
    %1192 = vmatpush1.msra.mxu0 0.0
    %1193 = vmatprep.subr.mxu0 0.0
    %1194 = vmatpush1.msra.mxu0 0.0
    %1195 = vmatprep.subr.mxu0 0.0
    %1196 = vmatpush1.msra.mxu0 0.0
    %1197 = vmatprep.subr.mxu0 0.0
    %1198 = vmatpush1.msra.mxu0 0.0
    %1199 = vmatprep.subr.mxu0 0.0
    %1200 = vmatpush1.msra.mxu0 %v99
    %1201 = vmatprep.subr.mxu0 0.0
    %1202 = vmatpush1.msra.mxu0 %v98
    %1203 = vmatprep.subr.mxu0 0.0
    %1204 = vmatpush1.msra.mxu0 %v97
    %1205 = vmatprep.subr.mxu0 0.0
    %1206 = vmatpush1.msra.mxu0 %v96
    %1207 = vmatprep.subr.mxu0 0.0
    %1208 = vmatpush2.msra.mxu0 0.0
    %1209 = vmatprep.subr.mxu0 0.0
    %1210 = vmatpush2.msra.mxu0 0.0
    %1211 = vmatprep.subr.mxu0 0.0
    %1212 = vmatpush2.msra.mxu0 0.0
    %1213 = vmatprep.subr.mxu0 0.0
    %1214 = vmatpush2.msra.mxu0 0.0
    %1215 = vmatprep.subr.mxu0 0.0
    %1216 = vmatpush2.msra.mxu0 0.0
    %1217 = vmatprep.subr.mxu0 0.0
    %1218 = vmatpush2.msra.mxu0 0.0
    %1219 = vmatprep.subr.mxu0 0.0
    %1220 = vmatpush2.msra.mxu0 0.0
    %1221 = vmatprep.subr.mxu0 0.0
    %1222 = vmatpush2.msra.mxu0 0.0
    %1223 = vmatprep.subr.mxu0 0.0
    %1224 = vmatpush2.msra.mxu0 0.0
    %1225 = vmatprep.subr.mxu0 0.0
    %1226 = vmatpush2.msra.mxu0 0.0
    %1227 = vmatprep.subr.mxu0 0.0
    %1228 = vmatpush2.msra.mxu0 0.0
    %1229 = vmatprep.subr.mxu0 0.0
    %1230 = vmatpush2.msra.mxu0 0.0
    %1231 = vmatprep.subr.mxu0 0.0
    %1232 = vmatpush2.msra.mxu0 0.0
    %1233 = vmatprep.subr.mxu0 0.0
    %1234 = vmatpush2.msra.mxu0 0.0
    %1235 = vmatprep.subr.mxu0 0.0
    %1236 = vmatpush2.msra.mxu0 0.0
    %1237 = vmatprep.subr.mxu0 0.0
    %1238 = vmatpush2.msra.mxu0 0.0
    %1239 = vmatprep.mubr.f32.mxu0 0.0
    %1240 = vmatmul.mubr.f32.gmra.mxu0 %v1066
    %v1241 = vpop.f32.mrf.mxu0
    %v1242 = vadd.f32 0.0, %v1241
    %v1243 = vpop.f32.mrf.mxu0
    %1244 = vdwg.mxu0
    %v1246 = vsel %vm632, %v1172, 0
    %v1249 = vsel %vm632, %v1174, 0
    %1251 = vmatprep.subr.mxu0 0.0
    %1252 = vmatpush1.msra.mxu0 0.0
    %1253 = vmatprep.subr.mxu0 0.0
    %1254 = vmatpush1.msra.mxu0 0.0
    %1255 = vmatprep.subr.mxu0 0.0
    %1256 = vmatpush1.msra.mxu0 0.0
    %1257 = vmatprep.subr.mxu0 0.0
    %1258 = vmatpush1.msra.mxu0 0.0
    %1259 = vmatprep.subr.mxu0 0.0
    %1260 = vmatpush1.msra.mxu0 0.0
    %1261 = vmatprep.subr.mxu0 0.0
    %1262 = vmatpush1.msra.mxu0 0.0
    %1263 = vmatprep.subr.mxu0 0.0
    %1264 = vmatpush1.msra.mxu0 0.0
    %1265 = vmatprep.subr.mxu0 0.0
    %1266 = vmatpush1.msra.mxu0 0.0
    %1267 = vmatprep.subr.mxu0 0.0
    %1268 = vmatpush1.msra.mxu0 0.0
    %1269 = vmatprep.subr.mxu0 0.0
    %1270 = vmatpush1.msra.mxu0 0.0
    %1271 = vmatprep.subr.mxu0 0.0
    %1272 = vmatpush1.msra.mxu0 0.0
    %1273 = vmatprep.subr.mxu0 0.0
    %1274 = vmatpush1.msra.mxu0 0.0
    %1275 = vmatprep.subr.mxu0 0.0
    %1276 = vmatpush1.msra.mxu0 0.0
    %1277 = vmatprep.subr.mxu0 0.0
    %1278 = vmatpush1.msra.mxu0 0.0
    %1279 = vmatprep.subr.mxu0 0.0
    %1280 = vmatpush1.msra.mxu0 0.0
    %1281 = vmatprep.subr.mxu0 0.0
    %1282 = vmatpush1.msra.mxu0 %v1242
    %1283 = vmatprep.subr.mxu0 0.0
    %1284 = vmatpush2.msra.mxu0 0.0
    %1285 = vmatprep.subr.mxu0 0.0
    %1286 = vmatpush2.msra.mxu0 0.0
    %1287 = vmatprep.subr.mxu0 0.0
    %1288 = vmatpush2.msra.mxu0 0.0
    %1289 = vmatprep.subr.mxu0 0.0
    %1290 = vmatpush2.msra.mxu0 0.0
    %1291 = vmatprep.subr.mxu0 0.0
    %1292 = vmatpush2.msra.mxu0 0.0
    %1293 = vmatprep.subr.mxu0 0.0
    %1294 = vmatpush2.msra.mxu0 0.0
    %1295 = vmatprep.subr.mxu0 0.0
    %1296 = vmatpush2.msra.mxu0 0.0
    %1297 = vmatprep.subr.mxu0 0.0
    %1298 = vmatpush2.msra.mxu0 0.0
    %1299 = vmatprep.subr.mxu0 0.0
    %1300 = vmatpush2.msra.mxu0 0.0
    %1301 = vmatprep.subr.mxu0 0.0
    %1302 = vmatpush2.msra.mxu0 0.0
    %1303 = vmatprep.subr.mxu0 0.0
    %1304 = vmatpush2.msra.mxu0 0.0
    %1305 = vmatprep.subr.mxu0 0.0
    %1306 = vmatpush2.msra.mxu0 0.0
    %1307 = vmatprep.subr.mxu0 0.0
    %1308 = vmatpush2.msra.mxu0 0.0
    %1309 = vmatprep.subr.mxu0 0.0
    %1310 = vmatpush2.msra.mxu0 0.0
    %1311 = vmatprep.subr.mxu0 0.0
    %1312 = vmatpush2.msra.mxu0 0.0
    %1313 = vmatprep.subr.mxu0 0.0
    %1314 = vmatpush2.msra.mxu0 0.0
    %1315 = vmatprep.mubr.f32.mxu0 0.0
    %1316 = vmatmul.mubr.f32.gmra.mxu0 %v1246
    %v1317 = vpop.f32.mrf.mxu0
    %v1318 = vadd.f32 %v721, %v1317
    %v1319 = vpop.f32.mrf.mxu0
    %1320 = vmatprep.mubr.f32.mxu0 0.0
    %1321 = vmatmul.mubr.f32.gmra.mxu0 %v1249
    %v1322 = vpop.f32.mrf.mxu0
    %v1323 = vadd.f32 %v721, %v1322
    %v1324 = vpop.f32.mrf.mxu0
    %1325 = vdwg.mxu0
    %v1326 = vadd.f32 %v1318, %v72
    %v1327 = vadd.f32 %v1323, %v73
    %v1328 = vmax.f32 %v1326, 0.0
    %v1329 = vmax.f32 %v1327, 0.0
    %s1330 = scalar_lea.vmem [#allocation7], 128
    %v1331 = vld [vmem:[%s1330] sm:$0xff]
    %v1332 = vld [vmem:[%s1330 + $0x8] sm:$0xff]
    %v1333 = vld [vmem:[%s1330 + $0x10] sm:$0xff]
    %v1334 = vld [vmem:[%s1330 + $0x18] sm:$0xff]
    %s1335 = scalar_lea.vmem [#allocation7], 160
    %v1336 = vld [vmem:[%s1335] sm:$0xff]
    %v1337 = vld [vmem:[%s1335 + $0x8] sm:$0xff]
    %v1338 = vld [vmem:[%s1335 + $0x10] sm:$0xff]
    %v1339 = vld [vmem:[%s1335 + $0x18] sm:$0xff]
    %s1340 = scalar_lea.vmem %s6, 5
    %v1341 = vld [vmem:[%s1340] sm:$0x1]
    %s1342 = scalar_lea.vmem [#allocation7], 192
    %v1343 = vld [vmem:[%s1342] sm:$0xff]
    %v1344 = vld [vmem:[%s1342 + $0x8] sm:$0xff]
    %v1345 = vld [vmem:[%s1342 + $0x10] sm:$0xff]
    %v1346 = vld [vmem:[%s1342 + $0x18] sm:$0xff]
    %s1347 = scalar_lea.vmem [#allocation7], 224
    %v1348 = vld [vmem:[%s1347] sm:$0xff]
    %v1349 = vld [vmem:[%s1347 + $0x8] sm:$0xff]
    %v1350 = vld [vmem:[%s1347 + $0x10] sm:$0xff]
    %v1351 = vld [vmem:[%s1347 + $0x18] sm:$0xff]
    %s1352 = scalar_lea.vmem %s6, 7
    %v1353 = vld [vmem:[%s1352] sm:$0x1]
    %v1355 = vsel %vm102, %v1331, 0
    %v1358 = vsel %vm102, %v1332, 0
    %v1361 = vsel %vm102, %v1333, 0
    %v1364 = vsel %vm102, %v1334, 0
    %1366 = vmatprep.subr.mxu0 0.0
    %1367 = vmatpush1.xpose.msra.mxu0 0.0
    %1368 = vmatprep.subr.mxu0 0.0
    %1369 = vmatpush1.xpose.msra.mxu0 0.0
    %1370 = vmatprep.subr.mxu0 0.0
    %1371 = vmatpush1.xpose.msra.mxu0 0.0
    %1372 = vmatprep.subr.mxu0 0.0
    %1373 = vmatpush1.xpose.msra.mxu0 0.0
    %1374 = vmatprep.subr.mxu0 0.0
    %1375 = vmatpush1.xpose.msra.mxu0 0.0
    %1376 = vmatprep.subr.mxu0 0.0
    %1377 = vmatpush1.xpose.msra.mxu0 0.0
    %1378 = vmatprep.subr.mxu0 0.0
    %1379 = vmatpush1.xpose.msra.mxu0 0.0
    %1380 = vmatprep.subr.mxu0 0.0
    %1381 = vmatpush1.xpose.msra.mxu0 0.0
    %1382 = vmatprep.subr.mxu0 0.0
    %1383 = vmatpush1.xpose.msra.mxu0 0.0
    %1384 = vmatprep.subr.mxu0 0.0
    %1385 = vmatpush1.xpose.msra.mxu0 0.0
    %1386 = vmatprep.subr.mxu0 0.0
    %1387 = vmatpush1.xpose.msra.mxu0 0.0
    %1388 = vmatprep.subr.mxu0 0.0
    %1389 = vmatpush1.xpose.msra.mxu0 0.0
    %1390 = vmatprep.subr.mxu0 0.0
    %1391 = vmatpush1.xpose.msra.mxu0 %v1364
    %1392 = vmatprep.subr.mxu0 0.0
    %1393 = vmatpush1.xpose.msra.mxu0 %v1361
    %1394 = vmatprep.subr.mxu0 0.0
    %1395 = vmatpush1.xpose.msra.mxu0 %v1358
    %1396 = vmatprep.subr.mxu0 0.0
    %1397 = vmatpush1.xpose.msra.mxu0 %v1355
    %1398 = vmatprep.subr.mxu0 0.0
    %1399 = vmatpush2.xpose.msra.mxu0 0.0
    %1400 = vmatprep.subr.mxu0 0.0
    %1401 = vmatpush2.xpose.msra.mxu0 0.0
    %1402 = vmatprep.subr.mxu0 0.0
    %1403 = vmatpush2.xpose.msra.mxu0 0.0
    %1404 = vmatprep.subr.mxu0 0.0
    %1405 = vmatpush2.xpose.msra.mxu0 0.0
    %1406 = vmatprep.subr.mxu0 0.0
    %1407 = vmatpush2.xpose.msra.mxu0 0.0
    %1408 = vmatprep.subr.mxu0 0.0
    %1409 = vmatpush2.xpose.msra.mxu0 0.0
    %1410 = vmatprep.subr.mxu0 0.0
    %1411 = vmatpush2.xpose.msra.mxu0 0.0
    %1412 = vmatprep.subr.mxu0 0.0
    %1413 = vmatpush2.xpose.msra.mxu0 0.0
    %1414 = vmatprep.subr.mxu0 0.0
    %1415 = vmatpush2.xpose.msra.mxu0 0.0
    %1416 = vmatprep.subr.mxu0 0.0
    %1417 = vmatpush2.xpose.msra.mxu0 0.0
    %1418 = vmatprep.subr.mxu0 0.0
    %1419 = vmatpush2.xpose.msra.mxu0 0.0
    %1420 = vmatprep.subr.mxu0 0.0
    %1421 = vmatpush2.xpose.msra.mxu0 0.0
    %1422 = vmatprep.subr.mxu0 0.0
    %1423 = vmatpush2.xpose.msra.mxu0 0.0
    %1424 = vmatprep.subr.mxu0 0.0
    %1425 = vmatpush2.xpose.msra.mxu0 0.0
    %1426 = vmatprep.subr.mxu0 0.0
    %1427 = vmatpush2.xpose.msra.mxu0 0.0
    %1428 = vmatprep.subr.mxu0 0.0
    %1429 = vmatpush2.xpose.msra.mxu0 0.0
    %1430 = vmatprep.mubr.f32.mxu0 0.0
    %1431 = vmatmul.mubr.f32.gmra.mxu0 %v104
    %v1432 = vpop.f32.mrf.mxu0
    %v1433 = vadd.f32 0.0, %v1432
    %v1434 = vpop.f32.mrf.mxu0
    %1435 = vdwg.mxu0
    %v1437 = vsel %vm102, %v1343, 0
    %v1440 = vsel %vm102, %v1344, 0
    %v1443 = vsel %vm102, %v1345, 0
    %v1446 = vsel %vm102, %v1346, 0
    %1448 = vmatprep.subr.mxu0 0.0
    %1449 = vmatpush1.xpose.msra.mxu0 0.0
    %1450 = vmatprep.subr.mxu0 0.0
    %1451 = vmatpush1.xpose.msra.mxu0 0.0
    %1452 = vmatprep.subr.mxu0 0.0
    %1453 = vmatpush1.xpose.msra.mxu0 0.0
    %1454 = vmatprep.subr.mxu0 0.0
    %1455 = vmatpush1.xpose.msra.mxu0 0.0
    %1456 = vmatprep.subr.mxu0 0.0
    %1457 = vmatpush1.xpose.msra.mxu0 0.0
    %1458 = vmatprep.subr.mxu0 0.0
    %1459 = vmatpush1.xpose.msra.mxu0 0.0
    %1460 = vmatprep.subr.mxu0 0.0
    %1461 = vmatpush1.xpose.msra.mxu0 0.0
    %1462 = vmatprep.subr.mxu0 0.0
    %1463 = vmatpush1.xpose.msra.mxu0 0.0
    %1464 = vmatprep.subr.mxu0 0.0
    %1465 = vmatpush1.xpose.msra.mxu0 0.0
    %1466 = vmatprep.subr.mxu0 0.0
    %1467 = vmatpush1.xpose.msra.mxu0 0.0
    %1468 = vmatprep.subr.mxu0 0.0
    %1469 = vmatpush1.xpose.msra.mxu0 0.0
    %1470 = vmatprep.subr.mxu0 0.0
    %1471 = vmatpush1.xpose.msra.mxu0 0.0
    %1472 = vmatprep.subr.mxu0 0.0
    %1473 = vmatpush1.xpose.msra.mxu0 %v1446
    %1474 = vmatprep.subr.mxu0 0.0
    %1475 = vmatpush1.xpose.msra.mxu0 %v1443
    %1476 = vmatprep.subr.mxu0 0.0
    %1477 = vmatpush1.xpose.msra.mxu0 %v1440
    %1478 = vmatprep.subr.mxu0 0.0
    %1479 = vmatpush1.xpose.msra.mxu0 %v1437
    %1480 = vmatprep.subr.mxu0 0.0
    %1481 = vmatpush2.xpose.msra.mxu0 0.0
    %1482 = vmatprep.subr.mxu0 0.0
    %1483 = vmatpush2.xpose.msra.mxu0 0.0
    %1484 = vmatprep.subr.mxu0 0.0
    %1485 = vmatpush2.xpose.msra.mxu0 0.0
    %1486 = vmatprep.subr.mxu0 0.0
    %1487 = vmatpush2.xpose.msra.mxu0 0.0
    %1488 = vmatprep.subr.mxu0 0.0
    %1489 = vmatpush2.xpose.msra.mxu0 0.0
    %1490 = vmatprep.subr.mxu0 0.0
    %1491 = vmatpush2.xpose.msra.mxu0 0.0
    %1492 = vmatprep.subr.mxu0 0.0
    %1493 = vmatpush2.xpose.msra.mxu0 0.0
    %1494 = vmatprep.subr.mxu0 0.0
    %1495 = vmatpush2.xpose.msra.mxu0 0.0
    %1496 = vmatprep.subr.mxu0 0.0
    %1497 = vmatpush2.xpose.msra.mxu0 0.0
    %1498 = vmatprep.subr.mxu0 0.0
    %1499 = vmatpush2.xpose.msra.mxu0 0.0
    %1500 = vmatprep.subr.mxu0 0.0
    %1501 = vmatpush2.xpose.msra.mxu0 0.0
    %1502 = vmatprep.subr.mxu0 0.0
    %1503 = vmatpush2.xpose.msra.mxu0 0.0
    %1504 = vmatprep.subr.mxu0 0.0
    %1505 = vmatpush2.xpose.msra.mxu0 0.0
    %1506 = vmatprep.subr.mxu0 0.0
    %1507 = vmatpush2.xpose.msra.mxu0 0.0
    %1508 = vmatprep.subr.mxu0 0.0
    %1509 = vmatpush2.xpose.msra.mxu0 0.0
    %1510 = vmatprep.subr.mxu0 0.0
    %1511 = vmatpush2.xpose.msra.mxu0 0.0
    %1512 = vmatprep.mubr.f32.mxu0 0.0
    %1513 = vmatmul.mubr.f32.gmra.mxu0 %v104
    %v1514 = vpop.f32.mrf.mxu0
    %v1515 = vadd.f32 0.0, %v1514
    %v1516 = vpop.f32.mrf.mxu0
    %1517 = vdwg.mxu0
    %v1519 = vsel %vm102, %v1433, 0
    %v1522 = vsel %vm102, %v806, 0
    %v1525 = vsel %vm102, %v807, 0
    %1527 = vmatprep.subr.mxu0 0.0
    %1528 = vmatpush1.xpose.msra.mxu0 0.0
    %1529 = vmatprep.subr.mxu0 0.0
    %1530 = vmatpush1.xpose.msra.mxu0 0.0
    %1531 = vmatprep.subr.mxu0 0.0
    %1532 = vmatpush1.xpose.msra.mxu0 0.0
    %1533 = vmatprep.subr.mxu0 0.0
    %1534 = vmatpush1.xpose.msra.mxu0 0.0
    %1535 = vmatprep.subr.mxu0 0.0
    %1536 = vmatpush1.xpose.msra.mxu0 0.0
    %1537 = vmatprep.subr.mxu0 0.0
    %1538 = vmatpush1.xpose.msra.mxu0 0.0
    %1539 = vmatprep.subr.mxu0 0.0
    %1540 = vmatpush1.xpose.msra.mxu0 0.0
    %1541 = vmatprep.subr.mxu0 0.0
    %1542 = vmatpush1.xpose.msra.mxu0 0.0
    %1543 = vmatprep.subr.mxu0 0.0
    %1544 = vmatpush1.xpose.msra.mxu0 0.0
    %1545 = vmatprep.subr.mxu0 0.0
    %1546 = vmatpush1.xpose.msra.mxu0 0.0
    %1547 = vmatprep.subr.mxu0 0.0
    %1548 = vmatpush1.xpose.msra.mxu0 0.0
    %1549 = vmatprep.subr.mxu0 0.0
    %1550 = vmatpush1.xpose.msra.mxu0 0.0
    %1551 = vmatprep.subr.mxu0 0.0
    %1552 = vmatpush1.xpose.msra.mxu0 0.0
    %1553 = vmatprep.subr.mxu0 0.0
    %1554 = vmatpush1.xpose.msra.mxu0 0.0
    %1555 = vmatprep.subr.mxu0 0.0
    %1556 = vmatpush1.xpose.msra.mxu0 %v1525
    %1557 = vmatprep.subr.mxu0 0.0
    %1558 = vmatpush1.xpose.msra.mxu0 %v1522
    %1559 = vmatprep.subr.mxu0 0.0
    %1560 = vmatpush2.xpose.msra.mxu0 0.0
    %1561 = vmatprep.subr.mxu0 0.0
    %1562 = vmatpush2.xpose.msra.mxu0 0.0
    %1563 = vmatprep.subr.mxu0 0.0
    %1564 = vmatpush2.xpose.msra.mxu0 0.0
    %1565 = vmatprep.subr.mxu0 0.0
    %1566 = vmatpush2.xpose.msra.mxu0 0.0
    %1567 = vmatprep.subr.mxu0 0.0
    %1568 = vmatpush2.xpose.msra.mxu0 0.0
    %1569 = vmatprep.subr.mxu0 0.0
    %1570 = vmatpush2.xpose.msra.mxu0 0.0
    %1571 = vmatprep.subr.mxu0 0.0
    %1572 = vmatpush2.xpose.msra.mxu0 0.0
    %1573 = vmatprep.subr.mxu0 0.0
    %1574 = vmatpush2.xpose.msra.mxu0 0.0
    %1575 = vmatprep.subr.mxu0 0.0
    %1576 = vmatpush2.xpose.msra.mxu0 0.0
    %1577 = vmatprep.subr.mxu0 0.0
    %1578 = vmatpush2.xpose.msra.mxu0 0.0
    %1579 = vmatprep.subr.mxu0 0.0
    %1580 = vmatpush2.xpose.msra.mxu0 0.0
    %1581 = vmatprep.subr.mxu0 0.0
    %1582 = vmatpush2.xpose.msra.mxu0 0.0
    %1583 = vmatprep.subr.mxu0 0.0
    %1584 = vmatpush2.xpose.msra.mxu0 0.0
    %1585 = vmatprep.subr.mxu0 0.0
    %1586 = vmatpush2.xpose.msra.mxu0 0.0
    %1587 = vmatprep.subr.mxu0 0.0
    %1588 = vmatpush2.xpose.msra.mxu0 0.0
    %1589 = vmatprep.subr.mxu0 0.0
    %1590 = vmatpush2.xpose.msra.mxu0 0.0
    %1591 = vmatprep.mubr.f32.mxu0 0.0
    %1592 = vmatmul.mubr.f32.gmra.mxu0 %v1519
    %v1593 = vpop.f32.mrf.mxu0
    %v1594 = vadd.f32 0.0, %v1593
    %v1595 = vpop.f32.mrf.mxu0
    %1596 = vdwg.mxu0
    %v1597 = vsel %vm349, %v1594, -inf
    %1598 = vmax.xlane.f32.xlu0 %v1597
    %v1599 = vpop.xlane.xlu0 %1598
    %v1600 = vsub.f32 %v1594, %v1599
    %v1601 = vmul.f32 %v1600, 1.442695
    %v1602 = vpow.pop %v1601
    %v1603 = vsel %vm349, %v1602, 0.0
    %1604 = vadd.xlane.f32.xlu0 %v1603
    %v1605 = vpop.xlane.xlu0 %1604
    %v1606 = vrcp.pop %v1605
    %v1607 = vmul.f32 %v1602, %v1606
    %v1608 = vmax.f32 %v1607, 1e-30
    %v1609 = vmin.f32 %v1608, 1e+20
    %v1610 = vlaneseq
    %v1611 = vshrl.u32 %v1610, 7
    %v1612 = vsub.s32 0, %v1611
    %v1613 = vrot.slane %v1609, %v1612
    %v1614 = vmul.f32 %v1613, %v76
    %v1615 = vmax.f32 %v1614, 1e-30
    %v1616 = vmin.f32 %v1615, 1e+20
    %v1617 = vsel %vm370, %v1616, 0.0
    %1618 = vadd.xlane.f32.xlu0 %v1617
    %v1619 = vpop.xlane.xlu0 %1618
    %vm1620 = vcmp.eq.f32.partialorder %v1619, 0.0
    %v1621 = vsel %vm1620, 1.0, %v1619
    %v1622 = vrcp.pop %v1621
    %v1623 = vmul.f32 %v1616, %v1622
    %v1625 = vsel %vm370, %v1623, 0
    %1627 = vmatprep.subr.mxu0 0.0
    %1628 = vmatpush1.msra.mxu0 0.0
    %1629 = vmatprep.subr.mxu0 0.0
    %1630 = vmatpush1.msra.mxu0 0.0
    %1631 = vmatprep.subr.mxu0 0.0
    %1632 = vmatpush1.msra.mxu0 0.0
    %1633 = vmatprep.subr.mxu0 0.0
    %1634 = vmatpush1.msra.mxu0 0.0
    %1635 = vmatprep.subr.mxu0 0.0
    %1636 = vmatpush1.msra.mxu0 0.0
    %1637 = vmatprep.subr.mxu0 0.0
    %1638 = vmatpush1.msra.mxu0 0.0
    %1639 = vmatprep.subr.mxu0 0.0
    %1640 = vmatpush1.msra.mxu0 0.0
    %1641 = vmatprep.subr.mxu0 0.0
    %1642 = vmatpush1.msra.mxu0 0.0
    %1643 = vmatprep.subr.mxu0 0.0
    %1644 = vmatpush1.msra.mxu0 0.0
    %1645 = vmatprep.subr.mxu0 0.0
    %1646 = vmatpush1.msra.mxu0 0.0
    %1647 = vmatprep.subr.mxu0 0.0
    %1648 = vmatpush1.msra.mxu0 0.0
    %1649 = vmatprep.subr.mxu0 0.0
    %1650 = vmatpush1.msra.mxu0 0.0
    %1651 = vmatprep.subr.mxu0 0.0
    %1652 = vmatpush1.msra.mxu0 0.0
    %1653 = vmatprep.subr.mxu0 0.0
    %1654 = vmatpush1.msra.mxu0 0.0
    %1655 = vmatprep.subr.mxu0 0.0
    %1656 = vmatpush1.msra.mxu0 %v807
    %1657 = vmatprep.subr.mxu0 0.0
    %1658 = vmatpush1.msra.mxu0 %v806
    %1659 = vmatprep.subr.mxu0 0.0
    %1660 = vmatpush2.msra.mxu0 0.0
    %1661 = vmatprep.subr.mxu0 0.0
    %1662 = vmatpush2.msra.mxu0 0.0
    %1663 = vmatprep.subr.mxu0 0.0
    %1664 = vmatpush2.msra.mxu0 0.0
    %1665 = vmatprep.subr.mxu0 0.0
    %1666 = vmatpush2.msra.mxu0 0.0
    %1667 = vmatprep.subr.mxu0 0.0
    %1668 = vmatpush2.msra.mxu0 0.0
    %1669 = vmatprep.subr.mxu0 0.0
    %1670 = vmatpush2.msra.mxu0 0.0
    %1671 = vmatprep.subr.mxu0 0.0
    %1672 = vmatpush2.msra.mxu0 0.0
    %1673 = vmatprep.subr.mxu0 0.0
    %1674 = vmatpush2.msra.mxu0 0.0
    %1675 = vmatprep.subr.mxu0 0.0
    %1676 = vmatpush2.msra.mxu0 0.0
    %1677 = vmatprep.subr.mxu0 0.0
    %1678 = vmatpush2.msra.mxu0 0.0
    %1679 = vmatprep.subr.mxu0 0.0
    %1680 = vmatpush2.msra.mxu0 0.0
    %1681 = vmatprep.subr.mxu0 0.0
    %1682 = vmatpush2.msra.mxu0 0.0
    %1683 = vmatprep.subr.mxu0 0.0
    %1684 = vmatpush2.msra.mxu0 0.0
    %1685 = vmatprep.subr.mxu0 0.0
    %1686 = vmatpush2.msra.mxu0 0.0
    %1687 = vmatprep.subr.mxu0 0.0
    %1688 = vmatpush2.msra.mxu0 0.0
    %1689 = vmatprep.subr.mxu0 0.0
    %1690 = vmatpush2.msra.mxu0 0.0
    %1691 = vmatprep.mubr.f32.mxu0 0.0
    %1692 = vmatmul.mubr.f32.gmra.mxu0 %v1625
    %v1693 = vpop.f32.mrf.mxu0
    %v1694 = vadd.f32 0.0, %v1693
    %v1695 = vpop.f32.mrf.mxu0
    %1696 = vdwg.mxu0
    %v1698 = vlaneseq
    %v1699 = vshrl.u32 %v1698, 7
    %v1700 = vsub.s32 0, %v1699
    %v1701 = vrot.slane %v1341, %v1700
    %v1704 = vsel %vm102, %v1694, 0
    %1706 = vmatprep.subr.mxu0 0.0
    %1707 = vmatpush1.msra.mxu0 0.0
    %1708 = vmatprep.subr.mxu0 0.0
    %1709 = vmatpush1.msra.mxu0 0.0
    %1710 = vmatprep.subr.mxu0 0.0
    %1711 = vmatpush1.msra.mxu0 0.0
    %1712 = vmatprep.subr.mxu0 0.0
    %1713 = vmatpush1.msra.mxu0 0.0
    %1714 = vmatprep.subr.mxu0 0.0
    %1715 = vmatpush1.msra.mxu0 0.0
    %1716 = vmatprep.subr.mxu0 0.0
    %1717 = vmatpush1.msra.mxu0 0.0
    %1718 = vmatprep.subr.mxu0 0.0
    %1719 = vmatpush1.msra.mxu0 0.0
    %1720 = vmatprep.subr.mxu0 0.0
    %1721 = vmatpush1.msra.mxu0 0.0
    %1722 = vmatprep.subr.mxu0 0.0
    %1723 = vmatpush1.msra.mxu0 0.0
    %1724 = vmatprep.subr.mxu0 0.0
    %1725 = vmatpush1.msra.mxu0 0.0
    %1726 = vmatprep.subr.mxu0 0.0
    %1727 = vmatpush1.msra.mxu0 0.0
    %1728 = vmatprep.subr.mxu0 0.0
    %1729 = vmatpush1.msra.mxu0 0.0
    %1730 = vmatprep.subr.mxu0 0.0
    %1731 = vmatpush1.msra.mxu0 %v1339
    %1732 = vmatprep.subr.mxu0 0.0
    %1733 = vmatpush1.msra.mxu0 %v1338
    %1734 = vmatprep.subr.mxu0 0.0
    %1735 = vmatpush1.msra.mxu0 %v1337
    %1736 = vmatprep.subr.mxu0 0.0
    %1737 = vmatpush1.msra.mxu0 %v1336
    %1738 = vmatprep.subr.mxu0 0.0
    %1739 = vmatpush2.msra.mxu0 0.0
    %1740 = vmatprep.subr.mxu0 0.0
    %1741 = vmatpush2.msra.mxu0 0.0
    %1742 = vmatprep.subr.mxu0 0.0
    %1743 = vmatpush2.msra.mxu0 0.0
    %1744 = vmatprep.subr.mxu0 0.0
    %1745 = vmatpush2.msra.mxu0 0.0
    %1746 = vmatprep.subr.mxu0 0.0
    %1747 = vmatpush2.msra.mxu0 0.0
    %1748 = vmatprep.subr.mxu0 0.0
    %1749 = vmatpush2.msra.mxu0 0.0
    %1750 = vmatprep.subr.mxu0 0.0
    %1751 = vmatpush2.msra.mxu0 0.0
    %1752 = vmatprep.subr.mxu0 0.0
    %1753 = vmatpush2.msra.mxu0 0.0
    %1754 = vmatprep.subr.mxu0 0.0
    %1755 = vmatpush2.msra.mxu0 0.0
    %1756 = vmatprep.subr.mxu0 0.0
    %1757 = vmatpush2.msra.mxu0 0.0
    %1758 = vmatprep.subr.mxu0 0.0
    %1759 = vmatpush2.msra.mxu0 0.0
    %1760 = vmatprep.subr.mxu0 0.0
    %1761 = vmatpush2.msra.mxu0 0.0
    %1762 = vmatprep.subr.mxu0 0.0
    %1763 = vmatpush2.msra.mxu0 0.0
    %1764 = vmatprep.subr.mxu0 0.0
    %1765 = vmatpush2.msra.mxu0 0.0
    %1766 = vmatprep.subr.mxu0 0.0
    %1767 = vmatpush2.msra.mxu0 0.0
    %1768 = vmatprep.subr.mxu0 0.0
    %1769 = vmatpush2.msra.mxu0 0.0
    %1770 = vmatprep.mubr.f32.mxu0 0.0
    %1771 = vmatmul.mubr.f32.gmra.mxu0 %v1704
    %v1772 = vpop.f32.mrf.mxu0
    %v1773 = vadd.f32 %v1701, %v1772
    %v1774 = vpop.f32.mrf.mxu0
    %1775 = vdwg.mxu0
    %v1776 = vadd.f32 %v1773, %v531
    %v1777 = vmax.f32 %v1776, 0.0
    %v1779 = vsel %vm102, %v1515, 0
    %v1782 = vsel %vm102, %v1777, 0
    %1784 = vmatprep.subr.mxu0 0.0
    %1785 = vmatpush1.xpose.msra.mxu0 0.0
    %1786 = vmatprep.subr.mxu0 0.0
    %1787 = vmatpush1.xpose.msra.mxu0 0.0
    %1788 = vmatprep.subr.mxu0 0.0
    %1789 = vmatpush1.xpose.msra.mxu0 0.0
    %1790 = vmatprep.subr.mxu0 0.0
    %1791 = vmatpush1.xpose.msra.mxu0 0.0
    %1792 = vmatprep.subr.mxu0 0.0
    %1793 = vmatpush1.xpose.msra.mxu0 0.0
    %1794 = vmatprep.subr.mxu0 0.0
    %1795 = vmatpush1.xpose.msra.mxu0 0.0
    %1796 = vmatprep.subr.mxu0 0.0
    %1797 = vmatpush1.xpose.msra.mxu0 0.0
    %1798 = vmatprep.subr.mxu0 0.0
    %1799 = vmatpush1.xpose.msra.mxu0 0.0
    %1800 = vmatprep.subr.mxu0 0.0
    %1801 = vmatpush1.xpose.msra.mxu0 0.0
    %1802 = vmatprep.subr.mxu0 0.0
    %1803 = vmatpush1.xpose.msra.mxu0 0.0
    %1804 = vmatprep.subr.mxu0 0.0
    %1805 = vmatpush1.xpose.msra.mxu0 0.0
    %1806 = vmatprep.subr.mxu0 0.0
    %1807 = vmatpush1.xpose.msra.mxu0 0.0
    %1808 = vmatprep.subr.mxu0 0.0
    %1809 = vmatpush1.xpose.msra.mxu0 0.0
    %1810 = vmatprep.subr.mxu0 0.0
    %1811 = vmatpush1.xpose.msra.mxu0 0.0
    %1812 = vmatprep.subr.mxu0 0.0
    %1813 = vmatpush1.xpose.msra.mxu0 0.0
    %1814 = vmatprep.subr.mxu0 0.0
    %1815 = vmatpush1.xpose.msra.mxu0 %v1782
    %1816 = vmatprep.subr.mxu0 0.0
    %1817 = vmatpush2.xpose.msra.mxu0 0.0
    %1818 = vmatprep.subr.mxu0 0.0
    %1819 = vmatpush2.xpose.msra.mxu0 0.0
    %1820 = vmatprep.subr.mxu0 0.0
    %1821 = vmatpush2.xpose.msra.mxu0 0.0
    %1822 = vmatprep.subr.mxu0 0.0
    %1823 = vmatpush2.xpose.msra.mxu0 0.0
    %1824 = vmatprep.subr.mxu0 0.0
    %1825 = vmatpush2.xpose.msra.mxu0 0.0
    %1826 = vmatprep.subr.mxu0 0.0
    %1827 = vmatpush2.xpose.msra.mxu0 0.0
    %1828 = vmatprep.subr.mxu0 0.0
    %1829 = vmatpush2.xpose.msra.mxu0 0.0
    %1830 = vmatprep.subr.mxu0 0.0
    %1831 = vmatpush2.xpose.msra.mxu0 0.0
    %1832 = vmatprep.subr.mxu0 0.0
    %1833 = vmatpush2.xpose.msra.mxu0 0.0
    %1834 = vmatprep.subr.mxu0 0.0
    %1835 = vmatpush2.xpose.msra.mxu0 0.0
    %1836 = vmatprep.subr.mxu0 0.0
    %1837 = vmatpush2.xpose.msra.mxu0 0.0
    %1838 = vmatprep.subr.mxu0 0.0
    %1839 = vmatpush2.xpose.msra.mxu0 0.0
    %1840 = vmatprep.subr.mxu0 0.0
    %1841 = vmatpush2.xpose.msra.mxu0 0.0
    %1842 = vmatprep.subr.mxu0 0.0
    %1843 = vmatpush2.xpose.msra.mxu0 0.0
    %1844 = vmatprep.subr.mxu0 0.0
    %1845 = vmatpush2.xpose.msra.mxu0 0.0
    %1846 = vmatprep.subr.mxu0 0.0
    %1847 = vmatpush2.xpose.msra.mxu0 0.0
    %1848 = vmatprep.mubr.f32.mxu0 0.0
    %1849 = vmatmul.mubr.f32.gmra.mxu0 %v1779
    %v1850 = vpop.f32.mrf.mxu0
    %v1851 = vadd.f32 0.0, %v1850
    %v1852 = vpop.f32.mrf.mxu0
    %1853 = vdwg.mxu0
    %v1854 = vsel %vm608, %v1851, -inf
    %1855 = vmax.xlane.f32.xlu0 %v1854
    %v1856 = vpop.xlane.xlu0 %1855
    %v1857 = vsub.f32 %v1851, %v1856
    %v1858 = vmul.f32 %v1857, 1.442695
    %v1859 = vpow.pop %v1858
    %v1860 = vsel %vm608, %v1859, 0.0
    %1861 = vadd.xlane.f32.xlu0 %v1860
    %v1862 = vpop.xlane.xlu0 %1861
    %v1863 = vrcp.pop %v1862
    %v1864 = vmul.f32 %v1859, %v1863
    %v1865 = vmax.f32 %v1864, 1e-30
    %v1866 = vmin.f32 %v1865, 1e+20
    %v1867 = vlaneseq
    %v1868 = vshrl.u32 %v1867, 7
    %v1869 = vsub.s32 0, %v1868
    %v1870 = vrot.slane %v1866, %v1869
    %v1871 = vmul.f32 %v1870, %v77
    %v1872 = vmul.f32 %v1870, %v78
    %v1873 = vmax.f32 %v1871, 1e-30
    %v1874 = vmax.f32 %v1872, 1e-30
    %v1875 = vmin.f32 %v1873, 1e+20
    %v1876 = vmin.f32 %v1874, 1e+20
    %v1877 = vsel %vm632, %v1875, 0.0
    %1878 = vadd.xlane.f32.xlu0 %v1877
    %v1879 = vpop.xlane.xlu0 %1878
    %v1880 = vsel %vm632, %v1876, 0.0
    %1881 = vadd.xlane.f32.xlu0 %v1880
    %v1882 = vpop.xlane.xlu0 %1881
    %vm1883 = vcmp.eq.f32.partialorder %v1879, 0.0
    %vm1884 = vcmp.eq.f32.partialorder %v1882, 0.0
    %v1885 = vsel %vm1883, 1.0, %v1879
    %v1886 = vsel %vm1884, 1.0, %v1882
    %v1887 = vrcp.pop %v1885
    %v1888 = vmul.f32 %v1875, %v1887
    %v1889 = vrcp.pop %v1886
    %v1890 = vmul.f32 %v1876, %v1889
    %1891 = vmatprep.subr.mxu0 0.0
    %1892 = vmatpush1.msra.mxu0 0.0
    %1893 = vmatprep.subr.mxu0 0.0
    %1894 = vmatpush1.msra.mxu0 0.0
    %1895 = vmatprep.subr.mxu0 0.0
    %1896 = vmatpush1.msra.mxu0 0.0
    %1897 = vmatprep.subr.mxu0 0.0
    %1898 = vmatpush1.msra.mxu0 0.0
    %1899 = vmatprep.subr.mxu0 0.0
    %1900 = vmatpush1.msra.mxu0 0.0
    %1901 = vmatprep.subr.mxu0 0.0
    %1902 = vmatpush1.msra.mxu0 0.0
    %1903 = vmatprep.subr.mxu0 0.0
    %1904 = vmatpush1.msra.mxu0 0.0
    %1905 = vmatprep.subr.mxu0 0.0
    %1906 = vmatpush1.msra.mxu0 0.0
    %1907 = vmatprep.subr.mxu0 0.0
    %1908 = vmatpush1.msra.mxu0 0.0
    %1909 = vmatprep.subr.mxu0 0.0
    %1910 = vmatpush1.msra.mxu0 0.0
    %1911 = vmatprep.subr.mxu0 0.0
    %1912 = vmatpush1.msra.mxu0 0.0
    %1913 = vmatprep.subr.mxu0 0.0
    %1914 = vmatpush1.msra.mxu0 0.0
    %1915 = vmatprep.subr.mxu0 0.0
    %1916 = vmatpush1.msra.mxu0 %v1351
    %1917 = vmatprep.subr.mxu0 0.0
    %1918 = vmatpush1.msra.mxu0 %v1350
    %1919 = vmatprep.subr.mxu0 0.0
    %1920 = vmatpush1.msra.mxu0 %v1349
    %1921 = vmatprep.subr.mxu0 0.0
    %1922 = vmatpush1.msra.mxu0 %v1348
    %1923 = vmatprep.subr.mxu0 0.0
    %1924 = vmatpush2.msra.mxu0 0.0
    %1925 = vmatprep.subr.mxu0 0.0
    %1926 = vmatpush2.msra.mxu0 0.0
    %1927 = vmatprep.subr.mxu0 0.0
    %1928 = vmatpush2.msra.mxu0 0.0
    %1929 = vmatprep.subr.mxu0 0.0
    %1930 = vmatpush2.msra.mxu0 0.0
    %1931 = vmatprep.subr.mxu0 0.0
    %1932 = vmatpush2.msra.mxu0 0.0
    %1933 = vmatprep.subr.mxu0 0.0
    %1934 = vmatpush2.msra.mxu0 0.0
    %1935 = vmatprep.subr.mxu0 0.0
    %1936 = vmatpush2.msra.mxu0 0.0
    %1937 = vmatprep.subr.mxu0 0.0
    %1938 = vmatpush2.msra.mxu0 0.0
    %1939 = vmatprep.subr.mxu0 0.0
    %1940 = vmatpush2.msra.mxu0 0.0
    %1941 = vmatprep.subr.mxu0 0.0
    %1942 = vmatpush2.msra.mxu0 0.0
    %1943 = vmatprep.subr.mxu0 0.0
    %1944 = vmatpush2.msra.mxu0 0.0
    %1945 = vmatprep.subr.mxu0 0.0
    %1946 = vmatpush2.msra.mxu0 0.0
    %1947 = vmatprep.subr.mxu0 0.0
    %1948 = vmatpush2.msra.mxu0 0.0
    %1949 = vmatprep.subr.mxu0 0.0
    %1950 = vmatpush2.msra.mxu0 0.0
    %1951 = vmatprep.subr.mxu0 0.0
    %1952 = vmatpush2.msra.mxu0 0.0
    %1953 = vmatprep.subr.mxu0 0.0
    %1954 = vmatpush2.msra.mxu0 0.0
    %1955 = vmatprep.mubr.f32.mxu0 0.0
    %1956 = vmatmul.mubr.f32.gmra.mxu0 %v1782
    %v1957 = vpop.f32.mrf.mxu0
    %v1958 = vadd.f32 0.0, %v1957
    %v1959 = vpop.f32.mrf.mxu0
    %1960 = vdwg.mxu0
    %v1962 = vlaneseq
    %v1963 = vshrl.u32 %v1962, 7
    %v1964 = vsub.s32 0, %v1963
    %v1965 = vrot.slane %v1353, %v1964
    %v1968 = vsel %vm632, %v1888, 0
    %v1971 = vsel %vm632, %v1890, 0
    %1973 = vmatprep.subr.mxu0 0.0
    %1974 = vmatpush1.msra.mxu0 0.0
    %1975 = vmatprep.subr.mxu0 0.0
    %1976 = vmatpush1.msra.mxu0 0.0
    %1977 = vmatprep.subr.mxu0 0.0
    %1978 = vmatpush1.msra.mxu0 0.0
    %1979 = vmatprep.subr.mxu0 0.0
    %1980 = vmatpush1.msra.mxu0 0.0
    %1981 = vmatprep.subr.mxu0 0.0
    %1982 = vmatpush1.msra.mxu0 0.0
    %1983 = vmatprep.subr.mxu0 0.0
    %1984 = vmatpush1.msra.mxu0 0.0
    %1985 = vmatprep.subr.mxu0 0.0
    %1986 = vmatpush1.msra.mxu0 0.0
    %1987 = vmatprep.subr.mxu0 0.0
    %1988 = vmatpush1.msra.mxu0 0.0
    %1989 = vmatprep.subr.mxu0 0.0
    %1990 = vmatpush1.msra.mxu0 0.0
    %1991 = vmatprep.subr.mxu0 0.0
    %1992 = vmatpush1.msra.mxu0 0.0
    %1993 = vmatprep.subr.mxu0 0.0
    %1994 = vmatpush1.msra.mxu0 0.0
    %1995 = vmatprep.subr.mxu0 0.0
    %1996 = vmatpush1.msra.mxu0 0.0
    %1997 = vmatprep.subr.mxu0 0.0
    %1998 = vmatpush1.msra.mxu0 0.0
    %1999 = vmatprep.subr.mxu0 0.0
    %2000 = vmatpush1.msra.mxu0 0.0
    %2001 = vmatprep.subr.mxu0 0.0
    %2002 = vmatpush1.msra.mxu0 0.0
    %2003 = vmatprep.subr.mxu0 0.0
    %2004 = vmatpush1.msra.mxu0 %v1958
    %2005 = vmatprep.subr.mxu0 0.0
    %2006 = vmatpush2.msra.mxu0 0.0
    %2007 = vmatprep.subr.mxu0 0.0
    %2008 = vmatpush2.msra.mxu0 0.0
    %2009 = vmatprep.subr.mxu0 0.0
    %2010 = vmatpush2.msra.mxu0 0.0
    %2011 = vmatprep.subr.mxu0 0.0
    %2012 = vmatpush2.msra.mxu0 0.0
    %2013 = vmatprep.subr.mxu0 0.0
    %2014 = vmatpush2.msra.mxu0 0.0
    %2015 = vmatprep.subr.mxu0 0.0
    %2016 = vmatpush2.msra.mxu0 0.0
    %2017 = vmatprep.subr.mxu0 0.0
    %2018 = vmatpush2.msra.mxu0 0.0
    %2019 = vmatprep.subr.mxu0 0.0
    %2020 = vmatpush2.msra.mxu0 0.0
    %2021 = vmatprep.subr.mxu0 0.0
    %2022 = vmatpush2.msra.mxu0 0.0
    %2023 = vmatprep.subr.mxu0 0.0
    %2024 = vmatpush2.msra.mxu0 0.0
    %2025 = vmatprep.subr.mxu0 0.0
    %2026 = vmatpush2.msra.mxu0 0.0
    %2027 = vmatprep.subr.mxu0 0.0
    %2028 = vmatpush2.msra.mxu0 0.0
    %2029 = vmatprep.subr.mxu0 0.0
    %2030 = vmatpush2.msra.mxu0 0.0
    %2031 = vmatprep.subr.mxu0 0.0
    %2032 = vmatpush2.msra.mxu0 0.0
    %2033 = vmatprep.subr.mxu0 0.0
    %2034 = vmatpush2.msra.mxu0 0.0
    %2035 = vmatprep.subr.mxu0 0.0
    %2036 = vmatpush2.msra.mxu0 0.0
    %2037 = vmatprep.mubr.f32.mxu0 0.0
    %2038 = vmatmul.mubr.f32.gmra.mxu0 %v1968
    %v2039 = vpop.f32.mrf.mxu0
    %v2040 = vadd.f32 %v1965, %v2039
    %v2041 = vpop.f32.mrf.mxu0
    %2042 = vmatprep.mubr.f32.mxu0 0.0
    %2043 = vmatmul.mubr.f32.gmra.mxu0 %v1971
    %v2044 = vpop.f32.mrf.mxu0
    %v2045 = vadd.f32 %v1965, %v2044
    %v2046 = vpop.f32.mrf.mxu0
    %2047 = vdwg.mxu0
    %v2048 = vadd.f32 %v2040, %v806
    %v2049 = vadd.f32 %v2045, %v807
    %v2050 = vmax.f32 %v2048, 0.0
    %v2051 = vmax.f32 %v2049, 0.0
    %v2052 = vrot.slane %v1433, 1
    %v2053 = vsel %vm102, %v2052, 0
    %v2056 = vsel %vm102, %v1328, 0
    %v2059 = vsel %vm102, %v1329, 0
    %2061 = vmatprep.subr.mxu0 0.0
    %2062 = vmatpush1.xpose.msra.mxu0 0.0
    %2063 = vmatprep.subr.mxu0 0.0
    %2064 = vmatpush1.xpose.msra.mxu0 0.0
    %2065 = vmatprep.subr.mxu0 0.0
    %2066 = vmatpush1.xpose.msra.mxu0 0.0
    %2067 = vmatprep.subr.mxu0 0.0
    %2068 = vmatpush1.xpose.msra.mxu0 0.0
    %2069 = vmatprep.subr.mxu0 0.0
    %2070 = vmatpush1.xpose.msra.mxu0 0.0
    %2071 = vmatprep.subr.mxu0 0.0
    %2072 = vmatpush1.xpose.msra.mxu0 0.0
    %2073 = vmatprep.subr.mxu0 0.0
    %2074 = vmatpush1.xpose.msra.mxu0 0.0
    %2075 = vmatprep.subr.mxu0 0.0
    %2076 = vmatpush1.xpose.msra.mxu0 0.0
    %2077 = vmatprep.subr.mxu0 0.0
    %2078 = vmatpush1.xpose.msra.mxu0 0.0
    %2079 = vmatprep.subr.mxu0 0.0
    %2080 = vmatpush1.xpose.msra.mxu0 0.0
    %2081 = vmatprep.subr.mxu0 0.0
    %2082 = vmatpush1.xpose.msra.mxu0 0.0
    %2083 = vmatprep.subr.mxu0 0.0
    %2084 = vmatpush1.xpose.msra.mxu0 0.0
    %2085 = vmatprep.subr.mxu0 0.0
    %2086 = vmatpush1.xpose.msra.mxu0 0.0
    %2087 = vmatprep.subr.mxu0 0.0
    %2088 = vmatpush1.xpose.msra.mxu0 0.0
    %2089 = vmatprep.subr.mxu0 0.0
    %2090 = vmatpush1.xpose.msra.mxu0 %v2059
    %2091 = vmatprep.subr.mxu0 0.0
    %2092 = vmatpush1.xpose.msra.mxu0 %v2056
    %2093 = vmatprep.subr.mxu0 0.0
    %2094 = vmatpush2.xpose.msra.mxu0 0.0
    %2095 = vmatprep.subr.mxu0 0.0
    %2096 = vmatpush2.xpose.msra.mxu0 0.0
    %2097 = vmatprep.subr.mxu0 0.0
    %2098 = vmatpush2.xpose.msra.mxu0 0.0
    %2099 = vmatprep.subr.mxu0 0.0
    %2100 = vmatpush2.xpose.msra.mxu0 0.0
    %2101 = vmatprep.subr.mxu0 0.0
    %2102 = vmatpush2.xpose.msra.mxu0 0.0
    %2103 = vmatprep.subr.mxu0 0.0
    %2104 = vmatpush2.xpose.msra.mxu0 0.0
    %2105 = vmatprep.subr.mxu0 0.0
    %2106 = vmatpush2.xpose.msra.mxu0 0.0
    %2107 = vmatprep.subr.mxu0 0.0
    %2108 = vmatpush2.xpose.msra.mxu0 0.0
    %2109 = vmatprep.subr.mxu0 0.0
    %2110 = vmatpush2.xpose.msra.mxu0 0.0
    %2111 = vmatprep.subr.mxu0 0.0
    %2112 = vmatpush2.xpose.msra.mxu0 0.0
    %2113 = vmatprep.subr.mxu0 0.0
    %2114 = vmatpush2.xpose.msra.mxu0 0.0
    %2115 = vmatprep.subr.mxu0 0.0
    %2116 = vmatpush2.xpose.msra.mxu0 0.0
    %2117 = vmatprep.subr.mxu0 0.0
    %2118 = vmatpush2.xpose.msra.mxu0 0.0
    %2119 = vmatprep.subr.mxu0 0.0
    %2120 = vmatpush2.xpose.msra.mxu0 0.0
    %2121 = vmatprep.subr.mxu0 0.0
    %2122 = vmatpush2.xpose.msra.mxu0 0.0
    %2123 = vmatprep.subr.mxu0 0.0
    %2124 = vmatpush2.xpose.msra.mxu0 0.0
    %2125 = vmatprep.mubr.f32.mxu0 0.0
    %2126 = vmatmul.mubr.f32.gmra.mxu0 %v2053
    %v2127 = vpop.f32.mrf.mxu0
    %v2128 = vadd.f32 0.0, %v2127
    %v2129 = vpop.f32.mrf.mxu0
    %2130 = vdwg.mxu0
    %v2131 = vsel %vm349, %v2128, -inf
    %2132 = vmax.xlane.f32.xlu0 %v2131
    %v2133 = vpop.xlane.xlu0 %2132
    %v2134 = vsub.f32 %v2128, %v2133
    %v2135 = vmul.f32 %v2134, 1.442695
    %v2136 = vpow.pop %v2135
    %v2137 = vsel %vm349, %v2136, 0.0
    %2138 = vadd.xlane.f32.xlu0 %v2137
    %v2139 = vpop.xlane.xlu0 %2138
    %v2140 = vrcp.pop %v2139
    %v2141 = vmul.f32 %v2136, %v2140
    %v2142 = vmax.f32 %v2141, 1e-30
    %v2143 = vmin.f32 %v2142, 1e+20
    %v2144 = vlaneseq
    %v2145 = vshrl.u32 %v2144, 7
    %v2146 = vsub.s32 0, %v2145
    %v2147 = vrot.slane %v2143, %v2146
    %v2148 = vmul.f32 %v2147, %v76
    %v2149 = vmax.f32 %v2148, 1e-30
    %v2150 = vmin.f32 %v2149, 1e+20
    %v2151 = vsel %vm370, %v2150, 0.0
    %2152 = vadd.xlane.f32.xlu0 %v2151
    %v2153 = vpop.xlane.xlu0 %2152
    %vm2154 = vcmp.eq.f32.partialorder %v2153, 0.0
    %v2155 = vsel %vm2154, 1.0, %v2153
    %v2156 = vrcp.pop %v2155
    %v2157 = vmul.f32 %v2150, %v2156
    %v2159 = vsel %vm370, %v2157, 0
    %2161 = vmatprep.subr.mxu0 0.0
    %2162 = vmatpush1.msra.mxu0 0.0
    %2163 = vmatprep.subr.mxu0 0.0
    %2164 = vmatpush1.msra.mxu0 0.0
    %2165 = vmatprep.subr.mxu0 0.0
    %2166 = vmatpush1.msra.mxu0 0.0
    %2167 = vmatprep.subr.mxu0 0.0
    %2168 = vmatpush1.msra.mxu0 0.0
    %2169 = vmatprep.subr.mxu0 0.0
    %2170 = vmatpush1.msra.mxu0 0.0
    %2171 = vmatprep.subr.mxu0 0.0
    %2172 = vmatpush1.msra.mxu0 0.0
    %2173 = vmatprep.subr.mxu0 0.0
    %2174 = vmatpush1.msra.mxu0 0.0
    %2175 = vmatprep.subr.mxu0 0.0
    %2176 = vmatpush1.msra.mxu0 0.0
    %2177 = vmatprep.subr.mxu0 0.0
    %2178 = vmatpush1.msra.mxu0 0.0
    %2179 = vmatprep.subr.mxu0 0.0
    %2180 = vmatpush1.msra.mxu0 0.0
    %2181 = vmatprep.subr.mxu0 0.0
    %2182 = vmatpush1.msra.mxu0 0.0
    %2183 = vmatprep.subr.mxu0 0.0
    %2184 = vmatpush1.msra.mxu0 0.0
    %2185 = vmatprep.subr.mxu0 0.0
    %2186 = vmatpush1.msra.mxu0 0.0
    %2187 = vmatprep.subr.mxu0 0.0
    %2188 = vmatpush1.msra.mxu0 0.0
    %2189 = vmatprep.subr.mxu0 0.0
    %2190 = vmatpush1.msra.mxu0 %v1329
    %2191 = vmatprep.subr.mxu0 0.0
    %2192 = vmatpush1.msra.mxu0 %v1328
    %2193 = vmatprep.subr.mxu0 0.0
    %2194 = vmatpush2.msra.mxu0 0.0
    %2195 = vmatprep.subr.mxu0 0.0
    %2196 = vmatpush2.msra.mxu0 0.0
    %2197 = vmatprep.subr.mxu0 0.0
    %2198 = vmatpush2.msra.mxu0 0.0
    %2199 = vmatprep.subr.mxu0 0.0
    %2200 = vmatpush2.msra.mxu0 0.0
    %2201 = vmatprep.subr.mxu0 0.0
    %2202 = vmatpush2.msra.mxu0 0.0
    %2203 = vmatprep.subr.mxu0 0.0
    %2204 = vmatpush2.msra.mxu0 0.0
    %2205 = vmatprep.subr.mxu0 0.0
    %2206 = vmatpush2.msra.mxu0 0.0
    %2207 = vmatprep.subr.mxu0 0.0
    %2208 = vmatpush2.msra.mxu0 0.0
    %2209 = vmatprep.subr.mxu0 0.0
    %2210 = vmatpush2.msra.mxu0 0.0
    %2211 = vmatprep.subr.mxu0 0.0
    %2212 = vmatpush2.msra.mxu0 0.0
    %2213 = vmatprep.subr.mxu0 0.0
    %2214 = vmatpush2.msra.mxu0 0.0
    %2215 = vmatprep.subr.mxu0 0.0
    %2216 = vmatpush2.msra.mxu0 0.0
    %2217 = vmatprep.subr.mxu0 0.0
    %2218 = vmatpush2.msra.mxu0 0.0
    %2219 = vmatprep.subr.mxu0 0.0
    %2220 = vmatpush2.msra.mxu0 0.0
    %2221 = vmatprep.subr.mxu0 0.0
    %2222 = vmatpush2.msra.mxu0 0.0
    %2223 = vmatprep.subr.mxu0 0.0
    %2224 = vmatpush2.msra.mxu0 0.0
    %2225 = vmatprep.mubr.f32.mxu0 0.0
    %2226 = vmatmul.mubr.f32.gmra.mxu0 %v2159
    %v2227 = vpop.f32.mrf.mxu0
    %v2228 = vadd.f32 0.0, %v2227
    %v2229 = vpop.f32.mrf.mxu0
    %2230 = vdwg.mxu0
    %v2232 = vsel %vm102, %v2228, 0
    %2234 = vmatprep.subr.mxu0 0.0
    %2235 = vmatpush1.msra.mxu0 0.0
    %2236 = vmatprep.subr.mxu0 0.0
    %2237 = vmatpush1.msra.mxu0 0.0
    %2238 = vmatprep.subr.mxu0 0.0
    %2239 = vmatpush1.msra.mxu0 0.0
    %2240 = vmatprep.subr.mxu0 0.0
    %2241 = vmatpush1.msra.mxu0 0.0
    %2242 = vmatprep.subr.mxu0 0.0
    %2243 = vmatpush1.msra.mxu0 0.0
    %2244 = vmatprep.subr.mxu0 0.0
    %2245 = vmatpush1.msra.mxu0 0.0
    %2246 = vmatprep.subr.mxu0 0.0
    %2247 = vmatpush1.msra.mxu0 0.0
    %2248 = vmatprep.subr.mxu0 0.0
    %2249 = vmatpush1.msra.mxu0 0.0
    %2250 = vmatprep.subr.mxu0 0.0
    %2251 = vmatpush1.msra.mxu0 0.0
    %2252 = vmatprep.subr.mxu0 0.0
    %2253 = vmatpush1.msra.mxu0 0.0
    %2254 = vmatprep.subr.mxu0 0.0
    %2255 = vmatpush1.msra.mxu0 0.0
    %2256 = vmatprep.subr.mxu0 0.0
    %2257 = vmatpush1.msra.mxu0 0.0
    %2258 = vmatprep.subr.mxu0 0.0
    %2259 = vmatpush1.msra.mxu0 %v1339
    %2260 = vmatprep.subr.mxu0 0.0
    %2261 = vmatpush1.msra.mxu0 %v1338
    %2262 = vmatprep.subr.mxu0 0.0
    %2263 = vmatpush1.msra.mxu0 %v1337
    %2264 = vmatprep.subr.mxu0 0.0
    %2265 = vmatpush1.msra.mxu0 %v1336
    %2266 = vmatprep.subr.mxu0 0.0
    %2267 = vmatpush2.msra.mxu0 0.0
    %2268 = vmatprep.subr.mxu0 0.0
    %2269 = vmatpush2.msra.mxu0 0.0
    %2270 = vmatprep.subr.mxu0 0.0
    %2271 = vmatpush2.msra.mxu0 0.0
    %2272 = vmatprep.subr.mxu0 0.0
    %2273 = vmatpush2.msra.mxu0 0.0
    %2274 = vmatprep.subr.mxu0 0.0
    %2275 = vmatpush2.msra.mxu0 0.0
    %2276 = vmatprep.subr.mxu0 0.0
    %2277 = vmatpush2.msra.mxu0 0.0
    %2278 = vmatprep.subr.mxu0 0.0
    %2279 = vmatpush2.msra.mxu0 0.0
    %2280 = vmatprep.subr.mxu0 0.0
    %2281 = vmatpush2.msra.mxu0 0.0
    %2282 = vmatprep.subr.mxu0 0.0
    %2283 = vmatpush2.msra.mxu0 0.0
    %2284 = vmatprep.subr.mxu0 0.0
    %2285 = vmatpush2.msra.mxu0 0.0
    %2286 = vmatprep.subr.mxu0 0.0
    %2287 = vmatpush2.msra.mxu0 0.0
    %2288 = vmatprep.subr.mxu0 0.0
    %2289 = vmatpush2.msra.mxu0 0.0
    %2290 = vmatprep.subr.mxu0 0.0
    %2291 = vmatpush2.msra.mxu0 0.0
    %2292 = vmatprep.subr.mxu0 0.0
    %2293 = vmatpush2.msra.mxu0 0.0
    %2294 = vmatprep.subr.mxu0 0.0
    %2295 = vmatpush2.msra.mxu0 0.0
    %2296 = vmatprep.subr.mxu0 0.0
    %2297 = vmatpush2.msra.mxu0 0.0
    %2298 = vmatprep.mubr.f32.mxu0 0.0
    %2299 = vmatmul.mubr.f32.gmra.mxu0 %v2232
    %v2300 = vpop.f32.mrf.mxu0
    %v2301 = vadd.f32 %v1701, %v2300
    %v2302 = vpop.f32.mrf.mxu0
    %2303 = vdwg.mxu0
    %v2304 = vadd.f32 %v2301, %v1061
    %v2305 = vmax.f32 %v2304, 0.0
    %v2306 = vrot.slane %v1515, 1
    %v2307 = vsel %vm102, %v2306, 0
    %v2310 = vsel %vm102, %v2305, 0
    %2312 = vmatprep.subr.mxu0 0.0
    %2313 = vmatpush1.xpose.msra.mxu0 0.0
    %2314 = vmatprep.subr.mxu0 0.0
    %2315 = vmatpush1.xpose.msra.mxu0 0.0
    %2316 = vmatprep.subr.mxu0 0.0
    %2317 = vmatpush1.xpose.msra.mxu0 0.0
    %2318 = vmatprep.subr.mxu0 0.0
    %2319 = vmatpush1.xpose.msra.mxu0 0.0
    %2320 = vmatprep.subr.mxu0 0.0
    %2321 = vmatpush1.xpose.msra.mxu0 0.0
    %2322 = vmatprep.subr.mxu0 0.0
    %2323 = vmatpush1.xpose.msra.mxu0 0.0
    %2324 = vmatprep.subr.mxu0 0.0
    %2325 = vmatpush1.xpose.msra.mxu0 0.0
    %2326 = vmatprep.subr.mxu0 0.0
    %2327 = vmatpush1.xpose.msra.mxu0 0.0
    %2328 = vmatprep.subr.mxu0 0.0
    %2329 = vmatpush1.xpose.msra.mxu0 0.0
    %2330 = vmatprep.subr.mxu0 0.0
    %2331 = vmatpush1.xpose.msra.mxu0 0.0
    %2332 = vmatprep.subr.mxu0 0.0
    %2333 = vmatpush1.xpose.msra.mxu0 0.0
    %2334 = vmatprep.subr.mxu0 0.0
    %2335 = vmatpush1.xpose.msra.mxu0 0.0
    %2336 = vmatprep.subr.mxu0 0.0
    %2337 = vmatpush1.xpose.msra.mxu0 0.0
    %2338 = vmatprep.subr.mxu0 0.0
    %2339 = vmatpush1.xpose.msra.mxu0 0.0
    %2340 = vmatprep.subr.mxu0 0.0
    %2341 = vmatpush1.xpose.msra.mxu0 0.0
    %2342 = vmatprep.subr.mxu0 0.0
    %2343 = vmatpush1.xpose.msra.mxu0 %v2310
    %2344 = vmatprep.subr.mxu0 0.0
    %2345 = vmatpush2.xpose.msra.mxu0 0.0
    %2346 = vmatprep.subr.mxu0 0.0
    %2347 = vmatpush2.xpose.msra.mxu0 0.0
    %2348 = vmatprep.subr.mxu0 0.0
    %2349 = vmatpush2.xpose.msra.mxu0 0.0
    %2350 = vmatprep.subr.mxu0 0.0
    %2351 = vmatpush2.xpose.msra.mxu0 0.0
    %2352 = vmatprep.subr.mxu0 0.0
    %2353 = vmatpush2.xpose.msra.mxu0 0.0
    %2354 = vmatprep.subr.mxu0 0.0
    %2355 = vmatpush2.xpose.msra.mxu0 0.0
    %2356 = vmatprep.subr.mxu0 0.0
    %2357 = vmatpush2.xpose.msra.mxu0 0.0
    %2358 = vmatprep.subr.mxu0 0.0
    %2359 = vmatpush2.xpose.msra.mxu0 0.0
    %2360 = vmatprep.subr.mxu0 0.0
    %2361 = vmatpush2.xpose.msra.mxu0 0.0
    %2362 = vmatprep.subr.mxu0 0.0
    %2363 = vmatpush2.xpose.msra.mxu0 0.0
    %2364 = vmatprep.subr.mxu0 0.0
    %2365 = vmatpush2.xpose.msra.mxu0 0.0
    %2366 = vmatprep.subr.mxu0 0.0
    %2367 = vmatpush2.xpose.msra.mxu0 0.0
    %2368 = vmatprep.subr.mxu0 0.0
    %2369 = vmatpush2.xpose.msra.mxu0 0.0
    %2370 = vmatprep.subr.mxu0 0.0
    %2371 = vmatpush2.xpose.msra.mxu0 0.0
    %2372 = vmatprep.subr.mxu0 0.0
    %2373 = vmatpush2.xpose.msra.mxu0 0.0
    %2374 = vmatprep.subr.mxu0 0.0
    %2375 = vmatpush2.xpose.msra.mxu0 0.0
    %2376 = vmatprep.mubr.f32.mxu0 0.0
    %2377 = vmatmul.mubr.f32.gmra.mxu0 %v2307
    %v2378 = vpop.f32.mrf.mxu0
    %v2379 = vadd.f32 0.0, %v2378
    %v2380 = vpop.f32.mrf.mxu0
    %2381 = vdwg.mxu0
    %v2382 = vsel %vm608, %v2379, -inf
    %2383 = vmax.xlane.f32.xlu0 %v2382
    %v2384 = vpop.xlane.xlu0 %2383
    %v2385 = vsub.f32 %v2379, %v2384
    %v2386 = vmul.f32 %v2385, 1.442695
    %v2387 = vpow.pop %v2386
    %v2388 = vsel %vm608, %v2387, 0.0
    %2389 = vadd.xlane.f32.xlu0 %v2388
    %v2390 = vpop.xlane.xlu0 %2389
    %v2391 = vrcp.pop %v2390
    %v2392 = vmul.f32 %v2387, %v2391
    %v2393 = vmax.f32 %v2392, 1e-30
    %v2394 = vmin.f32 %v2393, 1e+20
    %v2395 = vlaneseq
    %v2396 = vshrl.u32 %v2395, 7
    %v2397 = vsub.s32 0, %v2396
    %v2398 = vrot.slane %v2394, %v2397
    %v2399 = vmul.f32 %v2398, %v77
    %v2400 = vmul.f32 %v2398, %v78
    %v2401 = vmax.f32 %v2399, 1e-30
    %v2402 = vmax.f32 %v2400, 1e-30
    %v2403 = vmin.f32 %v2401, 1e+20
    %v2404 = vmin.f32 %v2402, 1e+20
    %v2405 = vsel %vm632, %v2403, 0.0
    %2406 = vadd.xlane.f32.xlu0 %v2405
    %v2407 = vpop.xlane.xlu0 %2406
    %v2408 = vsel %vm632, %v2404, 0.0
    %2409 = vadd.xlane.f32.xlu0 %v2408
    %v2410 = vpop.xlane.xlu0 %2409
    %vm2411 = vcmp.eq.f32.partialorder %v2407, 0.0
    %vm2412 = vcmp.eq.f32.partialorder %v2410, 0.0
    %v2413 = vsel %vm2411, 1.0, %v2407
    %v2414 = vsel %vm2412, 1.0, %v2410
    %v2415 = vrcp.pop %v2413
    %v2416 = vmul.f32 %v2403, %v2415
    %v2417 = vrcp.pop %v2414
    %v2418 = vmul.f32 %v2404, %v2417
    %2419 = vmatprep.subr.mxu0 0.0
    %2420 = vmatpush1.msra.mxu0 0.0
    %2421 = vmatprep.subr.mxu0 0.0
    %2422 = vmatpush1.msra.mxu0 0.0
    %2423 = vmatprep.subr.mxu0 0.0
    %2424 = vmatpush1.msra.mxu0 0.0
    %2425 = vmatprep.subr.mxu0 0.0
    %2426 = vmatpush1.msra.mxu0 0.0
    %2427 = vmatprep.subr.mxu0 0.0
    %2428 = vmatpush1.msra.mxu0 0.0
    %2429 = vmatprep.subr.mxu0 0.0
    %2430 = vmatpush1.msra.mxu0 0.0
    %2431 = vmatprep.subr.mxu0 0.0
    %2432 = vmatpush1.msra.mxu0 0.0
    %2433 = vmatprep.subr.mxu0 0.0
    %2434 = vmatpush1.msra.mxu0 0.0
    %2435 = vmatprep.subr.mxu0 0.0
    %2436 = vmatpush1.msra.mxu0 0.0
    %2437 = vmatprep.subr.mxu0 0.0
    %2438 = vmatpush1.msra.mxu0 0.0
    %2439 = vmatprep.subr.mxu0 0.0
    %2440 = vmatpush1.msra.mxu0 0.0
    %2441 = vmatprep.subr.mxu0 0.0
    %2442 = vmatpush1.msra.mxu0 0.0
    %2443 = vmatprep.subr.mxu0 0.0
    %2444 = vmatpush1.msra.mxu0 %v1351
    %2445 = vmatprep.subr.mxu0 0.0
    %2446 = vmatpush1.msra.mxu0 %v1350
    %2447 = vmatprep.subr.mxu0 0.0
    %2448 = vmatpush1.msra.mxu0 %v1349
    %2449 = vmatprep.subr.mxu0 0.0
    %2450 = vmatpush1.msra.mxu0 %v1348
    %2451 = vmatprep.subr.mxu0 0.0
    %2452 = vmatpush2.msra.mxu0 0.0
    %2453 = vmatprep.subr.mxu0 0.0
    %2454 = vmatpush2.msra.mxu0 0.0
    %2455 = vmatprep.subr.mxu0 0.0
    %2456 = vmatpush2.msra.mxu0 0.0
    %2457 = vmatprep.subr.mxu0 0.0
    %2458 = vmatpush2.msra.mxu0 0.0
    %2459 = vmatprep.subr.mxu0 0.0
    %2460 = vmatpush2.msra.mxu0 0.0
    %2461 = vmatprep.subr.mxu0 0.0
    %2462 = vmatpush2.msra.mxu0 0.0
    %2463 = vmatprep.subr.mxu0 0.0
    %2464 = vmatpush2.msra.mxu0 0.0
    %2465 = vmatprep.subr.mxu0 0.0
    %2466 = vmatpush2.msra.mxu0 0.0
    %2467 = vmatprep.subr.mxu0 0.0
    %2468 = vmatpush2.msra.mxu0 0.0
    %2469 = vmatprep.subr.mxu0 0.0
    %2470 = vmatpush2.msra.mxu0 0.0
    %2471 = vmatprep.subr.mxu0 0.0
    %2472 = vmatpush2.msra.mxu0 0.0
    %2473 = vmatprep.subr.mxu0 0.0
    %2474 = vmatpush2.msra.mxu0 0.0
    %2475 = vmatprep.subr.mxu0 0.0
    %2476 = vmatpush2.msra.mxu0 0.0
    %2477 = vmatprep.subr.mxu0 0.0
    %2478 = vmatpush2.msra.mxu0 0.0
    %2479 = vmatprep.subr.mxu0 0.0
    %2480 = vmatpush2.msra.mxu0 0.0
    %2481 = vmatprep.subr.mxu0 0.0
    %2482 = vmatpush2.msra.mxu0 0.0
    %2483 = vmatprep.mubr.f32.mxu0 0.0
    %2484 = vmatmul.mubr.f32.gmra.mxu0 %v2310
    %v2485 = vpop.f32.mrf.mxu0
    %v2486 = vadd.f32 0.0, %v2485
    %v2487 = vpop.f32.mrf.mxu0
    %2488 = vdwg.mxu0
    %v2490 = vsel %vm632, %v2416, 0
    %v2493 = vsel %vm632, %v2418, 0
    %2495 = vmatprep.subr.mxu0 0.0
    %2496 = vmatpush1.msra.mxu0 0.0
    %2497 = vmatprep.subr.mxu0 0.0
    %2498 = vmatpush1.msra.mxu0 0.0
    %2499 = vmatprep.subr.mxu0 0.0
    %2500 = vmatpush1.msra.mxu0 0.0
    %2501 = vmatprep.subr.mxu0 0.0
    %2502 = vmatpush1.msra.mxu0 0.0
    %2503 = vmatprep.subr.mxu0 0.0
    %2504 = vmatpush1.msra.mxu0 0.0
    %2505 = vmatprep.subr.mxu0 0.0
    %2506 = vmatpush1.msra.mxu0 0.0
    %2507 = vmatprep.subr.mxu0 0.0
    %2508 = vmatpush1.msra.mxu0 0.0
    %2509 = vmatprep.subr.mxu0 0.0
    %2510 = vmatpush1.msra.mxu0 0.0
    %2511 = vmatprep.subr.mxu0 0.0
    %2512 = vmatpush1.msra.mxu0 0.0
    %2513 = vmatprep.subr.mxu0 0.0
    %2514 = vmatpush1.msra.mxu0 0.0
    %2515 = vmatprep.subr.mxu0 0.0
    %2516 = vmatpush1.msra.mxu0 0.0
    %2517 = vmatprep.subr.mxu0 0.0
    %2518 = vmatpush1.msra.mxu0 0.0
    %2519 = vmatprep.subr.mxu0 0.0
    %2520 = vmatpush1.msra.mxu0 0.0
    %2521 = vmatprep.subr.mxu0 0.0
    %2522 = vmatpush1.msra.mxu0 0.0
    %2523 = vmatprep.subr.mxu0 0.0
    %2524 = vmatpush1.msra.mxu0 0.0
    %2525 = vmatprep.subr.mxu0 0.0
    %2526 = vmatpush1.msra.mxu0 %v2486
    %2527 = vmatprep.subr.mxu0 0.0
    %2528 = vmatpush2.msra.mxu0 0.0
    %2529 = vmatprep.subr.mxu0 0.0
    %2530 = vmatpush2.msra.mxu0 0.0
    %2531 = vmatprep.subr.mxu0 0.0
    %2532 = vmatpush2.msra.mxu0 0.0
    %2533 = vmatprep.subr.mxu0 0.0
    %2534 = vmatpush2.msra.mxu0 0.0
    %2535 = vmatprep.subr.mxu0 0.0
    %2536 = vmatpush2.msra.mxu0 0.0
    %2537 = vmatprep.subr.mxu0 0.0
    %2538 = vmatpush2.msra.mxu0 0.0
    %2539 = vmatprep.subr.mxu0 0.0
    %2540 = vmatpush2.msra.mxu0 0.0
    %2541 = vmatprep.subr.mxu0 0.0
    %2542 = vmatpush2.msra.mxu0 0.0
    %2543 = vmatprep.subr.mxu0 0.0
    %2544 = vmatpush2.msra.mxu0 0.0
    %2545 = vmatprep.subr.mxu0 0.0
    %2546 = vmatpush2.msra.mxu0 0.0
    %2547 = vmatprep.subr.mxu0 0.0
    %2548 = vmatpush2.msra.mxu0 0.0
    %2549 = vmatprep.subr.mxu0 0.0
    %2550 = vmatpush2.msra.mxu0 0.0
    %2551 = vmatprep.subr.mxu0 0.0
    %2552 = vmatpush2.msra.mxu0 0.0
    %2553 = vmatprep.subr.mxu0 0.0
    %2554 = vmatpush2.msra.mxu0 0.0
    %2555 = vmatprep.subr.mxu0 0.0
    %2556 = vmatpush2.msra.mxu0 0.0
    %2557 = vmatprep.subr.mxu0 0.0
    %2558 = vmatpush2.msra.mxu0 0.0
    %2559 = vmatprep.mubr.f32.mxu0 0.0
    %2560 = vmatmul.mubr.f32.gmra.mxu0 %v2490
    %v2561 = vpop.f32.mrf.mxu0
    %v2562 = vadd.f32 %v1965, %v2561
    %v2563 = vpop.f32.mrf.mxu0
    %2564 = vmatprep.mubr.f32.mxu0 0.0
    %2565 = vmatmul.mubr.f32.gmra.mxu0 %v2493
    %v2566 = vpop.f32.mrf.mxu0
    %v2567 = vadd.f32 %v1965, %v2566
    %v2568 = vpop.f32.mrf.mxu0
    %2569 = vdwg.mxu0
    %v2570 = vadd.f32 %v2562, %v1328
    %v2571 = vadd.f32 %v2567, %v1329
    %v2572 = vmax.f32 %v2570, 0.0
    %v2573 = vmax.f32 %v2571, 0.0
    %2574 = vst.msk [vmem:[#allocation8] sm:$0xff] %vm102, %v1777
    %2575 = vst.msk [vmem:[#allocation9] sm:$0xff] %vm102, %v2050
    %2576 = vst.msk [vmem:[#allocation9 + $0x8] sm:$0xff] %vm102, %v2051
    %s2577 = scalar_lea.vmem [#allocation8], 8
    %2578 = vst.msk [vmem:[%s2577] sm:$0xff] %vm102, %v2305
    %s2579 = scalar_lea.vmem [#allocation9], 16
    %2580 = vst.msk [vmem:[%s2579] sm:$0xff] %vm102, %v2572
    %2581 = vst.msk [vmem:[%s2579 + $0x8] sm:$0xff] %vm102, %v2573
    // Predicated region
    $region42: #{tpu_custom_call.1} parent=1 // pred_check
      _
    $region43: #{tpu_custom_call.1} parent=1 // pred_check_branch
      %2583 = sbr.rel (0) target = $region45
    $region44: #{tpu_custom_call.1} parent=1 // pred_region
      %s2585 = ssub.s32 256, 256
      %2586 = vsyncadd [#allocation4], %s2585
      %s2587 = sshll.u32 [#allocation8], 4
      %s2588 = int_to_ptr.vmem [resolvable:$true] %s2587
      %2593 = dma.vmem_to_hbm [thread:$0]  %s2588, 256, %s7, [#allocation4], 128, 128, 8
    $region45: #{tpu_custom_call.1} parent=1 // pred_fallthru
      _
    // Predicated region
    $region46: #{tpu_custom_call.1} parent=1 // pred_check
      _
    $region47: #{tpu_custom_call.1} parent=1 // pred_check_branch
      %2595 = sbr.rel (0) target = $region49
    $region48: #{tpu_custom_call.1} parent=1 // pred_region
      %s2597 = ssub.s32 512, 512
      %2598 = vsyncadd [#allocation10], %s2597
      %s2599 = sshll.u32 [#allocation9], 4
      %s2600 = int_to_ptr.vmem [resolvable:$true] %s2599
      %2605 = dma.vmem_to_hbm [thread:$0]  %s2600, 512, %s8, [#allocation10], 128, 128, 8
    $region49: #{tpu_custom_call.1} parent=1 // pred_fallthru
      _
    // Predicated region
    $region50: #{tpu_custom_call.1} parent=1 // pred_check
      _
    $region51: #{tpu_custom_call.1} parent=1 // pred_check_branch
      %2607 = sbr.rel (0) target = $region53
    $region52: #{tpu_custom_call.1} parent=1 // pred_region
      %2608 = dma.done [#allocation4], 256
    $region53: #{tpu_custom_call.1} parent=1 // pred_fallthru
      _
    // Predicated region
    $region54: #{tpu_custom_call.1} parent=1 // pred_check
      _
    $region55: #{tpu_custom_call.1} parent=1 // pred_check_branch
      %2610 = sbr.rel (0) target = $region57
    $region56: #{tpu_custom_call.1} parent=1 // pred_region
      %2611 = dma.done [#allocation10], 512
    $region57: #{tpu_custom_call.1} parent=1 // pred_fallthru
      _
    %2612 = vsyncpa [#allocation3], 1
    %2613 = vsyncpa [#allocation6], 1
    %2614 = vsyncpa [#allocation4], 1
    %2615 = vsyncpa [#allocation10], 1

</llo_original>
